<compile_context>
chip_gen: v6e
topology: v6e:2x2x1
jax: 0.10.0
libtpu: 0.0.40
codegen_flags: <defaults>
</compile_context>

<pallas_src>
import jax
import jax.numpy as jnp
from jax.experimental import pallas as pl
from jax.experimental.pallas import tpu as pltpu


# ----------------------------------------------------------------------------
# Config (small, deterministic, consistent with the module's forward pass)
# ----------------------------------------------------------------------------
class Config:
    all_cat_columns = ['item_id', 'price_rank', 'city', 'impression_index',
                       'star', 'action', 'city_platform']
    categorical_emb_dim = 16
    hidden_dims = [64, 32]
    num_embeddings = {'item_id': 64, 'price_rank': 32, 'city': 16,
                      'impression_index': 32, 'star': 8, 'action': 6,
                      'city_platform': 12}
    transformed_dummy_item = 0
    continuous_size = 4
    neighbor_size = 5
    sequence_length = 8     # past_interactions length
    sess_length = 6         # past_interactions_sess / past_actions_sess length
    other_item_len = 10     # other_item_ids length


CFG = Config()
E = CFG.categorical_emb_dim          # 16
H = E // 2                           # 8   per-direction GRU hidden
H2 = 2 * H                           # 16  one bidirectional state
H4 = 4 * H                           # 32  two fused bidirectional states
G6 = 6 * H                           # 48  3 gates x one bidir GRU
G12 = 12 * H                         # 96  3 gates x two fused bidir GRUs
S_LEN = CFG.sequence_length          # 8
L_SESS = CFG.sess_length             # 6
T_OTH = CFG.other_item_len           # 10
D_CONCAT = 17 * E                    # 272
D_H1 = CFG.hidden_dims[0]            # 64
D_H2 = CFG.hidden_dims[1]            # 32
CONT = CFG.continuous_size           # 4
NEI = CFG.neighbor_size              # 5
D_HID2_IN = D_H1 + 2 * CONT + 3 + NEI   # 80
BN_EPS = 1e-5


# ----------------------------------------------------------------------------
# Packed-parameter slab layouts (row offsets are static, sublane-aligned)
# ----------------------------------------------------------------------------
def _layout(entries, align=8):
    off, r = {}, 0
    for name, nrows, ncols in entries:
        off[name] = (r, nrows, ncols)
        r += ((nrows + align - 1) // align) * align
    return off, r


_GRU_ENTRIES = [
    # fused recurrence: other-item GRU (steps 0..5)  (+)  session layer-0
    ('wih_o_il', 2 * E, G12),     # other Wih scattered into slot 0 of 12H
    ('wih_s0_il', 4 * E, G12),    # sess-L0 Wih scattered into slot 1 of 12H
    ('bih_fu', 1, G12),
    ('whh_fu', H4, G12),          # block-diagonal recurrent weights
    ('bhh_fu', 1, G12),
    # other-item GRU tail steps 6..9 (plain gate-major bidirectional)
    ('wih_o_gm', 2 * E, G6),
    ('bih_o', 1, G6),
    ('whh_o', H2, G6),
    ('bhh_o', 1, G6),
    # session layer-1 (input projection expressed via A/B on layer-0 states)
    ('a1', H2, G6),
    ('b1g', H2, G6),
    ('bih_1', 1, G6),
    ('whh_1', H2, G6),
    ('bhh_1', 1, G6),
]
_GOFF, _GRU_ROWS = _layout(_GRU_ENTRIES)          # (272, 96) slab

_MLP_ENTRIES = [
    ('w1', D_CONCAT, D_H1),       # BN folded in
    ('b1', 1, D_H1),
    ('w2', D_HID2_IN, D_H2),      # BN folded in
    ('b2', 1, D_H2),
    ('wo', D_H2, 1),
    ('bo', 1, 1),
]
_MOFF, _MLP_ROWS = _layout(_MLP_ENTRIES)          # (408, 64) slab


def _pack_slab(arrays, entries, width, align=8):
    blocks = []
    for name, nrows, ncols in entries:
        a = arrays[name]
        assert a.shape == (nrows, ncols), (name, a.shape, (nrows, ncols))
        pad_r = ((nrows + align - 1) // align) * align - nrows
        blocks.append(jnp.pad(a, ((0, pad_r), (0, width - ncols))))
    return jnp.concatenate(blocks, axis=0)


# ----------------------------------------------------------------------------
# Init-time parameter layout transforms (gate-major, direction-fused)
# ----------------------------------------------------------------------------
def _scatter_gate_cols(w, slot, gw, n_slots=2):
    """w: (R, 3*gw) gate-major [r|z|n]. Place gate g's columns at slot `slot`
    of gate block g in a (R, 3*gw*n_slots) matrix, zeros elsewhere."""
    z = jnp.zeros((w.shape[0], gw), w.dtype)
    blocks = []
    for g in range(3):
        cols = [z] * n_slots
        cols[slot] = w[:, g * gw:(g + 1) * gw]
        blocks.append(jnp.concatenate(cols, axis=1))
    return jnp.concatenate(blocks, axis=1)


def _bidir_gate_major(wih_f, whh_f, bih_f, bhh_f, wih_b, whh_b, bih_b, bhh_b):
    """Per-direction [r|z|n] params -> gate-major, direction-fused params used
    with the x2(t) = [x(t) | x(T-1-t)] input trick.
    Returns wih_gm (2Din,6H), whh_gm (2H,6H), bih_gm (1,6H), bhh_gm (1,6H)."""
    zi = jnp.zeros_like(wih_f)
    wih_gm = (_scatter_gate_cols(jnp.concatenate([wih_f, zi], 0), 0, H)
              + _scatter_gate_cols(jnp.concatenate([zi, wih_b], 0), 1, H))
    zh = jnp.zeros_like(whh_f)
    whh_gm = (_scatter_gate_cols(jnp.concatenate([whh_f, zh], 0), 0, H)
              + _scatter_gate_cols(jnp.concatenate([zh, whh_b], 0), 1, H))
    bih_gm = _scatter_gate_cols(bih_f, 0, H) + _scatter_gate_cols(bih_b, 1, H)
    bhh_gm = _scatter_gate_cols(bhh_f, 0, H) + _scatter_gate_cols(bhh_b, 1, H)
    return wih_gm, whh_gm, bih_gm, bhh_gm


def _layer1_input_mats(wih1_f, wih1_b):
    """A, B (2H,6H) such that gx1(s) = u @ A + v @ B where u = layer-0 fused
    state at step s = [h_f(s)|h_b(L-1-s)] and v = state at step L-1-s."""
    zh = jnp.zeros((H, 3 * H), wih1_f.dtype)
    a = (_scatter_gate_cols(jnp.concatenate([wih1_f[0:H], zh], 0), 0, H)
         + _scatter_gate_cols(jnp.concatenate([zh, wih1_b[H:2 * H]], 0), 1, H))
    b = (_scatter_gate_cols(jnp.concatenate([zh, wih1_f[H:2 * H]], 0), 0, H)
         + _scatter_gate_cols(jnp.concatenate([wih1_b[0:H], zh], 0), 1, H))
    return a, b


def _fold_bn(w, b, gamma, beta, mean, var, eps=BN_EPS):
    """Fold inference-mode BatchNorm1d (applied to the linear's input) into
    the linear weights/bias."""
    s = gamma / jnp.sqrt(var + eps)
    return w * s[:, None], b + (beta - mean * s)[None, :] @ w


# ----------------------------------------------------------------------------
# The single fused Pallas kernel (whole Net.forward after embedding gathers)
# ----------------------------------------------------------------------------
def _net_kernel(past_ref, sessx2_ref, otherx2_ref, feats_ref, cn_ref,
                gru_ref, mlp_ref, out_ref):
    f32 = jnp.float32
    B = past_ref.shape[1]

    def gsl(name):
        r0, nr, nc = _GOFF[name]
        return gru_ref[r0:r0 + nr, 0:nc]

    def msl(name):
        r0, nr, nc = _MOFF[name]
        return mlp_ref[r0:r0 + nr, 0:nc]

    def gm_step(gx_s, h, whh, bhh_bc, hh):
        """Gate-major GRU step (one or two fused bidirectional GRUs)."""
        gh = jnp.dot(h, whh, preferred_element_type=f32) + bhh_bc
        r = jax.nn.sigmoid(gx_s[:, 0:hh] + gh[:, 0:hh])
        z = jax.nn.sigmoid(gx_s[:, hh:2 * hh] + gh[:, hh:2 * hh])
        n = jnp.tanh(gx_s[:, 2 * hh:3 * hh] + r * gh[:, 2 * hh:3 * hh])
        return (1.0 - z) * n + z * h

    # --- fused recurrence: other-item GRU steps 0..5 (+) session layer-0 ----
    other_x2 = otherx2_ref[...]                         # (T*B, 2E)
    gx_fu = (jnp.dot(other_x2[0:L_SESS * B], gsl('wih_o_il'),
                     preferred_element_type=f32)
             + jnp.dot(sessx2_ref[...], gsl('wih_s0_il'),
                       preferred_element_type=f32)
             + gsl('bih_fu'))                           # (L*B, 12H) hoisted
    whh_fu = gsl('whh_fu')
    bhh_fu = jnp.broadcast_to(gsl('bhh_fu'), (B, G12))  # hoisted broadcast

    h_fu = jnp.zeros((B, H4), f32)
    m_fu = jnp.full((B, H4), -jnp.inf, f32)
    hs0 = []
    for s in range(L_SESS):                             # static unroll
        h_fu = gm_step(gx_fu[s * B:(s + 1) * B], h_fu, whh_fu, bhh_fu, H4)
        hs0.append(h_fu)
        m_fu = jnp.maximum(m_fu, h_fu)

    # --- other-item GRU tail steps 6..9 -------------------------------------
    gx_ot = (jnp.dot(other_x2[L_SESS * B:T_OTH * B], gsl('wih_o_gm'),
                     preferred_element_type=f32) + gsl('bih_o'))
    whh_o = gsl('whh_o')
    bhh_o = jnp.broadcast_to(gsl('bhh_o'), (B, G6))
    h_o = h_fu[:, 0:H2]
    m_o = m_fu[:, 0:H2]
    for s in range(T_OTH - L_SESS):
        h_o = gm_step(gx_ot[s * B:(s + 1) * B], h_o, whh_o, bhh_o, H2)
        m_o = jnp.maximum(m_o, h_o)
    pooled_other_item_ids = m_o                          # (B, 2H)

    # --- session GRU layer 1 (input projection via A/B on layer-0 states) ---
    hs0_all = jnp.concatenate(hs0, axis=0)[:, H2:H4]     # (L*B, 2H)
    ga = jnp.dot(hs0_all, gsl('a1'), preferred_element_type=f32)   # (L*B, 6H)
    gb = jnp.dot(hs0_all, gsl('b1g'), preferred_element_type=f32)  # (L*B, 6H)
    bih1 = gsl('bih_1')
    whh1 = gsl('whh_1')
    bhh1 = jnp.broadcast_to(gsl('bhh_1'), (B, G6))
    h_s1 = jnp.zeros((B, H2), f32)
    m_s1 = jnp.full((B, H2), -jnp.inf, f32)
    for s in range(L_SESS):
        gx1 = (ga[s * B:(s + 1) * B]
               + gb[(L_SESS - 1 - s) * B:(L_SESS - s) * B] + bih1)
        h_s1 = gm_step(gx1, h_s1, whh1, bhh1, H2)
        m_s1 = jnp.maximum(m_s1, h_s1)
    pooled_interaction_sess = m_s1                       # (B, 2H)

    # --- past-interaction max pool (== F.max_pool1d over the sequence) ------
    pooled_interaction = jnp.max(past_ref[...], axis=0)  # (B, E)

    # --- per-example embedding features (read at use-site) ------------------
    emb_item = feats_ref[0]
    emb_price_rank = feats_ref[1]
    emb_city = feats_ref[2]
    emb_last_item = feats_ref[3]
    emb_impression_index = feats_ref[4]
    emb_star = feats_ref[5]
    emb_last_click_item = feats_ref[6]
    emb_last_click_impression = feats_ref[7]
    emb_last_interact_index = feats_ref[8]
    emb_city_platform = feats_ref[9]

    item_interaction = emb_item * pooled_interaction
    item_last_item = emb_item * emb_last_item
    item_last_click_item = emb_item * emb_last_click_item
    imp_last_idx = emb_impression_index * emb_last_interact_index

    emb_concat = jnp.concatenate(
        [emb_item, pooled_interaction, emb_price_rank, emb_city, emb_last_item,
         emb_impression_index, emb_star], axis=1)        # (B, 7E)

    # FM second-order statistics: one scalar per example over the flattened
    # concat, exactly as in the reference forward().
    s_sum = jnp.sum(emb_concat, axis=1, keepdims=True)
    sum_squared = s_sum * s_sum
    squared_sum = jnp.sum(emb_concat * emb_concat, axis=1, keepdims=True)
    second_order = 0.5 * (sum_squared - squared_sum)

    concat = jnp.concatenate(
        [emb_item, pooled_interaction, emb_price_rank, emb_city, emb_last_item,
         emb_impression_index, item_interaction, item_last_item, emb_star,
         pooled_interaction_sess, emb_last_click_item, emb_last_click_impression,
         emb_last_interact_index, item_last_click_item, imp_last_idx,
         pooled_other_item_ids, emb_city_platform], axis=1)   # (B, 17E)

    # BatchNorm (inference mode) folded into w1/b1 and w2/b2 at init time.
    h1 = jnp.maximum(
        jnp.dot(concat, msl('w1'), preferred_element_type=f32) + msl('b1'), 0.0)

    cn = cn_ref[...]
    cont = cn[:, 0:CONT]
    neigh = cn[:, CONT:CONT + NEI]
    hid = jnp.concatenate(
        [cont, h1, sum_squared, squared_sum, second_order, cont * cont, neigh],
        axis=1)                                              # (B, 80)

    h2 = jnp.maximum(
        jnp.dot(hid, msl('w2'), preferred_element_type=f32) + msl('b2'), 0.0)
    logits = jnp.dot(h2, msl('wo'), preferred_element_type=f32) + msl('bo')
    out_ref[...] = jax.nn.sigmoid(logits)


_VMEM = pl.BlockSpec(memory_space=pltpu.MemorySpace.VMEM)


# ----------------------------------------------------------------------------
# Parameter init (deterministic, shapes follow the PyTorch __init__, stored
# directly in the packed gate-major / fused layouts used by the kernel)
# ----------------------------------------------------------------------------
def init_params(key):
    keys = iter(jax.random.split(key, 32))

    emb = {}
    for col in CFG.all_cat_columns:
        t = jax.random.normal(next(keys), (CFG.num_embeddings[col], E),
                              jnp.float32) * 0.1
        if col == 'item_id':
            t = t.at[CFG.transformed_dummy_item].set(0.0)    # padding_idx row
        emb[col] = t

    def gru_dir(k, din):
        k1, k2, k3, k4 = jax.random.split(k, 4)
        s = float(H) ** -0.5
        wih = jax.random.uniform(k1, (din, 3 * H), jnp.float32, -s, s)  # [r|z|n]
        whh = jax.random.uniform(k2, (H, 3 * H), jnp.float32, -s, s)
        bih = jax.random.uniform(k3, (1, 3 * H), jnp.float32, -s, s)
        bhh = jax.random.uniform(k4, (1, 3 * H), jnp.float32, -s, s)
        return wih, whh, bih, bhh

    o_f, o_b = gru_dir(next(keys), E), gru_dir(next(keys), E)
    s0_f, s0_b = gru_dir(next(keys), 2 * E), gru_dir(next(keys), 2 * E)
    s1_f, s1_b = gru_dir(next(keys), H2), gru_dir(next(keys), H2)

    o_wih, o_whh, o_bih, o_bhh = _bidir_gate_major(*o_f, *o_b)
    s0_wih, s0_whh, s0_bih, s0_bhh = _bidir_gate_major(*s0_f, *s0_b)
    _, s1_whh, s1_bih, s1_bhh = _bidir_gate_major(*s1_f, *s1_b)
    a1, b1g = _layer1_input_mats(s1_f[0], s1_b[0])

    gru_arrays = {
        'wih_o_il': _scatter_gate_cols(o_wih, 0, H2),
        'wih_s0_il': _scatter_gate_cols(s0_wih, 1, H2),
        'bih_fu': (_scatter_gate_cols(o_bih, 0, H2)
                   + _scatter_gate_cols(s0_bih, 1, H2)),
        'whh_fu': jnp.concatenate([_scatter_gate_cols(o_whh, 0, H2),
                                   _scatter_gate_cols(s0_whh, 1, H2)], axis=0),
        'bhh_fu': (_scatter_gate_cols(o_bhh, 0, H2)
                   + _scatter_gate_cols(s0_bhh, 1, H2)),
        'wih_o_gm': o_wih, 'bih_o': o_bih, 'whh_o': o_whh, 'bhh_o': o_bhh,
        'a1': a1, 'b1g': b1g,
        'bih_1': s1_bih, 'whh_1': s1_whh, 'bhh_1': s1_bhh,
    }
    gru_slab = _pack_slab(gru_arrays, _GRU_ENTRIES, G12)

    def lin(k, din, dout):
        k1, k2 = jax.random.split(k)
        s = float(din) ** -0.5
        w = jax.random.uniform(k1, (din, dout), jnp.float32, -s, s)
        b = jax.random.uniform(k2, (1, dout), jnp.float32, -s, s)
        return w, b

    w1, b1 = lin(next(keys), D_CONCAT, D_H1)
    w2, b2 = lin(next(keys), D_HID2_IN, D_H2)
    wo, bo = lin(next(keys), D_H2, 1)

    def bn_stats(d):           # gamma, beta, running_mean, running_var
        return (jnp.ones((d,), jnp.float32), jnp.zeros((d,), jnp.float32),
                jnp.zeros((d,), jnp.float32), jnp.ones((d,), jnp.float32))

    w1f, b1f = _fold_bn(w1, b1, *bn_stats(D_CONCAT))
    w2f, b2f = _fold_bn(w2, b2, *bn_stats(D_HID2_IN))

    mlp_arrays = {'w1': w1f, 'b1': b1f, 'w2': w2f, 'b2': b2f, 'wo': wo, 'bo': bo}
    mlp_slab = _pack_slab(mlp_arrays, _MLP_ENTRIES, D_H1)

    return {'emb': emb, 'gru_slab': gru_slab, 'mlp_slab': mlp_slab}


# ----------------------------------------------------------------------------
# Forward pass (mirrors Net.forward): one fused embedding gather in XLA,
# everything else inside one fused Pallas kernel.
# ----------------------------------------------------------------------------
@jax.jit
def net_forward(params, item_id, past_interactions, mask, price_rank, city,
                last_item, impression_index, cont_features, star,
                past_interactions_sess, past_actions_sess, last_click_item,
                last_click_impression, last_interact_index, neighbor_prices,
                other_item_ids, city_platform):
    del mask  # argument of the PyTorch forward but never used
    emb = params['emb']
    B = item_id.shape[0]
    Bp = ((B + 7) // 8) * 8              # pad batch to a sublane multiple of 8

    # Single row-concatenated embedding table + one fused gather.
    tab = jnp.concatenate([emb[c] for c in CFG.all_cat_columns], axis=0)
    off, o = {}, 0
    for c in CFG.all_cat_columns:
        off[c] = o
        o += CFG.num_embeddings[c]

    feat_idx = jnp.stack([
        item_id + off['item_id'],
        price_rank + off['price_rank'],
        city + off['city'],
        last_item + off['item_id'],
        impression_index + off['impression_index'],
        star + off['star'],
        last_click_item + off['item_id'],
        last_click_impression + off['impression_index'],
        last_interact_index + off['impression_index'],
        city_platform + off['city_platform'],
    ], axis=0)                                               # (10, B)

    all_idx = jnp.concatenate([
        feat_idx,
        past_interactions.T + off['item_id'],                # (S, B)
        past_interactions_sess.T + off['item_id'],           # (L, B)
        past_actions_sess.T + off['action'],                 # (L, B)
        other_item_ids.T + off['item_id'],                   # (T, B)
    ], axis=0)                                               # (40, B)
    if Bp != B:  # fold batch padding into the gather (index 0 = padding row)
        all_idx = jnp.pad(all_idx, ((0, 0), (0, Bp - B)))
    g = tab[all_idx]                                         # (40, Bp, E)

    feats = g[0:10]
    past_tbd = g[10:10 + S_LEN]                              # (S, Bp, E)
    i0 = 10 + S_LEN
    sess_item = g[i0:i0 + L_SESS]
    sess_act = g[i0 + L_SESS:i0 + 2 * L_SESS]
    other_x = g[i0 + 2 * L_SESS:]                            # (T, Bp, E)

    # lane-concat the reversed-time input once here -> kernel needs no
    # per-step reversal or concatenation.
    sess_x = jnp.concatenate([sess_item, sess_act], axis=-1)       # (L, Bp, 2E)
    sess_x2 = jnp.concatenate([sess_x, sess_x[::-1]], axis=-1)     # (L, Bp, 4E)
    other_x2 = jnp.concatenate([other_x, other_x[::-1]], axis=-1)  # (T, Bp, 2E)
    sess_x2_2d = sess_x2.reshape(L_SESS * Bp, 4 * E)
    other_x2_2d = other_x2.reshape(T_OTH * Bp, 2 * E)

    cont_neigh = jnp.concatenate([cont_features, neighbor_prices], axis=1)
    if Bp != B:
        cont_neigh = jnp.pad(cont_neigh, ((0, Bp - B), (0, 0)))

    inputs = (past_tbd, sess_x2_2d, other_x2_2d, feats, cont_neigh,
              params['gru_slab'], params['mlp_slab'])

    out = pl.pallas_call(
        _net_kernel,
        out_shape=jax.ShapeDtypeStruct((Bp, 1), jnp.float32),
        in_specs=[_VMEM] * len(inputs),
        out_specs=_VMEM,
    )(*inputs)
    return out[:B, 0]                                        # .squeeze()


# ----------------------------------------------------------------------------
# Main
# ----------------------------------------------------------------------------
if __name__ == "__main__":
    key = jax.random.PRNGKey(0)
    kp, kd = jax.random.split(key)
    params = init_params(kp)

    B = 4
    ks = jax.random.split(kd, 20)

    def ridx(k, shape, n):
        return jax.random.randint(k, shape, 0, n)

    item_id = ridx(ks[0], (B,), CFG.num_embeddings['item_id'])
    past_interactions = ridx(ks[1], (B, CFG.sequence_length),
                             CFG.num_embeddings['item_id'])
    mask = jnp.ones((B, CFG.sequence_length), jnp.float32)   # unused in forward
    price_rank = ridx(ks[2], (B,), CFG.num_embeddings['price_rank'])
    city = ridx(ks[3], (B,), CFG.num_embeddings['city'])
    last_item = ridx(ks[4], (B,), CFG.num_embeddings['item_id'])
    impression_index = ridx(ks[5], (B,), CFG.num_embeddings['impression_index'])
    cont_features = jax.random.normal(ks[6], (B, CFG.continuous_size), jnp.float32)
    star = ridx(ks[7], (B,), CFG.num_embeddings['star'])
    past_interactions_sess = ridx(ks[8], (B, CFG.sess_length),
                                  CFG.num_embeddings['item_id'])
    past_actions_sess = ridx(ks[9], (B, CFG.sess_length),
                             CFG.num_embeddings['action'])
    last_click_item = ridx(ks[10], (B,), CFG.num_embeddings['item_id'])
    last_click_impression = ridx(ks[11], (B,), CFG.num_embeddings['impression_index'])
    last_interact_index = ridx(ks[12], (B,), CFG.num_embeddings['impression_index'])
    neighbor_prices = jax.random.normal(ks[13], (B, CFG.neighbor_size), jnp.float32)
    other_item_ids = ridx(ks[14], (B, CFG.other_item_len),
                          CFG.num_embeddings['item_id'])
    city_platform = ridx(ks[15], (B,), CFG.num_embeddings['city_platform'])

    out = net_forward(params, item_id, past_interactions, mask, price_rank,
                      city, last_item, impression_index, cont_features, star,
                      past_interactions_sess, past_actions_sess, last_click_item,
                      last_click_impression, last_interact_index, neighbor_prices,
                      other_item_ids, city_platform)
    out = jax.block_until_ready(out)
    assert out.shape == (B,)
    assert bool(jnp.all(jnp.isfinite(out)))
    print("KERNEL_OK")
</pallas_src>

<mosaic_0001>
module attributes {stable_mosaic.version = 11 : i64} {
  func.func @_net_kernel(%arg0: memref<8x8x16xf32, #tpu.memory_space<vmem>>, %arg1: memref<48x64xf32, #tpu.memory_space<vmem>>, %arg2: memref<80x32xf32, #tpu.memory_space<vmem>>, %arg3: memref<10x8x16xf32, #tpu.memory_space<vmem>>, %arg4: memref<8x9xf32, #tpu.memory_space<vmem>>, %arg5: memref<272x96xf32, #tpu.memory_space<vmem>>, %arg6: memref<408x64xf32, #tpu.memory_space<vmem>>, %arg7: memref<8x1xf32, #tpu.memory_space<vmem>>) attributes {dimension_semantics = [], scalar_prefetch = 0 : i64, scratch_operands = 0 : i64, tpu.core_type = #tpu.core_type<tc>} {
    %c0 = arith.constant 0 : index
    %c0_0 = arith.constant 0 : index
    %0 = vector.load %arg2[%c0, %c0_0] : memref<80x32xf32, #tpu.memory_space<vmem>>, vector<80x32xf32>
    %1 = vector.extract_strided_slice %0 {offsets = [0, 0], sizes = [48, 32], strides = [1, 1]} : vector<80x32xf32> to vector<48x32xf32>
    %c0_1 = arith.constant 0 : index
    %c0_2 = arith.constant 0 : index
    %2 = vector.load %arg5[%c0_1, %c0_2] : memref<272x96xf32, #tpu.memory_space<vmem>>, vector<32x96xf32>
    %cst = arith.constant dense<0.000000e+00> : vector<48x96xf32>
    %3 = tpu.matmul %1, %2, %cst {dimension_numbers = #tpu.dot_dimension_numbers<[1], [0], [0], [1], [0, 0, 1, 1], [], []>} : vector<48x32xf32>, vector<32x96xf32>, vector<48x96xf32> -> vector<48x96xf32>
    %c0_3 = arith.constant 0 : index
    %c0_4 = arith.constant 0 : index
    %4 = vector.load %arg1[%c0_3, %c0_4] : memref<48x64xf32, #tpu.memory_space<vmem>>, vector<48x64xf32>
    %c32 = arith.constant 32 : index
    %c0_5 = arith.constant 0 : index
    %5 = vector.load %arg5[%c32, %c0_5] : memref<272x96xf32, #tpu.memory_space<vmem>>, vector<64x96xf32>
    %cst_6 = arith.constant dense<0.000000e+00> : vector<48x96xf32>
    %6 = tpu.matmul %4, %5, %cst_6 {dimension_numbers = #tpu.dot_dimension_numbers<[1], [0], [0], [1], [0, 0, 1, 1], [], []>} : vector<48x64xf32>, vector<64x96xf32>, vector<48x96xf32> -> vector<48x96xf32>
    %7 = arith.addf %3, %6 : vector<48x96xf32>
    %c96 = arith.constant 96 : index
    %c0_7 = arith.constant 0 : index
    %8 = vector.load %arg5[%c96, %c0_7] : memref<272x96xf32, #tpu.memory_space<vmem>>, vector<1x96xf32>
    %9 = vector.broadcast %8 : vector<1x96xf32> to vector<48x96xf32>
    %10 = arith.addf %7, %9 : vector<48x96xf32>
    %c104 = arith.constant 104 : index
    %c0_8 = arith.constant 0 : index
    %11 = vector.load %arg5[%c104, %c0_8] : memref<272x96xf32, #tpu.memory_space<vmem>>, vector<32x96xf32>
    %c136 = arith.constant 136 : index
    %c0_9 = arith.constant 0 : index
    %12 = vector.load %arg5[%c136, %c0_9] : memref<272x96xf32, #tpu.memory_space<vmem>>, vector<1x96xf32>
    %13 = vector.shape_cast %12 : vector<1x96xf32> to vector<1x96xf32>
    %14 = vector.broadcast %13 : vector<1x96xf32> to vector<8x96xf32>
    %cst_10 = arith.constant 0.000000e+00 : f32
    %15 = vector.broadcast %cst_10 : f32 to vector<8x32xf32>
    %cst_11 = arith.constant 0xFF800000 : f32
    %16 = vector.broadcast %cst_11 : f32 to vector<8x32xf32>
    %17 = vector.extract_strided_slice %10 {offsets = [0, 0], sizes = [8, 96], strides = [1, 1]} : vector<48x96xf32> to vector<8x96xf32>
    %cst_12 = arith.constant dense<0.000000e+00> : vector<8x96xf32>
    %18 = tpu.matmul %15, %11, %cst_12 {dimension_numbers = #tpu.dot_dimension_numbers<[1], [0], [0], [1], [0, 0, 1, 1], [], []>} : vector<8x32xf32>, vector<32x96xf32>, vector<8x96xf32> -> vector<8x96xf32>
    %19 = arith.addf %18, %14 : vector<8x96xf32>
    %20 = vector.extract_strided_slice %17 {offsets = [0, 0], sizes = [8, 32], strides = [1, 1]} : vector<8x96xf32> to vector<8x32xf32>
    %21 = vector.extract_strided_slice %19 {offsets = [0, 0], sizes = [8, 32], strides = [1, 1]} : vector<8x96xf32> to vector<8x32xf32>
    %22 = arith.addf %20, %21 : vector<8x32xf32>
    %23 = arith.negf %22 : vector<8x32xf32>
    %24 = math.exp %23 : vector<8x32xf32>
    %cst_13 = arith.constant 1.000000e+00 : f32
    %25 = vector.broadcast %cst_13 : f32 to vector<8x32xf32>
    %26 = arith.addf %25, %24 : vector<8x32xf32>
    %27 = arith.divf %25, %26 : vector<8x32xf32>
    %28 = vector.extract_strided_slice %17 {offsets = [0, 32], sizes = [8, 32], strides = [1, 1]} : vector<8x96xf32> to vector<8x32xf32>
    %29 = vector.extract_strided_slice %19 {offsets = [0, 32], sizes = [8, 32], strides = [1, 1]} : vector<8x96xf32> to vector<8x32xf32>
    %30 = arith.addf %28, %29 : vector<8x32xf32>
    %31 = arith.negf %30 : vector<8x32xf32>
    %32 = math.exp %31 : vector<8x32xf32>
    %cst_14 = arith.constant 1.000000e+00 : f32
    %33 = vector.broadcast %cst_14 : f32 to vector<8x32xf32>
    %34 = arith.addf %33, %32 : vector<8x32xf32>
    %35 = arith.divf %33, %34 : vector<8x32xf32>
    %36 = vector.extract_strided_slice %17 {offsets = [0, 64], sizes = [8, 32], strides = [1, 1]} : vector<8x96xf32> to vector<8x32xf32>
    %37 = vector.extract_strided_slice %19 {offsets = [0, 64], sizes = [8, 32], strides = [1, 1]} : vector<8x96xf32> to vector<8x32xf32>
    %38 = arith.mulf %27, %37 : vector<8x32xf32>
    %39 = arith.addf %36, %38 : vector<8x32xf32>
    %40 = math.tanh %39 : vector<8x32xf32>
    %cst_15 = arith.constant 1.000000e+00 : f32
    %41 = vector.broadcast %cst_15 : f32 to vector<8x32xf32>
    %42 = arith.subf %41, %35 : vector<8x32xf32>
    %43 = arith.mulf %42, %40 : vector<8x32xf32>
    %44 = arith.mulf %35, %15 : vector<8x32xf32>
    %45 = arith.addf %43, %44 : vector<8x32xf32>
    %46 = arith.maximumf %16, %45 : vector<8x32xf32>
    %47 = vector.extract_strided_slice %10 {offsets = [8, 0], sizes = [8, 96], strides = [1, 1]} : vector<48x96xf32> to vector<8x96xf32>
    %cst_16 = arith.constant dense<0.000000e+00> : vector<8x96xf32>
    %48 = tpu.matmul %45, %11, %cst_16 {dimension_numbers = #tpu.dot_dimension_numbers<[1], [0], [0], [1], [0, 0, 1, 1], [], []>} : vector<8x32xf32>, vector<32x96xf32>, vector<8x96xf32> -> vector<8x96xf32>
    %49 = arith.addf %48, %14 : vector<8x96xf32>
    %50 = vector.extract_strided_slice %47 {offsets = [0, 0], sizes = [8, 32], strides = [1, 1]} : vector<8x96xf32> to vector<8x32xf32>
    %51 = vector.extract_strided_slice %49 {offsets = [0, 0], sizes = [8, 32], strides = [1, 1]} : vector<8x96xf32> to vector<8x32xf32>
    %52 = arith.addf %50, %51 : vector<8x32xf32>
    %53 = arith.negf %52 : vector<8x32xf32>
    %54 = math.exp %53 : vector<8x32xf32>
    %cst_17 = arith.constant 1.000000e+00 : f32
    %55 = vector.broadcast %cst_17 : f32 to vector<8x32xf32>
    %56 = arith.addf %55, %54 : vector<8x32xf32>
    %57 = arith.divf %55, %56 : vector<8x32xf32>
    %58 = vector.extract_strided_slice %47 {offsets = [0, 32], sizes = [8, 32], strides = [1, 1]} : vector<8x96xf32> to vector<8x32xf32>
    %59 = vector.extract_strided_slice %49 {offsets = [0, 32], sizes = [8, 32], strides = [1, 1]} : vector<8x96xf32> to vector<8x32xf32>
    %60 = arith.addf %58, %59 : vector<8x32xf32>
    %61 = arith.negf %60 : vector<8x32xf32>
    %62 = math.exp %61 : vector<8x32xf32>
    %cst_18 = arith.constant 1.000000e+00 : f32
    %63 = vector.broadcast %cst_18 : f32 to vector<8x32xf32>
    %64 = arith.addf %63, %62 : vector<8x32xf32>
    %65 = arith.divf %63, %64 : vector<8x32xf32>
    %66 = vector.extract_strided_slice %47 {offsets = [0, 64], sizes = [8, 32], strides = [1, 1]} : vector<8x96xf32> to vector<8x32xf32>
    %67 = vector.extract_strided_slice %49 {offsets = [0, 64], sizes = [8, 32], strides = [1, 1]} : vector<8x96xf32> to vector<8x32xf32>
    %68 = arith.mulf %57, %67 : vector<8x32xf32>
    %69 = arith.addf %66, %68 : vector<8x32xf32>
    %70 = math.tanh %69 : vector<8x32xf32>
    %cst_19 = arith.constant 1.000000e+00 : f32
    %71 = vector.broadcast %cst_19 : f32 to vector<8x32xf32>
    %72 = arith.subf %71, %65 : vector<8x32xf32>
    %73 = arith.mulf %72, %70 : vector<8x32xf32>
    %74 = arith.mulf %65, %45 : vector<8x32xf32>
    %75 = arith.addf %73, %74 : vector<8x32xf32>
    %76 = arith.maximumf %46, %75 : vector<8x32xf32>
    %77 = vector.extract_strided_slice %10 {offsets = [16, 0], sizes = [8, 96], strides = [1, 1]} : vector<48x96xf32> to vector<8x96xf32>
    %cst_20 = arith.constant dense<0.000000e+00> : vector<8x96xf32>
    %78 = tpu.matmul %75, %11, %cst_20 {dimension_numbers = #tpu.dot_dimension_numbers<[1], [0], [0], [1], [0, 0, 1, 1], [], []>} : vector<8x32xf32>, vector<32x96xf32>, vector<8x96xf32> -> vector<8x96xf32>
    %79 = arith.addf %78, %14 : vector<8x96xf32>
    %80 = vector.extract_strided_slice %77 {offsets = [0, 0], sizes = [8, 32], strides = [1, 1]} : vector<8x96xf32> to vector<8x32xf32>
    %81 = vector.extract_strided_slice %79 {offsets = [0, 0], sizes = [8, 32], strides = [1, 1]} : vector<8x96xf32> to vector<8x32xf32>
    %82 = arith.addf %80, %81 : vector<8x32xf32>
    %83 = arith.negf %82 : vector<8x32xf32>
    %84 = math.exp %83 : vector<8x32xf32>
    %cst_21 = arith.constant 1.000000e+00 : f32
    %85 = vector.broadcast %cst_21 : f32 to vector<8x32xf32>
    %86 = arith.addf %85, %84 : vector<8x32xf32>
    %87 = arith.divf %85, %86 : vector<8x32xf32>
    %88 = vector.extract_strided_slice %77 {offsets = [0, 32], sizes = [8, 32], strides = [1, 1]} : vector<8x96xf32> to vector<8x32xf32>
    %89 = vector.extract_strided_slice %79 {offsets = [0, 32], sizes = [8, 32], strides = [1, 1]} : vector<8x96xf32> to vector<8x32xf32>
    %90 = arith.addf %88, %89 : vector<8x32xf32>
    %91 = arith.negf %90 : vector<8x32xf32>
    %92 = math.exp %91 : vector<8x32xf32>
    %cst_22 = arith.constant 1.000000e+00 : f32
    %93 = vector.broadcast %cst_22 : f32 to vector<8x32xf32>
    %94 = arith.addf %93, %92 : vector<8x32xf32>
    %95 = arith.divf %93, %94 : vector<8x32xf32>
    %96 = vector.extract_strided_slice %77 {offsets = [0, 64], sizes = [8, 32], strides = [1, 1]} : vector<8x96xf32> to vector<8x32xf32>
    %97 = vector.extract_strided_slice %79 {offsets = [0, 64], sizes = [8, 32], strides = [1, 1]} : vector<8x96xf32> to vector<8x32xf32>
    %98 = arith.mulf %87, %97 : vector<8x32xf32>
    %99 = arith.addf %96, %98 : vector<8x32xf32>
    %100 = math.tanh %99 : vector<8x32xf32>
    %cst_23 = arith.constant 1.000000e+00 : f32
    %101 = vector.broadcast %cst_23 : f32 to vector<8x32xf32>
    %102 = arith.subf %101, %95 : vector<8x32xf32>
    %103 = arith.mulf %102, %100 : vector<8x32xf32>
    %104 = arith.mulf %95, %75 : vector<8x32xf32>
    %105 = arith.addf %103, %104 : vector<8x32xf32>
    %106 = arith.maximumf %76, %105 : vector<8x32xf32>
    %107 = vector.extract_strided_slice %10 {offsets = [24, 0], sizes = [8, 96], strides = [1, 1]} : vector<48x96xf32> to vector<8x96xf32>
    %cst_24 = arith.constant dense<0.000000e+00> : vector<8x96xf32>
    %108 = tpu.matmul %105, %11, %cst_24 {dimension_numbers = #tpu.dot_dimension_numbers<[1], [0], [0], [1], [0, 0, 1, 1], [], []>} : vector<8x32xf32>, vector<32x96xf32>, vector<8x96xf32> -> vector<8x96xf32>
    %109 = arith.addf %108, %14 : vector<8x96xf32>
    %110 = vector.extract_strided_slice %107 {offsets = [0, 0], sizes = [8, 32], strides = [1, 1]} : vector<8x96xf32> to vector<8x32xf32>
    %111 = vector.extract_strided_slice %109 {offsets = [0, 0], sizes = [8, 32], strides = [1, 1]} : vector<8x96xf32> to vector<8x32xf32>
    %112 = arith.addf %110, %111 : vector<8x32xf32>
    %113 = arith.negf %112 : vector<8x32xf32>
    %114 = math.exp %113 : vector<8x32xf32>
    %cst_25 = arith.constant 1.000000e+00 : f32
    %115 = vector.broadcast %cst_25 : f32 to vector<8x32xf32>
    %116 = arith.addf %115, %114 : vector<8x32xf32>
    %117 = arith.divf %115, %116 : vector<8x32xf32>
    %118 = vector.extract_strided_slice %107 {offsets = [0, 32], sizes = [8, 32], strides = [1, 1]} : vector<8x96xf32> to vector<8x32xf32>
    %119 = vector.extract_strided_slice %109 {offsets = [0, 32], sizes = [8, 32], strides = [1, 1]} : vector<8x96xf32> to vector<8x32xf32>
    %120 = arith.addf %118, %119 : vector<8x32xf32>
    %121 = arith.negf %120 : vector<8x32xf32>
    %122 = math.exp %121 : vector<8x32xf32>
    %cst_26 = arith.constant 1.000000e+00 : f32
    %123 = vector.broadcast %cst_26 : f32 to vector<8x32xf32>
    %124 = arith.addf %123, %122 : vector<8x32xf32>
    %125 = arith.divf %123, %124 : vector<8x32xf32>
    %126 = vector.extract_strided_slice %107 {offsets = [0, 64], sizes = [8, 32], strides = [1, 1]} : vector<8x96xf32> to vector<8x32xf32>
    %127 = vector.extract_strided_slice %109 {offsets = [0, 64], sizes = [8, 32], strides = [1, 1]} : vector<8x96xf32> to vector<8x32xf32>
    %128 = arith.mulf %117, %127 : vector<8x32xf32>
    %129 = arith.addf %126, %128 : vector<8x32xf32>
    %130 = math.tanh %129 : vector<8x32xf32>
    %cst_27 = arith.constant 1.000000e+00 : f32
    %131 = vector.broadcast %cst_27 : f32 to vector<8x32xf32>
    %132 = arith.subf %131, %125 : vector<8x32xf32>
    %133 = arith.mulf %132, %130 : vector<8x32xf32>
    %134 = arith.mulf %125, %105 : vector<8x32xf32>
    %135 = arith.addf %133, %134 : vector<8x32xf32>
    %136 = arith.maximumf %106, %135 : vector<8x32xf32>
    %137 = vector.extract_strided_slice %10 {offsets = [32, 0], sizes = [8, 96], strides = [1, 1]} : vector<48x96xf32> to vector<8x96xf32>
    %cst_28 = arith.constant dense<0.000000e+00> : vector<8x96xf32>
    %138 = tpu.matmul %135, %11, %cst_28 {dimension_numbers = #tpu.dot_dimension_numbers<[1], [0], [0], [1], [0, 0, 1, 1], [], []>} : vector<8x32xf32>, vector<32x96xf32>, vector<8x96xf32> -> vector<8x96xf32>
    %139 = arith.addf %138, %14 : vector<8x96xf32>
    %140 = vector.extract_strided_slice %137 {offsets = [0, 0], sizes = [8, 32], strides = [1, 1]} : vector<8x96xf32> to vector<8x32xf32>
    %141 = vector.extract_strided_slice %139 {offsets = [0, 0], sizes = [8, 32], strides = [1, 1]} : vector<8x96xf32> to vector<8x32xf32>
    %142 = arith.addf %140, %141 : vector<8x32xf32>
    %143 = arith.negf %142 : vector<8x32xf32>
    %144 = math.exp %143 : vector<8x32xf32>
    %cst_29 = arith.constant 1.000000e+00 : f32
    %145 = vector.broadcast %cst_29 : f32 to vector<8x32xf32>
    %146 = arith.addf %145, %144 : vector<8x32xf32>
    %147 = arith.divf %145, %146 : vector<8x32xf32>
    %148 = vector.extract_strided_slice %137 {offsets = [0, 32], sizes = [8, 32], strides = [1, 1]} : vector<8x96xf32> to vector<8x32xf32>
    %149 = vector.extract_strided_slice %139 {offsets = [0, 32], sizes = [8, 32], strides = [1, 1]} : vector<8x96xf32> to vector<8x32xf32>
    %150 = arith.addf %148, %149 : vector<8x32xf32>
    %151 = arith.negf %150 : vector<8x32xf32>
    %152 = math.exp %151 : vector<8x32xf32>
    %cst_30 = arith.constant 1.000000e+00 : f32
    %153 = vector.broadcast %cst_30 : f32 to vector<8x32xf32>
    %154 = arith.addf %153, %152 : vector<8x32xf32>
    %155 = arith.divf %153, %154 : vector<8x32xf32>
    %156 = vector.extract_strided_slice %137 {offsets = [0, 64], sizes = [8, 32], strides = [1, 1]} : vector<8x96xf32> to vector<8x32xf32>
    %157 = vector.extract_strided_slice %139 {offsets = [0, 64], sizes = [8, 32], strides = [1, 1]} : vector<8x96xf32> to vector<8x32xf32>
    %158 = arith.mulf %147, %157 : vector<8x32xf32>
    %159 = arith.addf %156, %158 : vector<8x32xf32>
    %160 = math.tanh %159 : vector<8x32xf32>
    %cst_31 = arith.constant 1.000000e+00 : f32
    %161 = vector.broadcast %cst_31 : f32 to vector<8x32xf32>
    %162 = arith.subf %161, %155 : vector<8x32xf32>
    %163 = arith.mulf %162, %160 : vector<8x32xf32>
    %164 = arith.mulf %155, %135 : vector<8x32xf32>
    %165 = arith.addf %163, %164 : vector<8x32xf32>
    %166 = arith.maximumf %136, %165 : vector<8x32xf32>
    %167 = vector.extract_strided_slice %10 {offsets = [40, 0], sizes = [8, 96], strides = [1, 1]} : vector<48x96xf32> to vector<8x96xf32>
    %cst_32 = arith.constant dense<0.000000e+00> : vector<8x96xf32>
    %168 = tpu.matmul %165, %11, %cst_32 {dimension_numbers = #tpu.dot_dimension_numbers<[1], [0], [0], [1], [0, 0, 1, 1], [], []>} : vector<8x32xf32>, vector<32x96xf32>, vector<8x96xf32> -> vector<8x96xf32>
    %169 = arith.addf %168, %14 : vector<8x96xf32>
    %170 = vector.extract_strided_slice %167 {offsets = [0, 0], sizes = [8, 32], strides = [1, 1]} : vector<8x96xf32> to vector<8x32xf32>
    %171 = vector.extract_strided_slice %169 {offsets = [0, 0], sizes = [8, 32], strides = [1, 1]} : vector<8x96xf32> to vector<8x32xf32>
    %172 = arith.addf %170, %171 : vector<8x32xf32>
    %173 = arith.negf %172 : vector<8x32xf32>
    %174 = math.exp %173 : vector<8x32xf32>
    %cst_33 = arith.constant 1.000000e+00 : f32
    %175 = vector.broadcast %cst_33 : f32 to vector<8x32xf32>
    %176 = arith.addf %175, %174 : vector<8x32xf32>
    %177 = arith.divf %175, %176 : vector<8x32xf32>
    %178 = vector.extract_strided_slice %167 {offsets = [0, 32], sizes = [8, 32], strides = [1, 1]} : vector<8x96xf32> to vector<8x32xf32>
    %179 = vector.extract_strided_slice %169 {offsets = [0, 32], sizes = [8, 32], strides = [1, 1]} : vector<8x96xf32> to vector<8x32xf32>
    %180 = arith.addf %178, %179 : vector<8x32xf32>
    %181 = arith.negf %180 : vector<8x32xf32>
    %182 = math.exp %181 : vector<8x32xf32>
    %cst_34 = arith.constant 1.000000e+00 : f32
    %183 = vector.broadcast %cst_34 : f32 to vector<8x32xf32>
    %184 = arith.addf %183, %182 : vector<8x32xf32>
    %185 = arith.divf %183, %184 : vector<8x32xf32>
    %186 = vector.extract_strided_slice %167 {offsets = [0, 64], sizes = [8, 32], strides = [1, 1]} : vector<8x96xf32> to vector<8x32xf32>
    %187 = vector.extract_strided_slice %169 {offsets = [0, 64], sizes = [8, 32], strides = [1, 1]} : vector<8x96xf32> to vector<8x32xf32>
    %188 = arith.mulf %177, %187 : vector<8x32xf32>
    %189 = arith.addf %186, %188 : vector<8x32xf32>
    %190 = math.tanh %189 : vector<8x32xf32>
    %cst_35 = arith.constant 1.000000e+00 : f32
    %191 = vector.broadcast %cst_35 : f32 to vector<8x32xf32>
    %192 = arith.subf %191, %185 : vector<8x32xf32>
    %193 = arith.mulf %192, %190 : vector<8x32xf32>
    %194 = arith.mulf %185, %165 : vector<8x32xf32>
    %195 = arith.addf %193, %194 : vector<8x32xf32>
    %196 = arith.maximumf %166, %195 : vector<8x32xf32>
    %197 = vector.extract_strided_slice %0 {offsets = [48, 0], sizes = [32, 32], strides = [1, 1]} : vector<80x32xf32> to vector<32x32xf32>
    %c144 = arith.constant 144 : index
    %c0_36 = arith.constant 0 : index
    %198 = vector.load %arg5[%c144, %c0_36] : memref<272x96xf32, #tpu.memory_space<vmem>>, vector<32x48xf32>
    %cst_37 = arith.constant dense<0.000000e+00> : vector<32x48xf32>
    %199 = tpu.matmul %197, %198, %cst_37 {dimension_numbers = #tpu.dot_dimension_numbers<[1], [0], [0], [1], [0, 0, 1, 1], [], []>} : vector<32x32xf32>, vector<32x48xf32>, vector<32x48xf32> -> vector<32x48xf32>
    %c176 = arith.constant 176 : index
    %c0_38 = arith.constant 0 : index
    %200 = vector.load %arg5[%c176, %c0_38] : memref<272x96xf32, #tpu.memory_space<vmem>>, vector<1x48xf32>
    %201 = vector.broadcast %200 : vector<1x48xf32> to vector<32x48xf32>
    %202 = arith.addf %199, %201 : vector<32x48xf32>
    %c184 = arith.constant 184 : index
    %c0_39 = arith.constant 0 : index
    %203 = vector.load %arg5[%c184, %c0_39] : memref<272x96xf32, #tpu.memory_space<vmem>>, vector<16x48xf32>
    %c200 = arith.constant 200 : index
    %c0_40 = arith.constant 0 : index
    %204 = vector.load %arg5[%c200, %c0_40] : memref<272x96xf32, #tpu.memory_space<vmem>>, vector<1x48xf32>
    %205 = vector.shape_cast %204 : vector<1x48xf32> to vector<1x48xf32>
    %206 = vector.broadcast %205 : vector<1x48xf32> to vector<8x48xf32>
    %207 = vector.extract_strided_slice %195 {offsets = [0, 0], sizes = [8, 16], strides = [1, 1]} : vector<8x32xf32> to vector<8x16xf32>
    %208 = vector.extract_strided_slice %196 {offsets = [0, 0], sizes = [8, 16], strides = [1, 1]} : vector<8x32xf32> to vector<8x16xf32>
    %209 = vector.extract_strided_slice %202 {offsets = [0, 0], sizes = [8, 48], strides = [1, 1]} : vector<32x48xf32> to vector<8x48xf32>
    %cst_41 = arith.constant dense<0.000000e+00> : vector<8x48xf32>
    %210 = tpu.matmul %207, %203, %cst_41 {dimension_numbers = #tpu.dot_dimension_numbers<[1], [0], [0], [1], [0, 0, 1, 1], [], []>} : vector<8x16xf32>, vector<16x48xf32>, vector<8x48xf32> -> vector<8x48xf32>
    %211 = arith.addf %210, %206 : vector<8x48xf32>
    %212 = vector.extract_strided_slice %209 {offsets = [0, 0], sizes = [8, 16], strides = [1, 1]} : vector<8x48xf32> to vector<8x16xf32>
    %213 = vector.extract_strided_slice %211 {offsets = [0, 0], sizes = [8, 16], strides = [1, 1]} : vector<8x48xf32> to vector<8x16xf32>
    %214 = arith.addf %212, %213 : vector<8x16xf32>
    %215 = arith.negf %214 : vector<8x16xf32>
    %216 = math.exp %215 : vector<8x16xf32>
    %cst_42 = arith.constant 1.000000e+00 : f32
    %217 = vector.broadcast %cst_42 : f32 to vector<8x16xf32>
    %218 = arith.addf %217, %216 : vector<8x16xf32>
    %219 = arith.divf %217, %218 : vector<8x16xf32>
    %220 = vector.extract_strided_slice %209 {offsets = [0, 16], sizes = [8, 16], strides = [1, 1]} : vector<8x48xf32> to vector<8x16xf32>
    %221 = vector.extract_strided_slice %211 {offsets = [0, 16], sizes = [8, 16], strides = [1, 1]} : vector<8x48xf32> to vector<8x16xf32>
    %222 = arith.addf %220, %221 : vector<8x16xf32>
    %223 = arith.negf %222 : vector<8x16xf32>
    %224 = math.exp %223 : vector<8x16xf32>
    %cst_43 = arith.constant 1.000000e+00 : f32
    %225 = vector.broadcast %cst_43 : f32 to vector<8x16xf32>
    %226 = arith.addf %225, %224 : vector<8x16xf32>
    %227 = arith.divf %225, %226 : vector<8x16xf32>
    %228 = vector.extract_strided_slice %209 {offsets = [0, 32], sizes = [8, 16], strides = [1, 1]} : vector<8x48xf32> to vector<8x16xf32>
    %229 = vector.extract_strided_slice %211 {offsets = [0, 32], sizes = [8, 16], strides = [1, 1]} : vector<8x48xf32> to vector<8x16xf32>
    %230 = arith.mulf %219, %229 : vector<8x16xf32>
    %231 = arith.addf %228, %230 : vector<8x16xf32>
    %232 = math.tanh %231 : vector<8x16xf32>
    %cst_44 = arith.constant 1.000000e+00 : f32
    %233 = vector.broadcast %cst_44 : f32 to vector<8x16xf32>
    %234 = arith.subf %233, %227 : vector<8x16xf32>
    %235 = arith.mulf %234, %232 : vector<8x16xf32>
    %236 = arith.mulf %227, %207 : vector<8x16xf32>
    %237 = arith.addf %235, %236 : vector<8x16xf32>
    %238 = arith.maximumf %208, %237 : vector<8x16xf32>
    %239 = vector.extract_strided_slice %202 {offsets = [8, 0], sizes = [8, 48], strides = [1, 1]} : vector<32x48xf32> to vector<8x48xf32>
    %cst_45 = arith.constant dense<0.000000e+00> : vector<8x48xf32>
    %240 = tpu.matmul %237, %203, %cst_45 {dimension_numbers = #tpu.dot_dimension_numbers<[1], [0], [0], [1], [0, 0, 1, 1], [], []>} : vector<8x16xf32>, vector<16x48xf32>, vector<8x48xf32> -> vector<8x48xf32>
    %241 = arith.addf %240, %206 : vector<8x48xf32>
    %242 = vector.extract_strided_slice %239 {offsets = [0, 0], sizes = [8, 16], strides = [1, 1]} : vector<8x48xf32> to vector<8x16xf32>
    %243 = vector.extract_strided_slice %241 {offsets = [0, 0], sizes = [8, 16], strides = [1, 1]} : vector<8x48xf32> to vector<8x16xf32>
    %244 = arith.addf %242, %243 : vector<8x16xf32>
    %245 = arith.negf %244 : vector<8x16xf32>
    %246 = math.exp %245 : vector<8x16xf32>
    %cst_46 = arith.constant 1.000000e+00 : f32
    %247 = vector.broadcast %cst_46 : f32 to vector<8x16xf32>
    %248 = arith.addf %247, %246 : vector<8x16xf32>
    %249 = arith.divf %247, %248 : vector<8x16xf32>
    %250 = vector.extract_strided_slice %239 {offsets = [0, 16], sizes = [8, 16], strides = [1, 1]} : vector<8x48xf32> to vector<8x16xf32>
    %251 = vector.extract_strided_slice %241 {offsets = [0, 16], sizes = [8, 16], strides = [1, 1]} : vector<8x48xf32> to vector<8x16xf32>
    %252 = arith.addf %250, %251 : vector<8x16xf32>
    %253 = arith.negf %252 : vector<8x16xf32>
    %254 = math.exp %253 : vector<8x16xf32>
    %cst_47 = arith.constant 1.000000e+00 : f32
    %255 = vector.broadcast %cst_47 : f32 to vector<8x16xf32>
    %256 = arith.addf %255, %254 : vector<8x16xf32>
    %257 = arith.divf %255, %256 : vector<8x16xf32>
    %258 = vector.extract_strided_slice %239 {offsets = [0, 32], sizes = [8, 16], strides = [1, 1]} : vector<8x48xf32> to vector<8x16xf32>
    %259 = vector.extract_strided_slice %241 {offsets = [0, 32], sizes = [8, 16], strides = [1, 1]} : vector<8x48xf32> to vector<8x16xf32>
    %260 = arith.mulf %249, %259 : vector<8x16xf32>
    %261 = arith.addf %258, %260 : vector<8x16xf32>
    %262 = math.tanh %261 : vector<8x16xf32>
    %cst_48 = arith.constant 1.000000e+00 : f32
    %263 = vector.broadcast %cst_48 : f32 to vector<8x16xf32>
    %264 = arith.subf %263, %257 : vector<8x16xf32>
    %265 = arith.mulf %264, %262 : vector<8x16xf32>
    %266 = arith.mulf %257, %237 : vector<8x16xf32>
    %267 = arith.addf %265, %266 : vector<8x16xf32>
    %268 = arith.maximumf %238, %267 : vector<8x16xf32>
    %269 = vector.extract_strided_slice %202 {offsets = [16, 0], sizes = [8, 48], strides = [1, 1]} : vector<32x48xf32> to vector<8x48xf32>
    %cst_49 = arith.constant dense<0.000000e+00> : vector<8x48xf32>
    %270 = tpu.matmul %267, %203, %cst_49 {dimension_numbers = #tpu.dot_dimension_numbers<[1], [0], [0], [1], [0, 0, 1, 1], [], []>} : vector<8x16xf32>, vector<16x48xf32>, vector<8x48xf32> -> vector<8x48xf32>
    %271 = arith.addf %270, %206 : vector<8x48xf32>
    %272 = vector.extract_strided_slice %269 {offsets = [0, 0], sizes = [8, 16], strides = [1, 1]} : vector<8x48xf32> to vector<8x16xf32>
    %273 = vector.extract_strided_slice %271 {offsets = [0, 0], sizes = [8, 16], strides = [1, 1]} : vector<8x48xf32> to vector<8x16xf32>
    %274 = arith.addf %272, %273 : vector<8x16xf32>
    %275 = arith.negf %274 : vector<8x16xf32>
    %276 = math.exp %275 : vector<8x16xf32>
    %cst_50 = arith.constant 1.000000e+00 : f32
    %277 = vector.broadcast %cst_50 : f32 to vector<8x16xf32>
    %278 = arith.addf %277, %276 : vector<8x16xf32>
    %279 = arith.divf %277, %278 : vector<8x16xf32>
    %280 = vector.extract_strided_slice %269 {offsets = [0, 16], sizes = [8, 16], strides = [1, 1]} : vector<8x48xf32> to vector<8x16xf32>
    %281 = vector.extract_strided_slice %271 {offsets = [0, 16], sizes = [8, 16], strides = [1, 1]} : vector<8x48xf32> to vector<8x16xf32>
    %282 = arith.addf %280, %281 : vector<8x16xf32>
    %283 = arith.negf %282 : vector<8x16xf32>
    %284 = math.exp %283 : vector<8x16xf32>
    %cst_51 = arith.constant 1.000000e+00 : f32
    %285 = vector.broadcast %cst_51 : f32 to vector<8x16xf32>
    %286 = arith.addf %285, %284 : vector<8x16xf32>
    %287 = arith.divf %285, %286 : vector<8x16xf32>
    %288 = vector.extract_strided_slice %269 {offsets = [0, 32], sizes = [8, 16], strides = [1, 1]} : vector<8x48xf32> to vector<8x16xf32>
    %289 = vector.extract_strided_slice %271 {offsets = [0, 32], sizes = [8, 16], strides = [1, 1]} : vector<8x48xf32> to vector<8x16xf32>
    %290 = arith.mulf %279, %289 : vector<8x16xf32>
    %291 = arith.addf %288, %290 : vector<8x16xf32>
    %292 = math.tanh %291 : vector<8x16xf32>
    %cst_52 = arith.constant 1.000000e+00 : f32
    %293 = vector.broadcast %cst_52 : f32 to vector<8x16xf32>
    %294 = arith.subf %293, %287 : vector<8x16xf32>
    %295 = arith.mulf %294, %292 : vector<8x16xf32>
    %296 = arith.mulf %287, %267 : vector<8x16xf32>
    %297 = arith.addf %295, %296 : vector<8x16xf32>
    %298 = arith.maximumf %268, %297 : vector<8x16xf32>
    %299 = vector.extract_strided_slice %202 {offsets = [24, 0], sizes = [8, 48], strides = [1, 1]} : vector<32x48xf32> to vector<8x48xf32>
    %cst_53 = arith.constant dense<0.000000e+00> : vector<8x48xf32>
    %300 = tpu.matmul %297, %203, %cst_53 {dimension_numbers = #tpu.dot_dimension_numbers<[1], [0], [0], [1], [0, 0, 1, 1], [], []>} : vector<8x16xf32>, vector<16x48xf32>, vector<8x48xf32> -> vector<8x48xf32>
    %301 = arith.addf %300, %206 : vector<8x48xf32>
    %302 = vector.extract_strided_slice %299 {offsets = [0, 0], sizes = [8, 16], strides = [1, 1]} : vector<8x48xf32> to vector<8x16xf32>
    %303 = vector.extract_strided_slice %301 {offsets = [0, 0], sizes = [8, 16], strides = [1, 1]} : vector<8x48xf32> to vector<8x16xf32>
    %304 = arith.addf %302, %303 : vector<8x16xf32>
    %305 = arith.negf %304 : vector<8x16xf32>
    %306 = math.exp %305 : vector<8x16xf32>
    %cst_54 = arith.constant 1.000000e+00 : f32
    %307 = vector.broadcast %cst_54 : f32 to vector<8x16xf32>
    %308 = arith.addf %307, %306 : vector<8x16xf32>
    %309 = arith.divf %307, %308 : vector<8x16xf32>
    %310 = vector.extract_strided_slice %299 {offsets = [0, 16], sizes = [8, 16], strides = [1, 1]} : vector<8x48xf32> to vector<8x16xf32>
    %311 = vector.extract_strided_slice %301 {offsets = [0, 16], sizes = [8, 16], strides = [1, 1]} : vector<8x48xf32> to vector<8x16xf32>
    %312 = arith.addf %310, %311 : vector<8x16xf32>
    %313 = arith.negf %312 : vector<8x16xf32>
    %314 = math.exp %313 : vector<8x16xf32>
    %cst_55 = arith.constant 1.000000e+00 : f32
    %315 = vector.broadcast %cst_55 : f32 to vector<8x16xf32>
    %316 = arith.addf %315, %314 : vector<8x16xf32>
    %317 = arith.divf %315, %316 : vector<8x16xf32>
    %318 = vector.extract_strided_slice %299 {offsets = [0, 32], sizes = [8, 16], strides = [1, 1]} : vector<8x48xf32> to vector<8x16xf32>
    %319 = vector.extract_strided_slice %301 {offsets = [0, 32], sizes = [8, 16], strides = [1, 1]} : vector<8x48xf32> to vector<8x16xf32>
    %320 = arith.mulf %309, %319 : vector<8x16xf32>
    %321 = arith.addf %318, %320 : vector<8x16xf32>
    %322 = math.tanh %321 : vector<8x16xf32>
    %cst_56 = arith.constant 1.000000e+00 : f32
    %323 = vector.broadcast %cst_56 : f32 to vector<8x16xf32>
    %324 = arith.subf %323, %317 : vector<8x16xf32>
    %325 = arith.mulf %324, %322 : vector<8x16xf32>
    %326 = arith.mulf %317, %297 : vector<8x16xf32>
    %327 = arith.addf %325, %326 : vector<8x16xf32>
    %328 = arith.maximumf %298, %327 : vector<8x16xf32>
    %329 = tpu.concatenate %45, %75, %105, %135, %165, %195 in 0 : vector<8x32xf32>, vector<8x32xf32>, vector<8x32xf32>, vector<8x32xf32>, vector<8x32xf32>, vector<8x32xf32> -> vector<48x32xf32>
    %330 = vector.extract_strided_slice %329 {offsets = [0, 16], sizes = [48, 16], strides = [1, 1]} : vector<48x32xf32> to vector<48x16xf32>
    %c208 = arith.constant 208 : index
    %c0_57 = arith.constant 0 : index
    %331 = vector.load %arg5[%c208, %c0_57] : memref<272x96xf32, #tpu.memory_space<vmem>>, vector<16x48xf32>
    %cst_58 = arith.constant dense<0.000000e+00> : vector<48x48xf32>
    %332 = tpu.matmul %330, %331, %cst_58 {dimension_numbers = #tpu.dot_dimension_numbers<[1], [0], [0], [1], [0, 0, 1, 1], [], []>} : vector<48x16xf32>, vector<16x48xf32>, vector<48x48xf32> -> vector<48x48xf32>
    %c224 = arith.constant 224 : index
    %c0_59 = arith.constant 0 : index
    %333 = vector.load %arg5[%c224, %c0_59] : memref<272x96xf32, #tpu.memory_space<vmem>>, vector<16x48xf32>
    %cst_60 = arith.constant dense<0.000000e+00> : vector<48x48xf32>
    %334 = tpu.matmul %330, %333, %cst_60 {dimension_numbers = #tpu.dot_dimension_numbers<[1], [0], [0], [1], [0, 0, 1, 1], [], []>} : vector<48x16xf32>, vector<16x48xf32>, vector<48x48xf32> -> vector<48x48xf32>
    %c240 = arith.constant 240 : index
    %c0_61 = arith.constant 0 : index
    %335 = vector.load %arg5[%c240, %c0_61] : memref<272x96xf32, #tpu.memory_space<vmem>>, vector<1x48xf32>
    %c248 = arith.constant 248 : index
    %c0_62 = arith.constant 0 : index
    %336 = vector.load %arg5[%c248, %c0_62] : memref<272x96xf32, #tpu.memory_space<vmem>>, vector<16x48xf32>
    %c264 = arith.constant 264 : index
    %c0_63 = arith.constant 0 : index
    %337 = vector.load %arg5[%c264, %c0_63] : memref<272x96xf32, #tpu.memory_space<vmem>>, vector<1x48xf32>
    %338 = vector.shape_cast %337 : vector<1x48xf32> to vector<1x48xf32>
    %339 = vector.broadcast %338 : vector<1x48xf32> to vector<8x48xf32>
    %cst_64 = arith.constant 0.000000e+00 : f32
    %340 = vector.broadcast %cst_64 : f32 to vector<8x16xf32>
    %cst_65 = arith.constant 0xFF800000 : f32
    %341 = vector.broadcast %cst_65 : f32 to vector<8x16xf32>
    %342 = vector.extract_strided_slice %332 {offsets = [0, 0], sizes = [8, 48], strides = [1, 1]} : vector<48x48xf32> to vector<8x48xf32>
    %343 = vector.extract_strided_slice %334 {offsets = [40, 0], sizes = [8, 48], strides = [1, 1]} : vector<48x48xf32> to vector<8x48xf32>
    %344 = arith.addf %342, %343 : vector<8x48xf32>
    %345 = vector.broadcast %335 : vector<1x48xf32> to vector<8x48xf32>
    %346 = arith.addf %344, %345 : vector<8x48xf32>
    %cst_66 = arith.constant dense<0.000000e+00> : vector<8x48xf32>
    %347 = tpu.matmul %340, %336, %cst_66 {dimension_numbers = #tpu.dot_dimension_numbers<[1], [0], [0], [1], [0, 0, 1, 1], [], []>} : vector<8x16xf32>, vector<16x48xf32>, vector<8x48xf32> -> vector<8x48xf32>
    %348 = arith.addf %347, %339 : vector<8x48xf32>
    %349 = vector.extract_strided_slice %346 {offsets = [0, 0], sizes = [8, 16], strides = [1, 1]} : vector<8x48xf32> to vector<8x16xf32>
    %350 = vector.extract_strided_slice %348 {offsets = [0, 0], sizes = [8, 16], strides = [1, 1]} : vector<8x48xf32> to vector<8x16xf32>
    %351 = arith.addf %349, %350 : vector<8x16xf32>
    %352 = arith.negf %351 : vector<8x16xf32>
    %353 = math.exp %352 : vector<8x16xf32>
    %cst_67 = arith.constant 1.000000e+00 : f32
    %354 = vector.broadcast %cst_67 : f32 to vector<8x16xf32>
    %355 = arith.addf %354, %353 : vector<8x16xf32>
    %356 = arith.divf %354, %355 : vector<8x16xf32>
    %357 = vector.extract_strided_slice %346 {offsets = [0, 16], sizes = [8, 16], strides = [1, 1]} : vector<8x48xf32> to vector<8x16xf32>
    %358 = vector.extract_strided_slice %348 {offsets = [0, 16], sizes = [8, 16], strides = [1, 1]} : vector<8x48xf32> to vector<8x16xf32>
    %359 = arith.addf %357, %358 : vector<8x16xf32>
    %360 = arith.negf %359 : vector<8x16xf32>
    %361 = math.exp %360 : vector<8x16xf32>
    %cst_68 = arith.constant 1.000000e+00 : f32
    %362 = vector.broadcast %cst_68 : f32 to vector<8x16xf32>
    %363 = arith.addf %362, %361 : vector<8x16xf32>
    %364 = arith.divf %362, %363 : vector<8x16xf32>
    %365 = vector.extract_strided_slice %346 {offsets = [0, 32], sizes = [8, 16], strides = [1, 1]} : vector<8x48xf32> to vector<8x16xf32>
    %366 = vector.extract_strided_slice %348 {offsets = [0, 32], sizes = [8, 16], strides = [1, 1]} : vector<8x48xf32> to vector<8x16xf32>
    %367 = arith.mulf %356, %366 : vector<8x16xf32>
    %368 = arith.addf %365, %367 : vector<8x16xf32>
    %369 = math.tanh %368 : vector<8x16xf32>
    %cst_69 = arith.constant 1.000000e+00 : f32
    %370 = vector.broadcast %cst_69 : f32 to vector<8x16xf32>
    %371 = arith.subf %370, %364 : vector<8x16xf32>
    %372 = arith.mulf %371, %369 : vector<8x16xf32>
    %373 = arith.mulf %364, %340 : vector<8x16xf32>
    %374 = arith.addf %372, %373 : vector<8x16xf32>
    %375 = arith.maximumf %341, %374 : vector<8x16xf32>
    %376 = vector.extract_strided_slice %332 {offsets = [8, 0], sizes = [8, 48], strides = [1, 1]} : vector<48x48xf32> to vector<8x48xf32>
    %377 = vector.extract_strided_slice %334 {offsets = [32, 0], sizes = [8, 48], strides = [1, 1]} : vector<48x48xf32> to vector<8x48xf32>
    %378 = arith.addf %376, %377 : vector<8x48xf32>
    %379 = vector.broadcast %335 : vector<1x48xf32> to vector<8x48xf32>
    %380 = arith.addf %378, %379 : vector<8x48xf32>
    %cst_70 = arith.constant dense<0.000000e+00> : vector<8x48xf32>
    %381 = tpu.matmul %374, %336, %cst_70 {dimension_numbers = #tpu.dot_dimension_numbers<[1], [0], [0], [1], [0, 0, 1, 1], [], []>} : vector<8x16xf32>, vector<16x48xf32>, vector<8x48xf32> -> vector<8x48xf32>
    %382 = arith.addf %381, %339 : vector<8x48xf32>
    %383 = vector.extract_strided_slice %380 {offsets = [0, 0], sizes = [8, 16], strides = [1, 1]} : vector<8x48xf32> to vector<8x16xf32>
    %384 = vector.extract_strided_slice %382 {offsets = [0, 0], sizes = [8, 16], strides = [1, 1]} : vector<8x48xf32> to vector<8x16xf32>
    %385 = arith.addf %383, %384 : vector<8x16xf32>
    %386 = arith.negf %385 : vector<8x16xf32>
    %387 = math.exp %386 : vector<8x16xf32>
    %cst_71 = arith.constant 1.000000e+00 : f32
    %388 = vector.broadcast %cst_71 : f32 to vector<8x16xf32>
    %389 = arith.addf %388, %387 : vector<8x16xf32>
    %390 = arith.divf %388, %389 : vector<8x16xf32>
    %391 = vector.extract_strided_slice %380 {offsets = [0, 16], sizes = [8, 16], strides = [1, 1]} : vector<8x48xf32> to vector<8x16xf32>
    %392 = vector.extract_strided_slice %382 {offsets = [0, 16], sizes = [8, 16], strides = [1, 1]} : vector<8x48xf32> to vector<8x16xf32>
    %393 = arith.addf %391, %392 : vector<8x16xf32>
    %394 = arith.negf %393 : vector<8x16xf32>
    %395 = math.exp %394 : vector<8x16xf32>
    %cst_72 = arith.constant 1.000000e+00 : f32
    %396 = vector.broadcast %cst_72 : f32 to vector<8x16xf32>
    %397 = arith.addf %396, %395 : vector<8x16xf32>
    %398 = arith.divf %396, %397 : vector<8x16xf32>
    %399 = vector.extract_strided_slice %380 {offsets = [0, 32], sizes = [8, 16], strides = [1, 1]} : vector<8x48xf32> to vector<8x16xf32>
    %400 = vector.extract_strided_slice %382 {offsets = [0, 32], sizes = [8, 16], strides = [1, 1]} : vector<8x48xf32> to vector<8x16xf32>
    %401 = arith.mulf %390, %400 : vector<8x16xf32>
    %402 = arith.addf %399, %401 : vector<8x16xf32>
    %403 = math.tanh %402 : vector<8x16xf32>
    %cst_73 = arith.constant 1.000000e+00 : f32
    %404 = vector.broadcast %cst_73 : f32 to vector<8x16xf32>
    %405 = arith.subf %404, %398 : vector<8x16xf32>
    %406 = arith.mulf %405, %403 : vector<8x16xf32>
    %407 = arith.mulf %398, %374 : vector<8x16xf32>
    %408 = arith.addf %406, %407 : vector<8x16xf32>
    %409 = arith.maximumf %375, %408 : vector<8x16xf32>
    %410 = vector.extract_strided_slice %332 {offsets = [16, 0], sizes = [8, 48], strides = [1, 1]} : vector<48x48xf32> to vector<8x48xf32>
    %411 = vector.extract_strided_slice %334 {offsets = [24, 0], sizes = [8, 48], strides = [1, 1]} : vector<48x48xf32> to vector<8x48xf32>
    %412 = arith.addf %410, %411 : vector<8x48xf32>
    %413 = vector.broadcast %335 : vector<1x48xf32> to vector<8x48xf32>
    %414 = arith.addf %412, %413 : vector<8x48xf32>
    %cst_74 = arith.constant dense<0.000000e+00> : vector<8x48xf32>
    %415 = tpu.matmul %408, %336, %cst_74 {dimension_numbers = #tpu.dot_dimension_numbers<[1], [0], [0], [1], [0, 0, 1, 1], [], []>} : vector<8x16xf32>, vector<16x48xf32>, vector<8x48xf32> -> vector<8x48xf32>
    %416 = arith.addf %415, %339 : vector<8x48xf32>
    %417 = vector.extract_strided_slice %414 {offsets = [0, 0], sizes = [8, 16], strides = [1, 1]} : vector<8x48xf32> to vector<8x16xf32>
    %418 = vector.extract_strided_slice %416 {offsets = [0, 0], sizes = [8, 16], strides = [1, 1]} : vector<8x48xf32> to vector<8x16xf32>
    %419 = arith.addf %417, %418 : vector<8x16xf32>
    %420 = arith.negf %419 : vector<8x16xf32>
    %421 = math.exp %420 : vector<8x16xf32>
    %cst_75 = arith.constant 1.000000e+00 : f32
    %422 = vector.broadcast %cst_75 : f32 to vector<8x16xf32>
    %423 = arith.addf %422, %421 : vector<8x16xf32>
    %424 = arith.divf %422, %423 : vector<8x16xf32>
    %425 = vector.extract_strided_slice %414 {offsets = [0, 16], sizes = [8, 16], strides = [1, 1]} : vector<8x48xf32> to vector<8x16xf32>
    %426 = vector.extract_strided_slice %416 {offsets = [0, 16], sizes = [8, 16], strides = [1, 1]} : vector<8x48xf32> to vector<8x16xf32>
    %427 = arith.addf %425, %426 : vector<8x16xf32>
    %428 = arith.negf %427 : vector<8x16xf32>
    %429 = math.exp %428 : vector<8x16xf32>
    %cst_76 = arith.constant 1.000000e+00 : f32
    %430 = vector.broadcast %cst_76 : f32 to vector<8x16xf32>
    %431 = arith.addf %430, %429 : vector<8x16xf32>
    %432 = arith.divf %430, %431 : vector<8x16xf32>
    %433 = vector.extract_strided_slice %414 {offsets = [0, 32], sizes = [8, 16], strides = [1, 1]} : vector<8x48xf32> to vector<8x16xf32>
    %434 = vector.extract_strided_slice %416 {offsets = [0, 32], sizes = [8, 16], strides = [1, 1]} : vector<8x48xf32> to vector<8x16xf32>
    %435 = arith.mulf %424, %434 : vector<8x16xf32>
    %436 = arith.addf %433, %435 : vector<8x16xf32>
    %437 = math.tanh %436 : vector<8x16xf32>
    %cst_77 = arith.constant 1.000000e+00 : f32
    %438 = vector.broadcast %cst_77 : f32 to vector<8x16xf32>
    %439 = arith.subf %438, %432 : vector<8x16xf32>
    %440 = arith.mulf %439, %437 : vector<8x16xf32>
    %441 = arith.mulf %432, %408 : vector<8x16xf32>
    %442 = arith.addf %440, %441 : vector<8x16xf32>
    %443 = arith.maximumf %409, %442 : vector<8x16xf32>
    %444 = vector.extract_strided_slice %332 {offsets = [24, 0], sizes = [8, 48], strides = [1, 1]} : vector<48x48xf32> to vector<8x48xf32>
    %445 = vector.extract_strided_slice %334 {offsets = [16, 0], sizes = [8, 48], strides = [1, 1]} : vector<48x48xf32> to vector<8x48xf32>
    %446 = arith.addf %444, %445 : vector<8x48xf32>
    %447 = vector.broadcast %335 : vector<1x48xf32> to vector<8x48xf32>
    %448 = arith.addf %446, %447 : vector<8x48xf32>
    %cst_78 = arith.constant dense<0.000000e+00> : vector<8x48xf32>
    %449 = tpu.matmul %442, %336, %cst_78 {dimension_numbers = #tpu.dot_dimension_numbers<[1], [0], [0], [1], [0, 0, 1, 1], [], []>} : vector<8x16xf32>, vector<16x48xf32>, vector<8x48xf32> -> vector<8x48xf32>
    %450 = arith.addf %449, %339 : vector<8x48xf32>
    %451 = vector.extract_strided_slice %448 {offsets = [0, 0], sizes = [8, 16], strides = [1, 1]} : vector<8x48xf32> to vector<8x16xf32>
    %452 = vector.extract_strided_slice %450 {offsets = [0, 0], sizes = [8, 16], strides = [1, 1]} : vector<8x48xf32> to vector<8x16xf32>
    %453 = arith.addf %451, %452 : vector<8x16xf32>
    %454 = arith.negf %453 : vector<8x16xf32>
    %455 = math.exp %454 : vector<8x16xf32>
    %cst_79 = arith.constant 1.000000e+00 : f32
    %456 = vector.broadcast %cst_79 : f32 to vector<8x16xf32>
    %457 = arith.addf %456, %455 : vector<8x16xf32>
    %458 = arith.divf %456, %457 : vector<8x16xf32>
    %459 = vector.extract_strided_slice %448 {offsets = [0, 16], sizes = [8, 16], strides = [1, 1]} : vector<8x48xf32> to vector<8x16xf32>
    %460 = vector.extract_strided_slice %450 {offsets = [0, 16], sizes = [8, 16], strides = [1, 1]} : vector<8x48xf32> to vector<8x16xf32>
    %461 = arith.addf %459, %460 : vector<8x16xf32>
    %462 = arith.negf %461 : vector<8x16xf32>
    %463 = math.exp %462 : vector<8x16xf32>
    %cst_80 = arith.constant 1.000000e+00 : f32
    %464 = vector.broadcast %cst_80 : f32 to vector<8x16xf32>
    %465 = arith.addf %464, %463 : vector<8x16xf32>
    %466 = arith.divf %464, %465 : vector<8x16xf32>
    %467 = vector.extract_strided_slice %448 {offsets = [0, 32], sizes = [8, 16], strides = [1, 1]} : vector<8x48xf32> to vector<8x16xf32>
    %468 = vector.extract_strided_slice %450 {offsets = [0, 32], sizes = [8, 16], strides = [1, 1]} : vector<8x48xf32> to vector<8x16xf32>
    %469 = arith.mulf %458, %468 : vector<8x16xf32>
    %470 = arith.addf %467, %469 : vector<8x16xf32>
    %471 = math.tanh %470 : vector<8x16xf32>
    %cst_81 = arith.constant 1.000000e+00 : f32
    %472 = vector.broadcast %cst_81 : f32 to vector<8x16xf32>
    %473 = arith.subf %472, %466 : vector<8x16xf32>
    %474 = arith.mulf %473, %471 : vector<8x16xf32>
    %475 = arith.mulf %466, %442 : vector<8x16xf32>
    %476 = arith.addf %474, %475 : vector<8x16xf32>
    %477 = arith.maximumf %443, %476 : vector<8x16xf32>
    %478 = vector.extract_strided_slice %332 {offsets = [32, 0], sizes = [8, 48], strides = [1, 1]} : vector<48x48xf32> to vector<8x48xf32>
    %479 = vector.extract_strided_slice %334 {offsets = [8, 0], sizes = [8, 48], strides = [1, 1]} : vector<48x48xf32> to vector<8x48xf32>
    %480 = arith.addf %478, %479 : vector<8x48xf32>
    %481 = vector.broadcast %335 : vector<1x48xf32> to vector<8x48xf32>
    %482 = arith.addf %480, %481 : vector<8x48xf32>
    %cst_82 = arith.constant dense<0.000000e+00> : vector<8x48xf32>
    %483 = tpu.matmul %476, %336, %cst_82 {dimension_numbers = #tpu.dot_dimension_numbers<[1], [0], [0], [1], [0, 0, 1, 1], [], []>} : vector<8x16xf32>, vector<16x48xf32>, vector<8x48xf32> -> vector<8x48xf32>
    %484 = arith.addf %483, %339 : vector<8x48xf32>
    %485 = vector.extract_strided_slice %482 {offsets = [0, 0], sizes = [8, 16], strides = [1, 1]} : vector<8x48xf32> to vector<8x16xf32>
    %486 = vector.extract_strided_slice %484 {offsets = [0, 0], sizes = [8, 16], strides = [1, 1]} : vector<8x48xf32> to vector<8x16xf32>
    %487 = arith.addf %485, %486 : vector<8x16xf32>
    %488 = arith.negf %487 : vector<8x16xf32>
    %489 = math.exp %488 : vector<8x16xf32>
    %cst_83 = arith.constant 1.000000e+00 : f32
    %490 = vector.broadcast %cst_83 : f32 to vector<8x16xf32>
    %491 = arith.addf %490, %489 : vector<8x16xf32>
    %492 = arith.divf %490, %491 : vector<8x16xf32>
    %493 = vector.extract_strided_slice %482 {offsets = [0, 16], sizes = [8, 16], strides = [1, 1]} : vector<8x48xf32> to vector<8x16xf32>
    %494 = vector.extract_strided_slice %484 {offsets = [0, 16], sizes = [8, 16], strides = [1, 1]} : vector<8x48xf32> to vector<8x16xf32>
    %495 = arith.addf %493, %494 : vector<8x16xf32>
    %496 = arith.negf %495 : vector<8x16xf32>
    %497 = math.exp %496 : vector<8x16xf32>
    %cst_84 = arith.constant 1.000000e+00 : f32
    %498 = vector.broadcast %cst_84 : f32 to vector<8x16xf32>
    %499 = arith.addf %498, %497 : vector<8x16xf32>
    %500 = arith.divf %498, %499 : vector<8x16xf32>
    %501 = vector.extract_strided_slice %482 {offsets = [0, 32], sizes = [8, 16], strides = [1, 1]} : vector<8x48xf32> to vector<8x16xf32>
    %502 = vector.extract_strided_slice %484 {offsets = [0, 32], sizes = [8, 16], strides = [1, 1]} : vector<8x48xf32> to vector<8x16xf32>
    %503 = arith.mulf %492, %502 : vector<8x16xf32>
    %504 = arith.addf %501, %503 : vector<8x16xf32>
    %505 = math.tanh %504 : vector<8x16xf32>
    %cst_85 = arith.constant 1.000000e+00 : f32
    %506 = vector.broadcast %cst_85 : f32 to vector<8x16xf32>
    %507 = arith.subf %506, %500 : vector<8x16xf32>
    %508 = arith.mulf %507, %505 : vector<8x16xf32>
    %509 = arith.mulf %500, %476 : vector<8x16xf32>
    %510 = arith.addf %508, %509 : vector<8x16xf32>
    %511 = arith.maximumf %477, %510 : vector<8x16xf32>
    %512 = vector.extract_strided_slice %332 {offsets = [40, 0], sizes = [8, 48], strides = [1, 1]} : vector<48x48xf32> to vector<8x48xf32>
    %513 = vector.extract_strided_slice %334 {offsets = [0, 0], sizes = [8, 48], strides = [1, 1]} : vector<48x48xf32> to vector<8x48xf32>
    %514 = arith.addf %512, %513 : vector<8x48xf32>
    %515 = vector.broadcast %335 : vector<1x48xf32> to vector<8x48xf32>
    %516 = arith.addf %514, %515 : vector<8x48xf32>
    %cst_86 = arith.constant dense<0.000000e+00> : vector<8x48xf32>
    %517 = tpu.matmul %510, %336, %cst_86 {dimension_numbers = #tpu.dot_dimension_numbers<[1], [0], [0], [1], [0, 0, 1, 1], [], []>} : vector<8x16xf32>, vector<16x48xf32>, vector<8x48xf32> -> vector<8x48xf32>
    %518 = arith.addf %517, %339 : vector<8x48xf32>
    %519 = vector.extract_strided_slice %516 {offsets = [0, 0], sizes = [8, 16], strides = [1, 1]} : vector<8x48xf32> to vector<8x16xf32>
    %520 = vector.extract_strided_slice %518 {offsets = [0, 0], sizes = [8, 16], strides = [1, 1]} : vector<8x48xf32> to vector<8x16xf32>
    %521 = arith.addf %519, %520 : vector<8x16xf32>
    %522 = arith.negf %521 : vector<8x16xf32>
    %523 = math.exp %522 : vector<8x16xf32>
    %cst_87 = arith.constant 1.000000e+00 : f32
    %524 = vector.broadcast %cst_87 : f32 to vector<8x16xf32>
    %525 = arith.addf %524, %523 : vector<8x16xf32>
    %526 = arith.divf %524, %525 : vector<8x16xf32>
    %527 = vector.extract_strided_slice %516 {offsets = [0, 16], sizes = [8, 16], strides = [1, 1]} : vector<8x48xf32> to vector<8x16xf32>
    %528 = vector.extract_strided_slice %518 {offsets = [0, 16], sizes = [8, 16], strides = [1, 1]} : vector<8x48xf32> to vector<8x16xf32>
    %529 = arith.addf %527, %528 : vector<8x16xf32>
    %530 = arith.negf %529 : vector<8x16xf32>
    %531 = math.exp %530 : vector<8x16xf32>
    %cst_88 = arith.constant 1.000000e+00 : f32
    %532 = vector.broadcast %cst_88 : f32 to vector<8x16xf32>
    %533 = arith.addf %532, %531 : vector<8x16xf32>
    %534 = arith.divf %532, %533 : vector<8x16xf32>
    %535 = vector.extract_strided_slice %516 {offsets = [0, 32], sizes = [8, 16], strides = [1, 1]} : vector<8x48xf32> to vector<8x16xf32>
    %536 = vector.extract_strided_slice %518 {offsets = [0, 32], sizes = [8, 16], strides = [1, 1]} : vector<8x48xf32> to vector<8x16xf32>
    %537 = arith.mulf %526, %536 : vector<8x16xf32>
    %538 = arith.addf %535, %537 : vector<8x16xf32>
    %539 = math.tanh %538 : vector<8x16xf32>
    %cst_89 = arith.constant 1.000000e+00 : f32
    %540 = vector.broadcast %cst_89 : f32 to vector<8x16xf32>
    %541 = arith.subf %540, %534 : vector<8x16xf32>
    %542 = arith.mulf %541, %539 : vector<8x16xf32>
    %543 = arith.mulf %534, %510 : vector<8x16xf32>
    %544 = arith.addf %542, %543 : vector<8x16xf32>
    %545 = arith.maximumf %511, %544 : vector<8x16xf32>
    %c0_90 = arith.constant 0 : index
    %c0_91 = arith.constant 0 : index
    %c0_92 = arith.constant 0 : index
    %546 = vector.load %arg0[%c0_90, %c0_91, %c0_92] : memref<8x8x16xf32, #tpu.memory_space<vmem>>, vector<8x8x16xf32>
    %cst_93 = arith.constant dense<0xFF800000> : vector<8x16xf32>
    %547 = vector.multi_reduction <maximumf>, %546, %cst_93 [0] : vector<8x8x16xf32> to vector<8x16xf32>
    %c0_94 = arith.constant 0 : index
    %c0_95 = arith.constant 0 : index
    %c0_96 = arith.constant 0 : index
    %548 = vector.load %arg3[%c0_94, %c0_95, %c0_96] : memref<10x8x16xf32, #tpu.memory_space<vmem>>, vector<1x8x16xf32>
    %549 = vector.shape_cast %548 : vector<1x8x16xf32> to vector<8x16xf32>
    %c1 = arith.constant 1 : index
    %c0_97 = arith.constant 0 : index
    %c0_98 = arith.constant 0 : index
    %550 = vector.load %arg3[%c1, %c0_97, %c0_98] : memref<10x8x16xf32, #tpu.memory_space<vmem>>, vector<1x8x16xf32>
    %551 = vector.shape_cast %550 : vector<1x8x16xf32> to vector<8x16xf32>
    %c2 = arith.constant 2 : index
    %c0_99 = arith.constant 0 : index
    %c0_100 = arith.constant 0 : index
    %552 = vector.load %arg3[%c2, %c0_99, %c0_100] : memref<10x8x16xf32, #tpu.memory_space<vmem>>, vector<1x8x16xf32>
    %553 = vector.shape_cast %552 : vector<1x8x16xf32> to vector<8x16xf32>
    %c3 = arith.constant 3 : index
    %c0_101 = arith.constant 0 : index
    %c0_102 = arith.constant 0 : index
    %554 = vector.load %arg3[%c3, %c0_101, %c0_102] : memref<10x8x16xf32, #tpu.memory_space<vmem>>, vector<1x8x16xf32>
    %555 = vector.shape_cast %554 : vector<1x8x16xf32> to vector<8x16xf32>
    %c4 = arith.constant 4 : index
    %c0_103 = arith.constant 0 : index
    %c0_104 = arith.constant 0 : index
    %556 = vector.load %arg3[%c4, %c0_103, %c0_104] : memref<10x8x16xf32, #tpu.memory_space<vmem>>, vector<1x8x16xf32>
    %557 = vector.shape_cast %556 : vector<1x8x16xf32> to vector<8x16xf32>
    %c5 = arith.constant 5 : index
    %c0_105 = arith.constant 0 : index
    %c0_106 = arith.constant 0 : index
    %558 = vector.load %arg3[%c5, %c0_105, %c0_106] : memref<10x8x16xf32, #tpu.memory_space<vmem>>, vector<1x8x16xf32>
    %559 = vector.shape_cast %558 : vector<1x8x16xf32> to vector<8x16xf32>
    %c6 = arith.constant 6 : index
    %c0_107 = arith.constant 0 : index
    %c0_108 = arith.constant 0 : index
    %560 = vector.load %arg3[%c6, %c0_107, %c0_108] : memref<10x8x16xf32, #tpu.memory_space<vmem>>, vector<1x8x16xf32>
    %561 = vector.shape_cast %560 : vector<1x8x16xf32> to vector<8x16xf32>
    %c7 = arith.constant 7 : index
    %c0_109 = arith.constant 0 : index
    %c0_110 = arith.constant 0 : index
    %562 = vector.load %arg3[%c7, %c0_109, %c0_110] : memref<10x8x16xf32, #tpu.memory_space<vmem>>, vector<1x8x16xf32>
    %563 = vector.shape_cast %562 : vector<1x8x16xf32> to vector<8x16xf32>
    %c8 = arith.constant 8 : index
    %c0_111 = arith.constant 0 : index
    %c0_112 = arith.constant 0 : index
    %564 = vector.load %arg3[%c8, %c0_111, %c0_112] : memref<10x8x16xf32, #tpu.memory_space<vmem>>, vector<1x8x16xf32>
    %565 = vector.shape_cast %564 : vector<1x8x16xf32> to vector<8x16xf32>
    %c9 = arith.constant 9 : index
    %c0_113 = arith.constant 0 : index
    %c0_114 = arith.constant 0 : index
    %566 = vector.load %arg3[%c9, %c0_113, %c0_114] : memref<10x8x16xf32, #tpu.memory_space<vmem>>, vector<1x8x16xf32>
    %567 = vector.shape_cast %566 : vector<1x8x16xf32> to vector<8x16xf32>
    %568 = arith.mulf %549, %547 : vector<8x16xf32>
    %569 = arith.mulf %549, %555 : vector<8x16xf32>
    %570 = arith.mulf %549, %561 : vector<8x16xf32>
    %571 = arith.mulf %557, %565 : vector<8x16xf32>
    %572 = tpu.concatenate %549, %547, %551, %553, %555, %557, %559 in 1 : vector<8x16xf32>, vector<8x16xf32>, vector<8x16xf32>, vector<8x16xf32>, vector<8x16xf32>, vector<8x16xf32>, vector<8x16xf32> -> vector<8x112xf32>
    %cst_115 = arith.constant dense<0.000000e+00> : vector<8xf32>
    %573 = vector.multi_reduction <add>, %572, %cst_115 [1] : vector<8x112xf32> to vector<8xf32>
    %574 = vector.shape_cast %573 : vector<8xf32> to vector<8x1xf32>
    %575 = arith.mulf %574, %574 : vector<8x1xf32>
    %576 = arith.mulf %572, %572 : vector<8x112xf32>
    %cst_116 = arith.constant dense<0.000000e+00> : vector<8xf32>
    %577 = vector.multi_reduction <add>, %576, %cst_116 [1] : vector<8x112xf32> to vector<8xf32>
    %578 = vector.shape_cast %577 : vector<8xf32> to vector<8x1xf32>
    %579 = arith.subf %575, %578 : vector<8x1xf32>
    %cst_117 = arith.constant 5.000000e-01 : f32
    %580 = vector.broadcast %cst_117 : f32 to vector<8x1xf32>
    %581 = arith.mulf %580, %579 : vector<8x1xf32>
    %582 = tpu.concatenate %549, %547, %551, %553, %555, %557, %568, %569, %559, %545, %561, %563, %565, %570, %571, %328 in 1 : vector<8x16xf32>, vector<8x16xf32>, vector<8x16xf32>, vector<8x16xf32>, vector<8x16xf32>, vector<8x16xf32>, vector<8x16xf32>, vector<8x16xf32>, vector<8x16xf32>, vector<8x16xf32>, vector<8x16xf32>, vector<8x16xf32>, vector<8x16xf32>, vector<8x16xf32>, vector<8x16xf32>, vector<8x16xf32> -> vector<8x256xf32>
    %583 = tpu.concatenate %582, %567 in 1 : vector<8x256xf32>, vector<8x16xf32> -> vector<8x272xf32>
    %c0_118 = arith.constant 0 : index
    %c0_119 = arith.constant 0 : index
    %584 = vector.load %arg6[%c0_118, %c0_119] : memref<408x64xf32, #tpu.memory_space<vmem>>, vector<272x64xf32>
    %cst_120 = arith.constant dense<0.000000e+00> : vector<8x64xf32>
    %585 = tpu.matmul %583, %584, %cst_120 {dimension_numbers = #tpu.dot_dimension_numbers<[1], [0], [0], [1], [0, 0, 1, 1], [], []>} : vector<8x272xf32>, vector<272x64xf32>, vector<8x64xf32> -> vector<8x64xf32>
    %c272 = arith.constant 272 : index
    %c0_121 = arith.constant 0 : index
    %586 = vector.load %arg6[%c272, %c0_121] : memref<408x64xf32, #tpu.memory_space<vmem>>, vector<1x64xf32>
    %587 = vector.broadcast %586 : vector<1x64xf32> to vector<8x64xf32>
    %588 = arith.addf %585, %587 : vector<8x64xf32>
    %cst_122 = arith.constant 0.000000e+00 : f32
    %589 = vector.broadcast %cst_122 : f32 to vector<8x64xf32>
    %590 = arith.maximumf %588, %589 : vector<8x64xf32>
    %c0_123 = arith.constant 0 : index
    %c0_124 = arith.constant 0 : index
    %591 = vector.load %arg4[%c0_123, %c0_124] : memref<8x9xf32, #tpu.memory_space<vmem>>, vector<8x9xf32>
    %592 = vector.extract_strided_slice %591 {offsets = [0, 0], sizes = [8, 4], strides = [1, 1]} : vector<8x9xf32> to vector<8x4xf32>
    %593 = vector.extract_strided_slice %591 {offsets = [0, 4], sizes = [8, 5], strides = [1, 1]} : vector<8x9xf32> to vector<8x5xf32>
    %594 = arith.mulf %592, %592 : vector<8x4xf32>
    %595 = tpu.concatenate %592, %590, %575, %578, %581, %594, %593 in 1 : vector<8x4xf32>, vector<8x64xf32>, vector<8x1xf32>, vector<8x1xf32>, vector<8x1xf32>, vector<8x4xf32>, vector<8x5xf32> -> vector<8x80xf32>
    %c280 = arith.constant 280 : index
    %c0_125 = arith.constant 0 : index
    %596 = vector.load %arg6[%c280, %c0_125] : memref<408x64xf32, #tpu.memory_space<vmem>>, vector<80x32xf32>
    %cst_126 = arith.constant dense<0.000000e+00> : vector<8x32xf32>
    %597 = tpu.matmul %595, %596, %cst_126 {dimension_numbers = #tpu.dot_dimension_numbers<[1], [0], [0], [1], [0, 0, 1, 1], [], []>} : vector<8x80xf32>, vector<80x32xf32>, vector<8x32xf32> -> vector<8x32xf32>
    %c360 = arith.constant 360 : index
    %c0_127 = arith.constant 0 : index
    %598 = vector.load %arg6[%c360, %c0_127] : memref<408x64xf32, #tpu.memory_space<vmem>>, vector<1x32xf32>
    %599 = vector.broadcast %598 : vector<1x32xf32> to vector<8x32xf32>
    %600 = arith.addf %597, %599 : vector<8x32xf32>
    %cst_128 = arith.constant 0.000000e+00 : f32
    %601 = vector.broadcast %cst_128 : f32 to vector<8x32xf32>
    %602 = arith.maximumf %600, %601 : vector<8x32xf32>
    %c368 = arith.constant 368 : index
    %c0_129 = arith.constant 0 : index
    %603 = vector.load %arg6[%c368, %c0_129] : memref<408x64xf32, #tpu.memory_space<vmem>>, vector<32x1xf32>
    %cst_130 = arith.constant dense<0.000000e+00> : vector<8x1xf32>
    %604 = tpu.matmul %602, %603, %cst_130 {dimension_numbers = #tpu.dot_dimension_numbers<[1], [0], [0], [1], [0, 0, 1, 1], [], []>} : vector<8x32xf32>, vector<32x1xf32>, vector<8x1xf32> -> vector<8x1xf32>
    %c400 = arith.constant 400 : index
    %c0_131 = arith.constant 0 : index
    %605 = vector.load %arg6[%c400, %c0_131] : memref<408x64xf32, #tpu.memory_space<vmem>>, vector<1x1xf32>
    %606 = vector.broadcast %605 : vector<1x1xf32> to vector<8x1xf32>
    %607 = arith.addf %604, %606 : vector<8x1xf32>
    %608 = arith.negf %607 : vector<8x1xf32>
    %609 = math.exp %608 : vector<8x1xf32>
    %cst_132 = arith.constant 1.000000e+00 : f32
    %610 = vector.broadcast %cst_132 : f32 to vector<8x1xf32>
    %611 = arith.addf %610, %609 : vector<8x1xf32>
    %612 = arith.divf %610, %611 : vector<8x1xf32>
    %c0_133 = arith.constant 0 : index
    %c0_134 = arith.constant 0 : index
    %613 = vector.load %arg7[%c0_133, %c0_134] : memref<8x1xf32, #tpu.memory_space<vmem>>, vector<8x1xf32>
    tpu.vector_store %arg7[%c0_133, %c0_134], %612 {strides = array<i32>} : memref<8x1xf32, #tpu.memory_space<vmem>>, vector<8x1xf32>,
    return
  }
}

</mosaic_0001>

<llo_original>
// kernel: net_forward.1
$region0: #{net_forward.1}
  #allocation0 [shape = 'u32[]', space=smem, size = 0x4, offset = 0x4, fixed_abs, tag = 'smem constant byte address 0x4 - core index']
  #allocation1 [shape = 'u32[144,128]{1,0:T(1,128)}', space=vmem, size = 0x12000, scoped, tag = 'internal scratch']
  %s0 = inlined_call_operand.vmem [shape: f32[8,8,16], index: 0, kind: input, shape index: {}]
  %s1 = inlined_call_operand.vmem [shape: f32[48,64], index: 1, kind: input, shape index: {}]
  %s2 = inlined_call_operand.vmem [shape: f32[80,32], index: 2, kind: input, shape index: {}]
  %s3 = inlined_call_operand.vmem [shape: f32[10,8,16], index: 3, kind: input, shape index: {}]
  %s4 = inlined_call_operand.vmem [shape: f32[8,9], index: 4, kind: input, shape index: {}]
  %s5 = inlined_call_operand.vmem [shape: f32[272,96], index: 5, kind: input, shape index: {}]
  %s6 = inlined_call_operand.vmem [shape: f32[408,64], index: 6, kind: input, shape index: {}]
  %s7 = inlined_call_operand.vmem [shape: f32[8,1], index: 7, kind: output, shape index: {}]
  %s8 = sld [smem:[#allocation0]]
  $region38: #{net_forward.1} parent=0
    _
  %s10 = ssub.s32 1, %s8
  %s11 = scalar_select 0, %s10, %s8
  // Predicated region
  $region2: #{net_forward.1} parent=0 // pred_check
    _
  $region3: #{net_forward.1} parent=0 // pred_check_branch
    %13 = sbr.rel (0) target = $region5
  $region4: #{net_forward.1} parent=0 // pred_region
    _
  $region5: #{net_forward.1} parent=0 // pred_fallthru
    _
  // Predicated region
  $region6: #{net_forward.1} parent=0 // pred_check
    _
  $region7: #{net_forward.1} parent=0 // pred_check_branch
    %15 = sbr.rel (0) target = $region9
  $region8: #{net_forward.1} parent=0 // pred_region
    _
  $region9: #{net_forward.1} parent=0 // pred_fallthru
    _
  // Predicated region
  $region10: #{net_forward.1} parent=0 // pred_check
    _
  $region11: #{net_forward.1} parent=0 // pred_check_branch
    %17 = sbr.rel (0) target = $region13
  $region12: #{net_forward.1} parent=0 // pred_region
    _
  $region13: #{net_forward.1} parent=0 // pred_fallthru
    _
  // Predicated region
  $region14: #{net_forward.1} parent=0 // pred_check
    _
  $region15: #{net_forward.1} parent=0 // pred_check_branch
    %19 = sbr.rel (0) target = $region17
  $region16: #{net_forward.1} parent=0 // pred_region
    _
  $region17: #{net_forward.1} parent=0 // pred_fallthru
    _
  // Predicated region
  $region18: #{net_forward.1} parent=0 // pred_check
    _
  $region19: #{net_forward.1} parent=0 // pred_check_branch
    %21 = sbr.rel (0) target = $region21
  $region20: #{net_forward.1} parent=0 // pred_region
    _
  $region21: #{net_forward.1} parent=0 // pred_fallthru
    _
  // Predicated region
  $region22: #{net_forward.1} parent=0 // pred_check
    _
  $region23: #{net_forward.1} parent=0 // pred_check_branch
    %23 = sbr.rel (0) target = $region25
  $region24: #{net_forward.1} parent=0 // pred_region
    _
  $region25: #{net_forward.1} parent=0 // pred_fallthru
    _
  // Predicated region
  $region26: #{net_forward.1} parent=0 // pred_check
    _
  $region27: #{net_forward.1} parent=0 // pred_check_branch
    %25 = sbr.rel (0) target = $region29
  $region28: #{net_forward.1} parent=0 // pred_region
    _
  $region29: #{net_forward.1} parent=0 // pred_fallthru
    _
  %v26 = vld [vmem:[%s2] sm:$0xff]
  %v27 = vld [vmem:[%s2 + $0x8] sm:$0xff]
  %v28 = vld [vmem:[%s2 + $0x10] sm:$0xff]
  %v29 = vld [vmem:[%s2 + $0x18] sm:$0xff]
  %v30 = vld [vmem:[%s2 + $0x20] sm:$0xff]
  %v31 = vld [vmem:[%s2 + $0x28] sm:$0xff]
  %v32 = vld [vmem:[%s2 + $0x30] sm:$0xff]
  %v33 = vld [vmem:[%s2 + $0x38] sm:$0xff]
  %v34 = vld [vmem:[%s2 + $0x40] sm:$0xff]
  %v35 = vld [vmem:[%s2 + $0x48] sm:$0xff]
  %v36 = vld [vmem:[%s5] sm:$0xff]
  %v37 = vld [vmem:[%s5 + $0x8] sm:$0xff]
  %v38 = vld [vmem:[%s5 + $0x10] sm:$0xff]
  %v39 = vld [vmem:[%s5 + $0x18] sm:$0xff]
  %v40 = vld [vmem:[%s1] sm:$0xff]
  %v41 = vld [vmem:[%s1 + $0x8] sm:$0xff]
  %v42 = vld [vmem:[%s1 + $0x10] sm:$0xff]
  %v43 = vld [vmem:[%s1 + $0x18] sm:$0xff]
  %v44 = vld [vmem:[%s1 + $0x20] sm:$0xff]
  %v45 = vld [vmem:[%s1 + $0x28] sm:$0xff]
  %v46 = vld [vmem:[%s5 + $0x20] sm:$0xff]
  %v47 = vld [vmem:[%s5 + $0x28] sm:$0xff]
  %v48 = vld [vmem:[%s5 + $0x30] sm:$0xff]
  %v49 = vld [vmem:[%s5 + $0x38] sm:$0xff]
  %v50 = vld [vmem:[%s5 + $0x40] sm:$0xff]
  %v51 = vld [vmem:[%s5 + $0x48] sm:$0xff]
  %v52 = vld [vmem:[%s5 + $0x50] sm:$0xff]
  %v53 = vld [vmem:[%s5 + $0x58] sm:$0xff]
  %vm54 = vcmask 523264
  %v56 = vsel %vm54, %v40, 0
  %v59 = vsel %vm54, %v41, 0
  %v62 = vsel %vm54, %v42, 0
  %v65 = vsel %vm54, %v43, 0
  %v68 = vsel %vm54, %v44, 0
  %v71 = vsel %vm54, %v45, 0
  %73 = vmatprep.subr.mxu0 0.0
  %74 = vmatpush1.msra.mxu0 0.0
  %75 = vmatprep.subr.mxu0 0.0
  %76 = vmatpush1.msra.mxu0 0.0
  %77 = vmatprep.subr.mxu0 0.0
  %78 = vmatpush1.msra.mxu0 0.0
  %79 = vmatprep.subr.mxu0 0.0
  %80 = vmatpush1.msra.mxu0 0.0
  %81 = vmatprep.subr.mxu0 0.0
  %82 = vmatpush1.msra.mxu0 0.0
  %83 = vmatprep.subr.mxu0 0.0
  %84 = vmatpush1.msra.mxu0 0.0
  %85 = vmatprep.subr.mxu0 0.0
  %86 = vmatpush1.msra.mxu0 0.0
  %87 = vmatprep.subr.mxu0 0.0
  %88 = vmatpush1.msra.mxu0 0.0
  %89 = vmatprep.subr.mxu0 0.0
  %90 = vmatpush1.msra.mxu0 %v53
  %91 = vmatprep.subr.mxu0 0.0
  %92 = vmatpush1.msra.mxu0 %v52
  %93 = vmatprep.subr.mxu0 0.0
  %94 = vmatpush1.msra.mxu0 %v51
  %95 = vmatprep.subr.mxu0 0.0
  %96 = vmatpush1.msra.mxu0 %v50
  %97 = vmatprep.subr.mxu0 0.0
  %98 = vmatpush1.msra.mxu0 %v49
  %99 = vmatprep.subr.mxu0 0.0
  %100 = vmatpush1.msra.mxu0 %v48
  %101 = vmatprep.subr.mxu0 0.0
  %102 = vmatpush1.msra.mxu0 %v47
  %103 = vmatprep.subr.mxu0 0.0
  %104 = vmatpush1.msra.mxu0 %v46
  %105 = vmatprep.subr.mxu0 0.0
  %106 = vmatpush2.msra.mxu0 0.0
  %107 = vmatprep.subr.mxu0 0.0
  %108 = vmatpush2.msra.mxu0 0.0
  %109 = vmatprep.subr.mxu0 0.0
  %110 = vmatpush2.msra.mxu0 0.0
  %111 = vmatprep.subr.mxu0 0.0
  %112 = vmatpush2.msra.mxu0 0.0
  %113 = vmatprep.subr.mxu0 0.0
  %114 = vmatpush2.msra.mxu0 0.0
  %115 = vmatprep.subr.mxu0 0.0
  %116 = vmatpush2.msra.mxu0 0.0
  %117 = vmatprep.subr.mxu0 0.0
  %118 = vmatpush2.msra.mxu0 0.0
  %119 = vmatprep.subr.mxu0 0.0
  %120 = vmatpush2.msra.mxu0 0.0
  %121 = vmatprep.subr.mxu0 0.0
  %122 = vmatpush2.msra.mxu0 0.0
  %123 = vmatprep.subr.mxu0 0.0
  %124 = vmatpush2.msra.mxu0 0.0
  %125 = vmatprep.subr.mxu0 0.0
  %126 = vmatpush2.msra.mxu0 0.0
  %127 = vmatprep.subr.mxu0 0.0
  %128 = vmatpush2.msra.mxu0 0.0
  %129 = vmatprep.subr.mxu0 0.0
  %130 = vmatpush2.msra.mxu0 0.0
  %131 = vmatprep.subr.mxu0 0.0
  %132 = vmatpush2.msra.mxu0 0.0
  %133 = vmatprep.subr.mxu0 0.0
  %134 = vmatpush2.msra.mxu0 0.0
  %135 = vmatprep.subr.mxu0 0.0
  %136 = vmatpush2.msra.mxu0 0.0
  %137 = vmatprep.mubr.f32.mxu0 0.0
  %138 = vmatmul.mubr.f32.gmra.mxu0 %v56
  %v139 = vpop.f32.mrf.mxu0
  %v140 = vadd.f32 0.0, %v139
  %v141 = vpop.f32.mrf.mxu0
  %142 = vmatprep.mubr.f32.mxu0 0.0
  %143 = vmatmul.mubr.f32.gmra.mxu0 %v59
  %v144 = vpop.f32.mrf.mxu0
  %v145 = vadd.f32 0.0, %v144
  %v146 = vpop.f32.mrf.mxu0
  %147 = vmatprep.mubr.f32.mxu0 0.0
  %148 = vmatmul.mubr.f32.gmra.mxu0 %v62
  %v149 = vpop.f32.mrf.mxu0
  %v150 = vadd.f32 0.0, %v149
  %v151 = vpop.f32.mrf.mxu0
  %152 = vmatprep.mubr.f32.mxu0 0.0
  %153 = vmatmul.mubr.f32.gmra.mxu0 %v65
  %v154 = vpop.f32.mrf.mxu0
  %v155 = vadd.f32 0.0, %v154
  %v156 = vpop.f32.mrf.mxu0
  %157 = vmatprep.mubr.f32.mxu0 0.0
  %158 = vmatmul.mubr.f32.gmra.mxu0 %v68
  %v159 = vpop.f32.mrf.mxu0
  %v160 = vadd.f32 0.0, %v159
  %v161 = vpop.f32.mrf.mxu0
  %162 = vmatprep.mubr.f32.mxu0 0.0
  %163 = vmatmul.mubr.f32.gmra.mxu0 %v71
  %v164 = vpop.f32.mrf.mxu0
  %v165 = vadd.f32 0.0, %v164
  %v166 = vpop.f32.mrf.mxu0
  %167 = vdwg.mxu0
  %vm168 = vcmask 261120
  %v170 = vsel %vm168, %v26, 0
  %v173 = vsel %vm168, %v27, 0
  %v176 = vsel %vm168, %v28, 0
  %v179 = vsel %vm168, %v29, 0
  %v182 = vsel %vm168, %v30, 0
  %v185 = vsel %vm168, %v31, 0
  %187 = vmatprep.subr.mxu0 0.0
  %188 = vmatpush1.msra.mxu0 0.0
  %189 = vmatprep.subr.mxu0 0.0
  %190 = vmatpush1.msra.mxu0 0.0
  %191 = vmatprep.subr.mxu0 0.0
  %192 = vmatpush1.msra.mxu0 0.0
  %193 = vmatprep.subr.mxu0 0.0
  %194 = vmatpush1.msra.mxu0 0.0
  %195 = vmatprep.subr.mxu0 0.0
  %196 = vmatpush1.msra.mxu0 0.0
  %197 = vmatprep.subr.mxu0 0.0
  %198 = vmatpush1.msra.mxu0 0.0
  %199 = vmatprep.subr.mxu0 0.0
  %200 = vmatpush1.msra.mxu0 0.0
  %201 = vmatprep.subr.mxu0 0.0
  %202 = vmatpush1.msra.mxu0 0.0
  %203 = vmatprep.subr.mxu0 0.0
  %204 = vmatpush1.msra.mxu0 0.0
  %205 = vmatprep.subr.mxu0 0.0
  %206 = vmatpush1.msra.mxu0 0.0
  %207 = vmatprep.subr.mxu0 0.0
  %208 = vmatpush1.msra.mxu0 0.0
  %209 = vmatprep.subr.mxu0 0.0
  %210 = vmatpush1.msra.mxu0 0.0
  %211 = vmatprep.subr.mxu0 0.0
  %212 = vmatpush1.msra.mxu0 %v39
  %213 = vmatprep.subr.mxu0 0.0
  %214 = vmatpush1.msra.mxu0 %v38
  %215 = vmatprep.subr.mxu0 0.0
  %216 = vmatpush1.msra.mxu0 %v37
  %217 = vmatprep.subr.mxu0 0.0
  %218 = vmatpush1.msra.mxu0 %v36
  %219 = vmatprep.subr.mxu0 0.0
  %220 = vmatpush2.msra.mxu0 0.0
  %221 = vmatprep.subr.mxu0 0.0
  %222 = vmatpush2.msra.mxu0 0.0
  %223 = vmatprep.subr.mxu0 0.0
  %224 = vmatpush2.msra.mxu0 0.0
  %225 = vmatprep.subr.mxu0 0.0
  %226 = vmatpush2.msra.mxu0 0.0
  %227 = vmatprep.subr.mxu0 0.0
  %228 = vmatpush2.msra.mxu0 0.0
  %229 = vmatprep.subr.mxu0 0.0
  %230 = vmatpush2.msra.mxu0 0.0
  %231 = vmatprep.subr.mxu0 0.0
  %232 = vmatpush2.msra.mxu0 0.0
  %233 = vmatprep.subr.mxu0 0.0
  %234 = vmatpush2.msra.mxu0 0.0
  %235 = vmatprep.subr.mxu0 0.0
  %236 = vmatpush2.msra.mxu0 0.0
  %237 = vmatprep.subr.mxu0 0.0
  %238 = vmatpush2.msra.mxu0 0.0
  %239 = vmatprep.subr.mxu0 0.0
  %240 = vmatpush2.msra.mxu0 0.0
  %241 = vmatprep.subr.mxu0 0.0
  %242 = vmatpush2.msra.mxu0 0.0
  %243 = vmatprep.subr.mxu0 0.0
  %244 = vmatpush2.msra.mxu0 0.0
  %245 = vmatprep.subr.mxu0 0.0
  %246 = vmatpush2.msra.mxu0 0.0
  %247 = vmatprep.subr.mxu0 0.0
  %248 = vmatpush2.msra.mxu0 0.0
  %249 = vmatprep.subr.mxu0 0.0
  %250 = vmatpush2.msra.mxu0 0.0
  %251 = vmatprep.mubr.f32.mxu0 0.0
  %252 = vmatmul.mubr.f32.gmra.mxu0 %v170
  %v253 = vpop.f32.mrf.mxu0
  %v254 = vadd.f32 %v140, %v253
  %v255 = vpop.f32.mrf.mxu0
  %256 = vmatprep.mubr.f32.mxu0 0.0
  %257 = vmatmul.mubr.f32.gmra.mxu0 %v173
  %v258 = vpop.f32.mrf.mxu0
  %v259 = vadd.f32 %v145, %v258
  %v260 = vpop.f32.mrf.mxu0
  %261 = vmatprep.mubr.f32.mxu0 0.0
  %262 = vmatmul.mubr.f32.gmra.mxu0 %v176
  %v263 = vpop.f32.mrf.mxu0
  %v264 = vadd.f32 %v150, %v263
  %v265 = vpop.f32.mrf.mxu0
  %266 = vmatprep.mubr.f32.mxu0 0.0
  %267 = vmatmul.mubr.f32.gmra.mxu0 %v179
  %v268 = vpop.f32.mrf.mxu0
  %v269 = vadd.f32 %v155, %v268
  %v270 = vpop.f32.mrf.mxu0
  %271 = vmatprep.mubr.f32.mxu0 0.0
  %272 = vmatmul.mubr.f32.gmra.mxu0 %v182
  %v273 = vpop.f32.mrf.mxu0
  %v274 = vadd.f32 %v160, %v273
  %v275 = vpop.f32.mrf.mxu0
  %276 = vmatprep.mubr.f32.mxu0 0.0
  %277 = vmatmul.mubr.f32.gmra.mxu0 %v185
  %v278 = vpop.f32.mrf.mxu0
  %v279 = vadd.f32 %v165, %v278
  %v280 = vpop.f32.mrf.mxu0
  %281 = vdwg.mxu0
  %v282 = vld [vmem:[%s5 + $0x60] sm:$0x1]
  %v283 = vlaneseq
  %v284 = vshrl.u32 %v283, 7
  %v285 = vsub.s32 0, %v284
  %v286 = vrot.slane %v282, %v285
  %v287 = vadd.f32 %v254, %v286
  %v288 = vadd.f32 %v259, %v286
  %v289 = vadd.f32 %v264, %v286
  %v290 = vadd.f32 %v269, %v286
  %v291 = vadd.f32 %v274, %v286
  %v292 = vadd.f32 %v279, %v286
  %v293 = vld [vmem:[%s5 + $0x68] sm:$0xff]
  %v294 = vld [vmem:[%s5 + $0x70] sm:$0xff]
  %v295 = vld [vmem:[%s5 + $0x78] sm:$0xff]
  %v296 = vld [vmem:[%s5 + $0x80] sm:$0xff]
  %v297 = vld [vmem:[%s5 + $0x88] sm:$0x1]
  %v298 = vlaneseq
  %v299 = vshrl.u32 %v298, 7
  %v300 = vsub.s32 0, %v299
  %v301 = vrot.slane %v297, %v300
  %v303 = vsel %vm168, 0.0, 0
  %305 = vmatprep.subr.mxu0 0.0
  %306 = vmatpush1.msra.mxu0 0.0
  %307 = vmatprep.subr.mxu0 0.0
  %308 = vmatpush1.msra.mxu0 0.0
  %309 = vmatprep.subr.mxu0 0.0
  %310 = vmatpush1.msra.mxu0 0.0
  %311 = vmatprep.subr.mxu0 0.0
  %312 = vmatpush1.msra.mxu0 0.0
  %313 = vmatprep.subr.mxu0 0.0
  %314 = vmatpush1.msra.mxu0 0.0
  %315 = vmatprep.subr.mxu0 0.0
  %316 = vmatpush1.msra.mxu0 0.0
  %317 = vmatprep.subr.mxu0 0.0
  %318 = vmatpush1.msra.mxu0 0.0
  %319 = vmatprep.subr.mxu0 0.0
  %320 = vmatpush1.msra.mxu0 0.0
  %321 = vmatprep.subr.mxu0 0.0
  %322 = vmatpush1.msra.mxu0 0.0
  %323 = vmatprep.subr.mxu0 0.0
  %324 = vmatpush1.msra.mxu0 0.0
  %325 = vmatprep.subr.mxu0 0.0
  %326 = vmatpush1.msra.mxu0 0.0
  %327 = vmatprep.subr.mxu0 0.0
  %328 = vmatpush1.msra.mxu0 0.0
  %329 = vmatprep.subr.mxu0 0.0
  %330 = vmatpush1.msra.mxu0 %v296
  %331 = vmatprep.subr.mxu0 0.0
  %332 = vmatpush1.msra.mxu0 %v295
  %333 = vmatprep.subr.mxu0 0.0
  %334 = vmatpush1.msra.mxu0 %v294
  %335 = vmatprep.subr.mxu0 0.0
  %336 = vmatpush1.msra.mxu0 %v293
  %337 = vmatprep.subr.mxu0 0.0
  %338 = vmatpush2.msra.mxu0 0.0
  %339 = vmatprep.subr.mxu0 0.0
  %340 = vmatpush2.msra.mxu0 0.0
  %341 = vmatprep.subr.mxu0 0.0
  %342 = vmatpush2.msra.mxu0 0.0
  %343 = vmatprep.subr.mxu0 0.0
  %344 = vmatpush2.msra.mxu0 0.0
  %345 = vmatprep.subr.mxu0 0.0
  %346 = vmatpush2.msra.mxu0 0.0
  %347 = vmatprep.subr.mxu0 0.0
  %348 = vmatpush2.msra.mxu0 0.0
  %349 = vmatprep.subr.mxu0 0.0
  %350 = vmatpush2.msra.mxu0 0.0
  %351 = vmatprep.subr.mxu0 0.0
  %352 = vmatpush2.msra.mxu0 0.0
  %353 = vmatprep.subr.mxu0 0.0
  %354 = vmatpush2.msra.mxu0 0.0
  %355 = vmatprep.subr.mxu0 0.0
  %356 = vmatpush2.msra.mxu0 0.0
  %357 = vmatprep.subr.mxu0 0.0
  %358 = vmatpush2.msra.mxu0 0.0
  %359 = vmatprep.subr.mxu0 0.0
  %360 = vmatpush2.msra.mxu0 0.0
  %361 = vmatprep.subr.mxu0 0.0
  %362 = vmatpush2.msra.mxu0 0.0
  %363 = vmatprep.subr.mxu0 0.0
  %364 = vmatpush2.msra.mxu0 0.0
  %365 = vmatprep.subr.mxu0 0.0
  %366 = vmatpush2.msra.mxu0 0.0
  %367 = vmatprep.subr.mxu0 0.0
  %368 = vmatpush2.msra.mxu0 0.0
  %369 = vmatprep.mubr.f32.mxu0 0.0
  %370 = vmatmul.mubr.f32.gmra.mxu0 %v303
  %v371 = vpop.f32.mrf.mxu0
  %v372 = vadd.f32 %v301, %v371
  %v373 = vpop.f32.mrf.mxu0
  %374 = vdwg.mxu0
  %v375 = vadd.f32 %v287, %v372
  %v376 = vxor.u32 %v375, 2147483648
  %v377 = vmul.f32 %v376, 1.442695
  %v378 = vpow.pop %v377
  %v379 = vadd.f32 %v378, 1.0
  %v380 = vrcp.pop %v379
  %v381 = vmul.f32 1.0, %v380
  %383 = vrot.lane.b32.xlu0 %v372, 64
  %v384 = vpop.permute.xlu0 %383
  %v386 = vmul.f32 %v381, %v384
  %388 = vrot.lane.b32.xlu0 %v386, 64
  %v389 = vpop.permute.xlu0 %388
  %v391 = vadd.f32 %v287, %v389
  %v392 = vtanh.pop %v391
  %v393 = vsub.f32 1.0, %v381
  %395 = vrot.lane.b32.xlu0 %v392, 96
  %v396 = vpop.permute.xlu0 %395
  %v398 = vmul.f32 %v393, %v396
  %v399 = vmul.f32 %v381, 0.0
  %v400 = vadd.f32 %v398, %v399
  %402 = vrot.lane.b32.xlu0 %v400, 96
  %v403 = vpop.permute.xlu0 %402
  %v404 = vsel %vm168, %v403, 0
  %406 = vmatprep.subr.mxu0 0.0
  %407 = vmatpush1.msra.mxu0 0.0
  %408 = vmatprep.subr.mxu0 0.0
  %409 = vmatpush1.msra.mxu0 0.0
  %410 = vmatprep.subr.mxu0 0.0
  %411 = vmatpush1.msra.mxu0 0.0
  %412 = vmatprep.subr.mxu0 0.0
  %413 = vmatpush1.msra.mxu0 0.0
  %414 = vmatprep.subr.mxu0 0.0
  %415 = vmatpush1.msra.mxu0 0.0
  %416 = vmatprep.subr.mxu0 0.0
  %417 = vmatpush1.msra.mxu0 0.0
  %418 = vmatprep.subr.mxu0 0.0
  %419 = vmatpush1.msra.mxu0 0.0
  %420 = vmatprep.subr.mxu0 0.0
  %421 = vmatpush1.msra.mxu0 0.0
  %422 = vmatprep.subr.mxu0 0.0
  %423 = vmatpush1.msra.mxu0 0.0
  %424 = vmatprep.subr.mxu0 0.0
  %425 = vmatpush1.msra.mxu0 0.0
  %426 = vmatprep.subr.mxu0 0.0
  %427 = vmatpush1.msra.mxu0 0.0
  %428 = vmatprep.subr.mxu0 0.0
  %429 = vmatpush1.msra.mxu0 0.0
  %430 = vmatprep.subr.mxu0 0.0
  %431 = vmatpush1.msra.mxu0 %v296
  %432 = vmatprep.subr.mxu0 0.0
  %433 = vmatpush1.msra.mxu0 %v295
  %434 = vmatprep.subr.mxu0 0.0
  %435 = vmatpush1.msra.mxu0 %v294
  %436 = vmatprep.subr.mxu0 0.0
  %437 = vmatpush1.msra.mxu0 %v293
  %438 = vmatprep.subr.mxu0 0.0
  %439 = vmatpush2.msra.mxu0 0.0
  %440 = vmatprep.subr.mxu0 0.0
  %441 = vmatpush2.msra.mxu0 0.0
  %442 = vmatprep.subr.mxu0 0.0
  %443 = vmatpush2.msra.mxu0 0.0
  %444 = vmatprep.subr.mxu0 0.0
  %445 = vmatpush2.msra.mxu0 0.0
  %446 = vmatprep.subr.mxu0 0.0
  %447 = vmatpush2.msra.mxu0 0.0
  %448 = vmatprep.subr.mxu0 0.0
  %449 = vmatpush2.msra.mxu0 0.0
  %450 = vmatprep.subr.mxu0 0.0
  %451 = vmatpush2.msra.mxu0 0.0
  %452 = vmatprep.subr.mxu0 0.0
  %453 = vmatpush2.msra.mxu0 0.0
  %454 = vmatprep.subr.mxu0 0.0
  %455 = vmatpush2.msra.mxu0 0.0
  %456 = vmatprep.subr.mxu0 0.0
  %457 = vmatpush2.msra.mxu0 0.0
  %458 = vmatprep.subr.mxu0 0.0
  %459 = vmatpush2.msra.mxu0 0.0
  %460 = vmatprep.subr.mxu0 0.0
  %461 = vmatpush2.msra.mxu0 0.0
  %462 = vmatprep.subr.mxu0 0.0
  %463 = vmatpush2.msra.mxu0 0.0
  %464 = vmatprep.subr.mxu0 0.0
  %465 = vmatpush2.msra.mxu0 0.0
  %466 = vmatprep.subr.mxu0 0.0
  %467 = vmatpush2.msra.mxu0 0.0
  %468 = vmatprep.subr.mxu0 0.0
  %469 = vmatpush2.msra.mxu0 0.0
  %470 = vmatprep.mubr.f32.mxu0 0.0
  %471 = vmatmul.mubr.f32.gmra.mxu0 %v404
  %v472 = vpop.f32.mrf.mxu0
  %v473 = vadd.f32 %v301, %v472
  %v474 = vpop.f32.mrf.mxu0
  %475 = vdwg.mxu0
  %v476 = vadd.f32 %v288, %v473
  %v477 = vxor.u32 %v476, 2147483648
  %v478 = vmul.f32 %v477, 1.442695
  %v479 = vpow.pop %v478
  %v480 = vadd.f32 %v479, 1.0
  %v481 = vrcp.pop %v480
  %v482 = vmul.f32 1.0, %v481
  %484 = vrot.lane.b32.xlu0 %v473, 64
  %v485 = vpop.permute.xlu0 %484
  %v487 = vmul.f32 %v482, %v485
  %489 = vrot.lane.b32.xlu0 %v487, 64
  %v490 = vpop.permute.xlu0 %489
  %v492 = vadd.f32 %v288, %v490
  %v493 = vtanh.pop %v492
  %v494 = vsub.f32 1.0, %v482
  %496 = vrot.lane.b32.xlu0 %v493, 96
  %v497 = vpop.permute.xlu0 %496
  %v499 = vmul.f32 %v494, %v497
  %v500 = vmul.f32 %v482, %v400
  %v501 = vadd.f32 %v499, %v500
  %v502 = vmax.f32 %v400, %v501
  %504 = vrot.lane.b32.xlu0 %v501, 96
  %v505 = vpop.permute.xlu0 %504
  %v506 = vsel %vm168, %v505, 0
  %508 = vmatprep.subr.mxu0 0.0
  %509 = vmatpush1.msra.mxu0 0.0
  %510 = vmatprep.subr.mxu0 0.0
  %511 = vmatpush1.msra.mxu0 0.0
  %512 = vmatprep.subr.mxu0 0.0
  %513 = vmatpush1.msra.mxu0 0.0
  %514 = vmatprep.subr.mxu0 0.0
  %515 = vmatpush1.msra.mxu0 0.0
  %516 = vmatprep.subr.mxu0 0.0
  %517 = vmatpush1.msra.mxu0 0.0
  %518 = vmatprep.subr.mxu0 0.0
  %519 = vmatpush1.msra.mxu0 0.0
  %520 = vmatprep.subr.mxu0 0.0
  %521 = vmatpush1.msra.mxu0 0.0
  %522 = vmatprep.subr.mxu0 0.0
  %523 = vmatpush1.msra.mxu0 0.0
  %524 = vmatprep.subr.mxu0 0.0
  %525 = vmatpush1.msra.mxu0 0.0
  %526 = vmatprep.subr.mxu0 0.0
  %527 = vmatpush1.msra.mxu0 0.0
  %528 = vmatprep.subr.mxu0 0.0
  %529 = vmatpush1.msra.mxu0 0.0
  %530 = vmatprep.subr.mxu0 0.0
  %531 = vmatpush1.msra.mxu0 0.0
  %532 = vmatprep.subr.mxu0 0.0
  %533 = vmatpush1.msra.mxu0 %v296
  %534 = vmatprep.subr.mxu0 0.0
  %535 = vmatpush1.msra.mxu0 %v295
  %536 = vmatprep.subr.mxu0 0.0
  %537 = vmatpush1.msra.mxu0 %v294
  %538 = vmatprep.subr.mxu0 0.0
  %539 = vmatpush1.msra.mxu0 %v293
  %540 = vmatprep.subr.mxu0 0.0
  %541 = vmatpush2.msra.mxu0 0.0
  %542 = vmatprep.subr.mxu0 0.0
  %543 = vmatpush2.msra.mxu0 0.0
  %544 = vmatprep.subr.mxu0 0.0
  %545 = vmatpush2.msra.mxu0 0.0
  %546 = vmatprep.subr.mxu0 0.0
  %547 = vmatpush2.msra.mxu0 0.0
  %548 = vmatprep.subr.mxu0 0.0
  %549 = vmatpush2.msra.mxu0 0.0
  %550 = vmatprep.subr.mxu0 0.0
  %551 = vmatpush2.msra.mxu0 0.0
  %552 = vmatprep.subr.mxu0 0.0
  %553 = vmatpush2.msra.mxu0 0.0
  %554 = vmatprep.subr.mxu0 0.0
  %555 = vmatpush2.msra.mxu0 0.0
  %556 = vmatprep.subr.mxu0 0.0
  %557 = vmatpush2.msra.mxu0 0.0
  %558 = vmatprep.subr.mxu0 0.0
  %559 = vmatpush2.msra.mxu0 0.0
  %560 = vmatprep.subr.mxu0 0.0
  %561 = vmatpush2.msra.mxu0 0.0
  %562 = vmatprep.subr.mxu0 0.0
  %563 = vmatpush2.msra.mxu0 0.0
  %564 = vmatprep.subr.mxu0 0.0
  %565 = vmatpush2.msra.mxu0 0.0
  %566 = vmatprep.subr.mxu0 0.0
  %567 = vmatpush2.msra.mxu0 0.0
  %568 = vmatprep.subr.mxu0 0.0
  %569 = vmatpush2.msra.mxu0 0.0
  %570 = vmatprep.subr.mxu0 0.0
  %571 = vmatpush2.msra.mxu0 0.0
  %572 = vmatprep.mubr.f32.mxu0 0.0
  %573 = vmatmul.mubr.f32.gmra.mxu0 %v506
  %v574 = vpop.f32.mrf.mxu0
  %v575 = vadd.f32 %v301, %v574
  %v576 = vpop.f32.mrf.mxu0
  %577 = vdwg.mxu0
  %v578 = vadd.f32 %v289, %v575
  %v579 = vxor.u32 %v578, 2147483648
  %v580 = vmul.f32 %v579, 1.442695
  %v581 = vpow.pop %v580
  %v582 = vadd.f32 %v581, 1.0
  %v583 = vrcp.pop %v582
  %v584 = vmul.f32 1.0, %v583
  %586 = vrot.lane.b32.xlu0 %v575, 64
  %v587 = vpop.permute.xlu0 %586
  %v589 = vmul.f32 %v584, %v587
  %591 = vrot.lane.b32.xlu0 %v589, 64
  %v592 = vpop.permute.xlu0 %591
  %v594 = vadd.f32 %v289, %v592
  %v595 = vtanh.pop %v594
  %v596 = vsub.f32 1.0, %v584
  %598 = vrot.lane.b32.xlu0 %v595, 96
  %v599 = vpop.permute.xlu0 %598
  %v601 = vmul.f32 %v596, %v599
  %v602 = vmul.f32 %v584, %v501
  %v603 = vadd.f32 %v601, %v602
  %v604 = vmax.f32 %v502, %v603
  %606 = vrot.lane.b32.xlu0 %v603, 96
  %v607 = vpop.permute.xlu0 %606
  %v608 = vsel %vm168, %v607, 0
  %610 = vmatprep.subr.mxu0 0.0
  %611 = vmatpush1.msra.mxu0 0.0
  %612 = vmatprep.subr.mxu0 0.0
  %613 = vmatpush1.msra.mxu0 0.0
  %614 = vmatprep.subr.mxu0 0.0
  %615 = vmatpush1.msra.mxu0 0.0
  %616 = vmatprep.subr.mxu0 0.0
  %617 = vmatpush1.msra.mxu0 0.0
  %618 = vmatprep.subr.mxu0 0.0
  %619 = vmatpush1.msra.mxu0 0.0
  %620 = vmatprep.subr.mxu0 0.0
  %621 = vmatpush1.msra.mxu0 0.0
  %622 = vmatprep.subr.mxu0 0.0
  %623 = vmatpush1.msra.mxu0 0.0
  %624 = vmatprep.subr.mxu0 0.0
  %625 = vmatpush1.msra.mxu0 0.0
  %626 = vmatprep.subr.mxu0 0.0
  %627 = vmatpush1.msra.mxu0 0.0
  %628 = vmatprep.subr.mxu0 0.0
  %629 = vmatpush1.msra.mxu0 0.0
  %630 = vmatprep.subr.mxu0 0.0
  %631 = vmatpush1.msra.mxu0 0.0
  %632 = vmatprep.subr.mxu0 0.0
  %633 = vmatpush1.msra.mxu0 0.0
  %634 = vmatprep.subr.mxu0 0.0
  %635 = vmatpush1.msra.mxu0 %v296
  %636 = vmatprep.subr.mxu0 0.0
  %637 = vmatpush1.msra.mxu0 %v295
  %638 = vmatprep.subr.mxu0 0.0
  %639 = vmatpush1.msra.mxu0 %v294
  %640 = vmatprep.subr.mxu0 0.0
  %641 = vmatpush1.msra.mxu0 %v293
  %642 = vmatprep.subr.mxu0 0.0
  %643 = vmatpush2.msra.mxu0 0.0
  %644 = vmatprep.subr.mxu0 0.0
  %645 = vmatpush2.msra.mxu0 0.0
  %646 = vmatprep.subr.mxu0 0.0
  %647 = vmatpush2.msra.mxu0 0.0
  %648 = vmatprep.subr.mxu0 0.0
  %649 = vmatpush2.msra.mxu0 0.0
  %650 = vmatprep.subr.mxu0 0.0
  %651 = vmatpush2.msra.mxu0 0.0
  %652 = vmatprep.subr.mxu0 0.0
  %653 = vmatpush2.msra.mxu0 0.0
  %654 = vmatprep.subr.mxu0 0.0
  %655 = vmatpush2.msra.mxu0 0.0
  %656 = vmatprep.subr.mxu0 0.0
  %657 = vmatpush2.msra.mxu0 0.0
  %658 = vmatprep.subr.mxu0 0.0
  %659 = vmatpush2.msra.mxu0 0.0
  %660 = vmatprep.subr.mxu0 0.0
  %661 = vmatpush2.msra.mxu0 0.0
  %662 = vmatprep.subr.mxu0 0.0
  %663 = vmatpush2.msra.mxu0 0.0
  %664 = vmatprep.subr.mxu0 0.0
  %665 = vmatpush2.msra.mxu0 0.0
  %666 = vmatprep.subr.mxu0 0.0
  %667 = vmatpush2.msra.mxu0 0.0
  %668 = vmatprep.subr.mxu0 0.0
  %669 = vmatpush2.msra.mxu0 0.0
  %670 = vmatprep.subr.mxu0 0.0
  %671 = vmatpush2.msra.mxu0 0.0
  %672 = vmatprep.subr.mxu0 0.0
  %673 = vmatpush2.msra.mxu0 0.0
  %674 = vmatprep.mubr.f32.mxu0 0.0
  %675 = vmatmul.mubr.f32.gmra.mxu0 %v608
  %v676 = vpop.f32.mrf.mxu0
  %v677 = vadd.f32 %v301, %v676
  %v678 = vpop.f32.mrf.mxu0
  %679 = vdwg.mxu0
  %v680 = vadd.f32 %v290, %v677
  %v681 = vxor.u32 %v680, 2147483648
  %v682 = vmul.f32 %v681, 1.442695
  %v683 = vpow.pop %v682
  %v684 = vadd.f32 %v683, 1.0
  %v685 = vrcp.pop %v684
  %v686 = vmul.f32 1.0, %v685
  %688 = vrot.lane.b32.xlu0 %v677, 64
  %v689 = vpop.permute.xlu0 %688
  %v691 = vmul.f32 %v686, %v689
  %693 = vrot.lane.b32.xlu0 %v691, 64
  %v694 = vpop.permute.xlu0 %693
  %v696 = vadd.f32 %v290, %v694
  %v697 = vtanh.pop %v696
  %v698 = vsub.f32 1.0, %v686
  %700 = vrot.lane.b32.xlu0 %v697, 96
  %v701 = vpop.permute.xlu0 %700
  %v703 = vmul.f32 %v698, %v701
  %v704 = vmul.f32 %v686, %v603
  %v705 = vadd.f32 %v703, %v704
  %v706 = vmax.f32 %v604, %v705
  %708 = vrot.lane.b32.xlu0 %v705, 96
  %v709 = vpop.permute.xlu0 %708
  %v710 = vsel %vm168, %v709, 0
  %712 = vmatprep.subr.mxu0 0.0
  %713 = vmatpush1.msra.mxu0 0.0
  %714 = vmatprep.subr.mxu0 0.0
  %715 = vmatpush1.msra.mxu0 0.0
  %716 = vmatprep.subr.mxu0 0.0
  %717 = vmatpush1.msra.mxu0 0.0
  %718 = vmatprep.subr.mxu0 0.0
  %719 = vmatpush1.msra.mxu0 0.0
  %720 = vmatprep.subr.mxu0 0.0
  %721 = vmatpush1.msra.mxu0 0.0
  %722 = vmatprep.subr.mxu0 0.0
  %723 = vmatpush1.msra.mxu0 0.0
  %724 = vmatprep.subr.mxu0 0.0
  %725 = vmatpush1.msra.mxu0 0.0
  %726 = vmatprep.subr.mxu0 0.0
  %727 = vmatpush1.msra.mxu0 0.0
  %728 = vmatprep.subr.mxu0 0.0
  %729 = vmatpush1.msra.mxu0 0.0
  %730 = vmatprep.subr.mxu0 0.0
  %731 = vmatpush1.msra.mxu0 0.0
  %732 = vmatprep.subr.mxu0 0.0
  %733 = vmatpush1.msra.mxu0 0.0
  %734 = vmatprep.subr.mxu0 0.0
  %735 = vmatpush1.msra.mxu0 0.0
  %736 = vmatprep.subr.mxu0 0.0
  %737 = vmatpush1.msra.mxu0 %v296
  %738 = vmatprep.subr.mxu0 0.0
  %739 = vmatpush1.msra.mxu0 %v295
  %740 = vmatprep.subr.mxu0 0.0
  %741 = vmatpush1.msra.mxu0 %v294
  %742 = vmatprep.subr.mxu0 0.0
  %743 = vmatpush1.msra.mxu0 %v293
  %744 = vmatprep.subr.mxu0 0.0
  %745 = vmatpush2.msra.mxu0 0.0
  %746 = vmatprep.subr.mxu0 0.0
  %747 = vmatpush2.msra.mxu0 0.0
  %748 = vmatprep.subr.mxu0 0.0
  %749 = vmatpush2.msra.mxu0 0.0
  %750 = vmatprep.subr.mxu0 0.0
  %751 = vmatpush2.msra.mxu0 0.0
  %752 = vmatprep.subr.mxu0 0.0
  %753 = vmatpush2.msra.mxu0 0.0
  %754 = vmatprep.subr.mxu0 0.0
  %755 = vmatpush2.msra.mxu0 0.0
  %756 = vmatprep.subr.mxu0 0.0
  %757 = vmatpush2.msra.mxu0 0.0
  %758 = vmatprep.subr.mxu0 0.0
  %759 = vmatpush2.msra.mxu0 0.0
  %760 = vmatprep.subr.mxu0 0.0
  %761 = vmatpush2.msra.mxu0 0.0
  %762 = vmatprep.subr.mxu0 0.0
  %763 = vmatpush2.msra.mxu0 0.0
  %764 = vmatprep.subr.mxu0 0.0
  %765 = vmatpush2.msra.mxu0 0.0
  %766 = vmatprep.subr.mxu0 0.0
  %767 = vmatpush2.msra.mxu0 0.0
  %768 = vmatprep.subr.mxu0 0.0
  %769 = vmatpush2.msra.mxu0 0.0
  %770 = vmatprep.subr.mxu0 0.0
  %771 = vmatpush2.msra.mxu0 0.0
  %772 = vmatprep.subr.mxu0 0.0
  %773 = vmatpush2.msra.mxu0 0.0
  %774 = vmatprep.subr.mxu0 0.0
  %775 = vmatpush2.msra.mxu0 0.0
  %776 = vmatprep.mubr.f32.mxu0 0.0
  %777 = vmatmul.mubr.f32.gmra.mxu0 %v710
  %v778 = vpop.f32.mrf.mxu0
  %v779 = vadd.f32 %v301, %v778
  %v780 = vpop.f32.mrf.mxu0
  %781 = vdwg.mxu0
  %v782 = vadd.f32 %v291, %v779
  %v783 = vxor.u32 %v782, 2147483648
  %v784 = vmul.f32 %v783, 1.442695
  %v785 = vpow.pop %v784
  %v786 = vadd.f32 %v785, 1.0
  %v787 = vrcp.pop %v786
  %v788 = vmul.f32 1.0, %v787
  %790 = vrot.lane.b32.xlu0 %v779, 64
  %v791 = vpop.permute.xlu0 %790
  %v793 = vmul.f32 %v788, %v791
  %795 = vrot.lane.b32.xlu0 %v793, 64
  %v796 = vpop.permute.xlu0 %795
  %v798 = vadd.f32 %v291, %v796
  %v799 = vtanh.pop %v798
  %v800 = vsub.f32 1.0, %v788
  %802 = vrot.lane.b32.xlu0 %v799, 96
  %v803 = vpop.permute.xlu0 %802
  %v805 = vmul.f32 %v800, %v803
  %v806 = vmul.f32 %v788, %v705
  %v807 = vadd.f32 %v805, %v806
  %v808 = vmax.f32 %v706, %v807
  %810 = vrot.lane.b32.xlu0 %v807, 96
  %v811 = vpop.permute.xlu0 %810
  %v812 = vsel %vm168, %v811, 0
  %814 = vmatprep.subr.mxu0 0.0
  %815 = vmatpush1.msra.mxu0 0.0
  %816 = vmatprep.subr.mxu0 0.0
  %817 = vmatpush1.msra.mxu0 0.0
  %818 = vmatprep.subr.mxu0 0.0
  %819 = vmatpush1.msra.mxu0 0.0
  %820 = vmatprep.subr.mxu0 0.0
  %821 = vmatpush1.msra.mxu0 0.0
  %822 = vmatprep.subr.mxu0 0.0
  %823 = vmatpush1.msra.mxu0 0.0
  %824 = vmatprep.subr.mxu0 0.0
  %825 = vmatpush1.msra.mxu0 0.0
  %826 = vmatprep.subr.mxu0 0.0
  %827 = vmatpush1.msra.mxu0 0.0
  %828 = vmatprep.subr.mxu0 0.0
  %829 = vmatpush1.msra.mxu0 0.0
  %830 = vmatprep.subr.mxu0 0.0
  %831 = vmatpush1.msra.mxu0 0.0
  %832 = vmatprep.subr.mxu0 0.0
  %833 = vmatpush1.msra.mxu0 0.0
  %834 = vmatprep.subr.mxu0 0.0
  %835 = vmatpush1.msra.mxu0 0.0
  %836 = vmatprep.subr.mxu0 0.0
  %837 = vmatpush1.msra.mxu0 0.0
  %838 = vmatprep.subr.mxu0 0.0
  %839 = vmatpush1.msra.mxu0 %v296
  %840 = vmatprep.subr.mxu0 0.0
  %841 = vmatpush1.msra.mxu0 %v295
  %842 = vmatprep.subr.mxu0 0.0
  %843 = vmatpush1.msra.mxu0 %v294
  %844 = vmatprep.subr.mxu0 0.0
  %845 = vmatpush1.msra.mxu0 %v293
  %846 = vmatprep.subr.mxu0 0.0
  %847 = vmatpush2.msra.mxu0 0.0
  %848 = vmatprep.subr.mxu0 0.0
  %849 = vmatpush2.msra.mxu0 0.0
  %850 = vmatprep.subr.mxu0 0.0
  %851 = vmatpush2.msra.mxu0 0.0
  %852 = vmatprep.subr.mxu0 0.0
  %853 = vmatpush2.msra.mxu0 0.0
  %854 = vmatprep.subr.mxu0 0.0
  %855 = vmatpush2.msra.mxu0 0.0
  %856 = vmatprep.subr.mxu0 0.0
  %857 = vmatpush2.msra.mxu0 0.0
  %858 = vmatprep.subr.mxu0 0.0
  %859 = vmatpush2.msra.mxu0 0.0
  %860 = vmatprep.subr.mxu0 0.0
  %861 = vmatpush2.msra.mxu0 0.0
  %862 = vmatprep.subr.mxu0 0.0
  %863 = vmatpush2.msra.mxu0 0.0
  %864 = vmatprep.subr.mxu0 0.0
  %865 = vmatpush2.msra.mxu0 0.0
  %866 = vmatprep.subr.mxu0 0.0
  %867 = vmatpush2.msra.mxu0 0.0
  %868 = vmatprep.subr.mxu0 0.0
  %869 = vmatpush2.msra.mxu0 0.0
  %870 = vmatprep.subr.mxu0 0.0
  %871 = vmatpush2.msra.mxu0 0.0
  %872 = vmatprep.subr.mxu0 0.0
  %873 = vmatpush2.msra.mxu0 0.0
  %874 = vmatprep.subr.mxu0 0.0
  %875 = vmatpush2.msra.mxu0 0.0
  %876 = vmatprep.subr.mxu0 0.0
  %877 = vmatpush2.msra.mxu0 0.0
  %878 = vmatprep.mubr.f32.mxu0 0.0
  %879 = vmatmul.mubr.f32.gmra.mxu0 %v812
  %v880 = vpop.f32.mrf.mxu0
  %v881 = vadd.f32 %v301, %v880
  %v882 = vpop.f32.mrf.mxu0
  %883 = vdwg.mxu0
  %v884 = vadd.f32 %v292, %v881
  %v885 = vxor.u32 %v884, 2147483648
  %v886 = vmul.f32 %v885, 1.442695
  %v887 = vpow.pop %v886
  %v888 = vadd.f32 %v887, 1.0
  %v889 = vrcp.pop %v888
  %v890 = vmul.f32 1.0, %v889
  %892 = vrot.lane.b32.xlu0 %v881, 64
  %v893 = vpop.permute.xlu0 %892
  %v895 = vmul.f32 %v890, %v893
  %897 = vrot.lane.b32.xlu0 %v895, 64
  %v898 = vpop.permute.xlu0 %897
  %v900 = vadd.f32 %v292, %v898
  %v901 = vtanh.pop %v900
  %v902 = vsub.f32 1.0, %v890
  %904 = vrot.lane.b32.xlu0 %v901, 96
  %v905 = vpop.permute.xlu0 %904
  %v907 = vmul.f32 %v902, %v905
  %v908 = vmul.f32 %v890, %v807
  %v909 = vadd.f32 %v907, %v908
  %v910 = vmax.f32 %v808, %v909
  %v911 = vld [vmem:[%s5 + $0x90] sm:$0xff]
  %v912 = vld [vmem:[%s5 + $0x98] sm:$0xff]
  %v913 = vld [vmem:[%s5 + $0xa0] sm:$0xff]
  %v914 = vld [vmem:[%s5 + $0xa8] sm:$0xff]
  %v915 = vld [vmem:[%s5 + $0xb0] sm:$0x1]
  %v916 = vlaneseq
  %v917 = vshrl.u32 %v916, 7
  %v918 = vsub.s32 0, %v917
  %v919 = vrot.slane %v915, %v918
  %v921 = vsel %vm168, %v32, 0
  %v924 = vsel %vm168, %v33, 0
  %v927 = vsel %vm168, %v34, 0
  %v930 = vsel %vm168, %v35, 0
  %932 = vmatprep.subr.mxu0 0.0
  %933 = vmatpush1.msra.mxu0 0.0
  %934 = vmatprep.subr.mxu0 0.0
  %935 = vmatpush1.msra.mxu0 0.0
  %936 = vmatprep.subr.mxu0 0.0
  %937 = vmatpush1.msra.mxu0 0.0
  %938 = vmatprep.subr.mxu0 0.0
  %939 = vmatpush1.msra.mxu0 0.0
  %940 = vmatprep.subr.mxu0 0.0
  %941 = vmatpush1.msra.mxu0 0.0
  %942 = vmatprep.subr.mxu0 0.0
  %943 = vmatpush1.msra.mxu0 0.0
  %944 = vmatprep.subr.mxu0 0.0
  %945 = vmatpush1.msra.mxu0 0.0
  %946 = vmatprep.subr.mxu0 0.0
  %947 = vmatpush1.msra.mxu0 0.0
  %948 = vmatprep.subr.mxu0 0.0
  %949 = vmatpush1.msra.mxu0 0.0
  %950 = vmatprep.subr.mxu0 0.0
  %951 = vmatpush1.msra.mxu0 0.0
  %952 = vmatprep.subr.mxu0 0.0
  %953 = vmatpush1.msra.mxu0 0.0
  %954 = vmatprep.subr.mxu0 0.0
  %955 = vmatpush1.msra.mxu0 0.0
  %956 = vmatprep.subr.mxu0 0.0
  %957 = vmatpush1.msra.mxu0 %v914
  %958 = vmatprep.subr.mxu0 0.0
  %959 = vmatpush1.msra.mxu0 %v913
  %960 = vmatprep.subr.mxu0 0.0
  %961 = vmatpush1.msra.mxu0 %v912
  %962 = vmatprep.subr.mxu0 0.0
  %963 = vmatpush1.msra.mxu0 %v911
  %964 = vmatprep.subr.mxu0 0.0
  %965 = vmatpush2.msra.mxu0 0.0
  %966 = vmatprep.subr.mxu0 0.0
  %967 = vmatpush2.msra.mxu0 0.0
  %968 = vmatprep.subr.mxu0 0.0
  %969 = vmatpush2.msra.mxu0 0.0
  %970 = vmatprep.subr.mxu0 0.0
  %971 = vmatpush2.msra.mxu0 0.0
  %972 = vmatprep.subr.mxu0 0.0
  %973 = vmatpush2.msra.mxu0 0.0
  %974 = vmatprep.subr.mxu0 0.0
  %975 = vmatpush2.msra.mxu0 0.0
  %976 = vmatprep.subr.mxu0 0.0
  %977 = vmatpush2.msra.mxu0 0.0
  %978 = vmatprep.subr.mxu0 0.0
  %979 = vmatpush2.msra.mxu0 0.0
  %980 = vmatprep.subr.mxu0 0.0
  %981 = vmatpush2.msra.mxu0 0.0
  %982 = vmatprep.subr.mxu0 0.0
  %983 = vmatpush2.msra.mxu0 0.0
  %984 = vmatprep.subr.mxu0 0.0
  %985 = vmatpush2.msra.mxu0 0.0
  %986 = vmatprep.subr.mxu0 0.0
  %987 = vmatpush2.msra.mxu0 0.0
  %988 = vmatprep.subr.mxu0 0.0
  %989 = vmatpush2.msra.mxu0 0.0
  %990 = vmatprep.subr.mxu0 0.0
  %991 = vmatpush2.msra.mxu0 0.0
  %992 = vmatprep.subr.mxu0 0.0
  %993 = vmatpush2.msra.mxu0 0.0
  %994 = vmatprep.subr.mxu0 0.0
  %995 = vmatpush2.msra.mxu0 0.0
  %996 = vmatprep.mubr.f32.mxu0 0.0
  %997 = vmatmul.mubr.f32.gmra.mxu0 %v921
  %v998 = vpop.f32.mrf.mxu0
  %v999 = vadd.f32 %v919, %v998
  %v1000 = vpop.f32.mrf.mxu0
  %1001 = vmatprep.mubr.f32.mxu0 0.0
  %1002 = vmatmul.mubr.f32.gmra.mxu0 %v924
  %v1003 = vpop.f32.mrf.mxu0
  %v1004 = vadd.f32 %v919, %v1003
  %v1005 = vpop.f32.mrf.mxu0
  %1006 = vmatprep.mubr.f32.mxu0 0.0
  %1007 = vmatmul.mubr.f32.gmra.mxu0 %v927
  %v1008 = vpop.f32.mrf.mxu0
  %v1009 = vadd.f32 %v919, %v1008
  %v1010 = vpop.f32.mrf.mxu0
  %1011 = vmatprep.mubr.f32.mxu0 0.0
  %1012 = vmatmul.mubr.f32.gmra.mxu0 %v930
  %v1013 = vpop.f32.mrf.mxu0
  %v1014 = vadd.f32 %v919, %v1013
  %v1015 = vpop.f32.mrf.mxu0
  %1016 = vdwg.mxu0
  %v1017 = vld [vmem:[%s5 + $0xb8] sm:$0xff]
  %v1018 = vld [vmem:[%s5 + $0xc0] sm:$0xff]
  %v1019 = vld [vmem:[%s5 + $0xc8] sm:$0x1]
  %v1020 = vlaneseq
  %v1021 = vshrl.u32 %v1020, 7
  %v1022 = vsub.s32 0, %v1021
  %v1023 = vrot.slane %v1019, %v1022
  %1025 = vrot.lane.b32.xlu0 %v909, 96
  %v1026 = vpop.permute.xlu0 %1025
  %vm1027 = vcmask 130048
  %v1028 = vsel %vm1027, %v1026, 0
  %1030 = vmatprep.subr.mxu0 0.0
  %1031 = vmatpush1.msra.mxu0 0.0
  %1032 = vmatprep.subr.mxu0 0.0
  %1033 = vmatpush1.msra.mxu0 0.0
  %1034 = vmatprep.subr.mxu0 0.0
  %1035 = vmatpush1.msra.mxu0 0.0
  %1036 = vmatprep.subr.mxu0 0.0
  %1037 = vmatpush1.msra.mxu0 0.0
  %1038 = vmatprep.subr.mxu0 0.0
  %1039 = vmatpush1.msra.mxu0 0.0
  %1040 = vmatprep.subr.mxu0 0.0
  %1041 = vmatpush1.msra.mxu0 0.0
  %1042 = vmatprep.subr.mxu0 0.0
  %1043 = vmatpush1.msra.mxu0 0.0
  %1044 = vmatprep.subr.mxu0 0.0
  %1045 = vmatpush1.msra.mxu0 0.0
  %1046 = vmatprep.subr.mxu0 0.0
  %1047 = vmatpush1.msra.mxu0 0.0
  %1048 = vmatprep.subr.mxu0 0.0
  %1049 = vmatpush1.msra.mxu0 0.0
  %1050 = vmatprep.subr.mxu0 0.0
  %1051 = vmatpush1.msra.mxu0 0.0
  %1052 = vmatprep.subr.mxu0 0.0
  %1053 = vmatpush1.msra.mxu0 0.0
  %1054 = vmatprep.subr.mxu0 0.0
  %1055 = vmatpush1.msra.mxu0 0.0
  %1056 = vmatprep.subr.mxu0 0.0
  %1057 = vmatpush1.msra.mxu0 0.0
  %1058 = vmatprep.subr.mxu0 0.0
  %1059 = vmatpush1.msra.mxu0 %v1018
  %1060 = vmatprep.subr.mxu0 0.0
  %1061 = vmatpush1.msra.mxu0 %v1017
  %1062 = vmatprep.subr.mxu0 0.0
  %1063 = vmatpush2.msra.mxu0 0.0
  %1064 = vmatprep.subr.mxu0 0.0
  %1065 = vmatpush2.msra.mxu0 0.0
  %1066 = vmatprep.subr.mxu0 0.0
  %1067 = vmatpush2.msra.mxu0 0.0
  %1068 = vmatprep.subr.mxu0 0.0
  %1069 = vmatpush2.msra.mxu0 0.0
  %1070 = vmatprep.subr.mxu0 0.0
  %1071 = vmatpush2.msra.mxu0 0.0
  %1072 = vmatprep.subr.mxu0 0.0
  %1073 = vmatpush2.msra.mxu0 0.0
  %1074 = vmatprep.subr.mxu0 0.0
  %1075 = vmatpush2.msra.mxu0 0.0
  %1076 = vmatprep.subr.mxu0 0.0
  %1077 = vmatpush2.msra.mxu0 0.0
  %1078 = vmatprep.subr.mxu0 0.0
  %1079 = vmatpush2.msra.mxu0 0.0
  %1080 = vmatprep.subr.mxu0 0.0
  %1081 = vmatpush2.msra.mxu0 0.0
  %1082 = vmatprep.subr.mxu0 0.0
  %1083 = vmatpush2.msra.mxu0 0.0
  %1084 = vmatprep.subr.mxu0 0.0
  %1085 = vmatpush2.msra.mxu0 0.0
  %1086 = vmatprep.subr.mxu0 0.0
  %1087 = vmatpush2.msra.mxu0 0.0
  %1088 = vmatprep.subr.mxu0 0.0
  %1089 = vmatpush2.msra.mxu0 0.0
  %1090 = vmatprep.subr.mxu0 0.0
  %1091 = vmatpush2.msra.mxu0 0.0
  %1092 = vmatprep.subr.mxu0 0.0
  %1093 = vmatpush2.msra.mxu0 0.0
  %1094 = vmatprep.mubr.f32.mxu0 0.0
  %1095 = vmatmul.mubr.f32.gmra.mxu0 %v1028
  %v1096 = vpop.f32.mrf.mxu0
  %v1097 = vadd.f32 %v1023, %v1096
  %v1098 = vpop.f32.mrf.mxu0
  %1099 = vdwg.mxu0
  %v1100 = vadd.f32 %v999, %v1097
  %v1101 = vxor.u32 %v1100, 2147483648
  %v1102 = vmul.f32 %v1101, 1.442695
  %v1103 = vpow.pop %v1102
  %v1104 = vadd.f32 %v1103, 1.0
  %v1105 = vrcp.pop %v1104
  %v1106 = vmul.f32 1.0, %v1105
  %1108 = vrot.lane.b32.xlu0 %v1097, 96
  %v1109 = vpop.permute.xlu0 %1108
  %v1111 = vmul.f32 %v1106, %v1109
  %1113 = vrot.lane.b32.xlu0 %v1111, 32
  %v1114 = vpop.permute.xlu0 %1113
  %v1116 = vadd.f32 %v999, %v1114
  %v1117 = vtanh.pop %v1116
  %v1118 = vsub.f32 1.0, %v1106
  %1120 = vrot.lane.b32.xlu0 %v1117, 112
  %v1121 = vpop.permute.xlu0 %1120
  %v1123 = vmul.f32 %v1118, %v1121
  %1124 = vrot.lane.b32.xlu0 %v909, 112
  %v1125 = vpop.permute.xlu0 %1124
  %v1127 = vmul.f32 %v1106, %v1125
  %v1128 = vadd.f32 %v1123, %v1127
  %1130 = vrot.lane.b32.xlu0 %v1128, 16
  %v1131 = vpop.permute.xlu0 %1130
  %v1133 = vmax.f32 %v910, %v1131
  %1134 = vrot.lane.b32.xlu0 %v1128, 112
  %v1135 = vpop.permute.xlu0 %1134
  %v1136 = vsel %vm1027, %v1135, 0
  %1138 = vmatprep.subr.mxu0 0.0
  %1139 = vmatpush1.msra.mxu0 0.0
  %1140 = vmatprep.subr.mxu0 0.0
  %1141 = vmatpush1.msra.mxu0 0.0
  %1142 = vmatprep.subr.mxu0 0.0
  %1143 = vmatpush1.msra.mxu0 0.0
  %1144 = vmatprep.subr.mxu0 0.0
  %1145 = vmatpush1.msra.mxu0 0.0
  %1146 = vmatprep.subr.mxu0 0.0
  %1147 = vmatpush1.msra.mxu0 0.0
  %1148 = vmatprep.subr.mxu0 0.0
  %1149 = vmatpush1.msra.mxu0 0.0
  %1150 = vmatprep.subr.mxu0 0.0
  %1151 = vmatpush1.msra.mxu0 0.0
  %1152 = vmatprep.subr.mxu0 0.0
  %1153 = vmatpush1.msra.mxu0 0.0
  %1154 = vmatprep.subr.mxu0 0.0
  %1155 = vmatpush1.msra.mxu0 0.0
  %1156 = vmatprep.subr.mxu0 0.0
  %1157 = vmatpush1.msra.mxu0 0.0
  %1158 = vmatprep.subr.mxu0 0.0
  %1159 = vmatpush1.msra.mxu0 0.0
  %1160 = vmatprep.subr.mxu0 0.0
  %1161 = vmatpush1.msra.mxu0 0.0
  %1162 = vmatprep.subr.mxu0 0.0
  %1163 = vmatpush1.msra.mxu0 0.0
  %1164 = vmatprep.subr.mxu0 0.0
  %1165 = vmatpush1.msra.mxu0 0.0
  %1166 = vmatprep.subr.mxu0 0.0
  %1167 = vmatpush1.msra.mxu0 %v1018
  %1168 = vmatprep.subr.mxu0 0.0
  %1169 = vmatpush1.msra.mxu0 %v1017
  %1170 = vmatprep.subr.mxu0 0.0
  %1171 = vmatpush2.msra.mxu0 0.0
  %1172 = vmatprep.subr.mxu0 0.0
  %1173 = vmatpush2.msra.mxu0 0.0
  %1174 = vmatprep.subr.mxu0 0.0
  %1175 = vmatpush2.msra.mxu0 0.0
  %1176 = vmatprep.subr.mxu0 0.0
  %1177 = vmatpush2.msra.mxu0 0.0
  %1178 = vmatprep.subr.mxu0 0.0
  %1179 = vmatpush2.msra.mxu0 0.0
  %1180 = vmatprep.subr.mxu0 0.0
  %1181 = vmatpush2.msra.mxu0 0.0
  %1182 = vmatprep.subr.mxu0 0.0
  %1183 = vmatpush2.msra.mxu0 0.0
  %1184 = vmatprep.subr.mxu0 0.0
  %1185 = vmatpush2.msra.mxu0 0.0
  %1186 = vmatprep.subr.mxu0 0.0
  %1187 = vmatpush2.msra.mxu0 0.0
  %1188 = vmatprep.subr.mxu0 0.0
  %1189 = vmatpush2.msra.mxu0 0.0
  %1190 = vmatprep.subr.mxu0 0.0
  %1191 = vmatpush2.msra.mxu0 0.0
  %1192 = vmatprep.subr.mxu0 0.0
  %1193 = vmatpush2.msra.mxu0 0.0
  %1194 = vmatprep.subr.mxu0 0.0
  %1195 = vmatpush2.msra.mxu0 0.0
  %1196 = vmatprep.subr.mxu0 0.0
  %1197 = vmatpush2.msra.mxu0 0.0
  %1198 = vmatprep.subr.mxu0 0.0
  %1199 = vmatpush2.msra.mxu0 0.0
  %1200 = vmatprep.subr.mxu0 0.0
  %1201 = vmatpush2.msra.mxu0 0.0
  %1202 = vmatprep.mubr.f32.mxu0 0.0
  %1203 = vmatmul.mubr.f32.gmra.mxu0 %v1136
  %v1204 = vpop.f32.mrf.mxu0
  %v1205 = vadd.f32 %v1023, %v1204
  %v1206 = vpop.f32.mrf.mxu0
  %1207 = vdwg.mxu0
  %v1208 = vadd.f32 %v1004, %v1205
  %v1209 = vxor.u32 %v1208, 2147483648
  %v1210 = vmul.f32 %v1209, 1.442695
  %v1211 = vpow.pop %v1210
  %v1212 = vadd.f32 %v1211, 1.0
  %v1213 = vrcp.pop %v1212
  %v1214 = vmul.f32 1.0, %v1213
  %1216 = vrot.lane.b32.xlu0 %v1205, 96
  %v1217 = vpop.permute.xlu0 %1216
  %v1219 = vmul.f32 %v1214, %v1217
  %1221 = vrot.lane.b32.xlu0 %v1219, 32
  %v1222 = vpop.permute.xlu0 %1221
  %v1224 = vadd.f32 %v1004, %v1222
  %v1225 = vtanh.pop %v1224
  %v1226 = vsub.f32 1.0, %v1214
  %1228 = vrot.lane.b32.xlu0 %v1225, 112
  %v1229 = vpop.permute.xlu0 %1228
  %v1231 = vmul.f32 %v1226, %v1229
  %v1232 = vmul.f32 %v1214, %v1128
  %v1233 = vadd.f32 %v1231, %v1232
  %1235 = vrot.lane.b32.xlu0 %v1233, 16
  %v1236 = vpop.permute.xlu0 %1235
  %v1238 = vmax.f32 %v1133, %v1236
  %1239 = vrot.lane.b32.xlu0 %v1233, 112
  %v1240 = vpop.permute.xlu0 %1239
  %v1241 = vsel %vm1027, %v1240, 0
  %1243 = vmatprep.subr.mxu0 0.0
  %1244 = vmatpush1.msra.mxu0 0.0
  %1245 = vmatprep.subr.mxu0 0.0
  %1246 = vmatpush1.msra.mxu0 0.0
  %1247 = vmatprep.subr.mxu0 0.0
  %1248 = vmatpush1.msra.mxu0 0.0
  %1249 = vmatprep.subr.mxu0 0.0
  %1250 = vmatpush1.msra.mxu0 0.0
  %1251 = vmatprep.subr.mxu0 0.0
  %1252 = vmatpush1.msra.mxu0 0.0
  %1253 = vmatprep.subr.mxu0 0.0
  %1254 = vmatpush1.msra.mxu0 0.0
  %1255 = vmatprep.subr.mxu0 0.0
  %1256 = vmatpush1.msra.mxu0 0.0
  %1257 = vmatprep.subr.mxu0 0.0
  %1258 = vmatpush1.msra.mxu0 0.0
  %1259 = vmatprep.subr.mxu0 0.0
  %1260 = vmatpush1.msra.mxu0 0.0
  %1261 = vmatprep.subr.mxu0 0.0
  %1262 = vmatpush1.msra.mxu0 0.0
  %1263 = vmatprep.subr.mxu0 0.0
  %1264 = vmatpush1.msra.mxu0 0.0
  %1265 = vmatprep.subr.mxu0 0.0
  %1266 = vmatpush1.msra.mxu0 0.0
  %1267 = vmatprep.subr.mxu0 0.0
  %1268 = vmatpush1.msra.mxu0 0.0
  %1269 = vmatprep.subr.mxu0 0.0
  %1270 = vmatpush1.msra.mxu0 0.0
  %1271 = vmatprep.subr.mxu0 0.0
  %1272 = vmatpush1.msra.mxu0 %v1018
  %1273 = vmatprep.subr.mxu0 0.0
  %1274 = vmatpush1.msra.mxu0 %v1017
  %1275 = vmatprep.subr.mxu0 0.0
  %1276 = vmatpush2.msra.mxu0 0.0
  %1277 = vmatprep.subr.mxu0 0.0
  %1278 = vmatpush2.msra.mxu0 0.0
  %1279 = vmatprep.subr.mxu0 0.0
  %1280 = vmatpush2.msra.mxu0 0.0
  %1281 = vmatprep.subr.mxu0 0.0
  %1282 = vmatpush2.msra.mxu0 0.0
  %1283 = vmatprep.subr.mxu0 0.0
  %1284 = vmatpush2.msra.mxu0 0.0
  %1285 = vmatprep.subr.mxu0 0.0
  %1286 = vmatpush2.msra.mxu0 0.0
  %1287 = vmatprep.subr.mxu0 0.0
  %1288 = vmatpush2.msra.mxu0 0.0
  %1289 = vmatprep.subr.mxu0 0.0
  %1290 = vmatpush2.msra.mxu0 0.0
  %1291 = vmatprep.subr.mxu0 0.0
  %1292 = vmatpush2.msra.mxu0 0.0
  %1293 = vmatprep.subr.mxu0 0.0
  %1294 = vmatpush2.msra.mxu0 0.0
  %1295 = vmatprep.subr.mxu0 0.0
  %1296 = vmatpush2.msra.mxu0 0.0
  %1297 = vmatprep.subr.mxu0 0.0
  %1298 = vmatpush2.msra.mxu0 0.0
  %1299 = vmatprep.subr.mxu0 0.0
  %1300 = vmatpush2.msra.mxu0 0.0
  %1301 = vmatprep.subr.mxu0 0.0
  %1302 = vmatpush2.msra.mxu0 0.0
  %1303 = vmatprep.subr.mxu0 0.0
  %1304 = vmatpush2.msra.mxu0 0.0
  %1305 = vmatprep.subr.mxu0 0.0
  %1306 = vmatpush2.msra.mxu0 0.0
  %1307 = vmatprep.mubr.f32.mxu0 0.0
  %1308 = vmatmul.mubr.f32.gmra.mxu0 %v1241
  %v1309 = vpop.f32.mrf.mxu0
  %v1310 = vadd.f32 %v1023, %v1309
  %v1311 = vpop.f32.mrf.mxu0
  %1312 = vdwg.mxu0
  %v1313 = vadd.f32 %v1009, %v1310
  %v1314 = vxor.u32 %v1313, 2147483648
  %v1315 = vmul.f32 %v1314, 1.442695
  %v1316 = vpow.pop %v1315
  %v1317 = vadd.f32 %v1316, 1.0
  %v1318 = vrcp.pop %v1317
  %v1319 = vmul.f32 1.0, %v1318
  %1321 = vrot.lane.b32.xlu0 %v1310, 96
  %v1322 = vpop.permute.xlu0 %1321
  %v1324 = vmul.f32 %v1319, %v1322
  %1326 = vrot.lane.b32.xlu0 %v1324, 32
  %v1327 = vpop.permute.xlu0 %1326
  %v1329 = vadd.f32 %v1009, %v1327
  %v1330 = vtanh.pop %v1329
  %v1331 = vsub.f32 1.0, %v1319
  %1333 = vrot.lane.b32.xlu0 %v1330, 112
  %v1334 = vpop.permute.xlu0 %1333
  %v1336 = vmul.f32 %v1331, %v1334
  %v1337 = vmul.f32 %v1319, %v1233
  %v1338 = vadd.f32 %v1336, %v1337
  %1340 = vrot.lane.b32.xlu0 %v1338, 16
  %v1341 = vpop.permute.xlu0 %1340
  %v1343 = vmax.f32 %v1238, %v1341
  %1344 = vrot.lane.b32.xlu0 %v1338, 112
  %v1345 = vpop.permute.xlu0 %1344
  %v1346 = vsel %vm1027, %v1345, 0
  %1348 = vmatprep.subr.mxu0 0.0
  %1349 = vmatpush1.msra.mxu0 0.0
  %1350 = vmatprep.subr.mxu0 0.0
  %1351 = vmatpush1.msra.mxu0 0.0
  %1352 = vmatprep.subr.mxu0 0.0
  %1353 = vmatpush1.msra.mxu0 0.0
  %1354 = vmatprep.subr.mxu0 0.0
  %1355 = vmatpush1.msra.mxu0 0.0
  %1356 = vmatprep.subr.mxu0 0.0
  %1357 = vmatpush1.msra.mxu0 0.0
  %1358 = vmatprep.subr.mxu0 0.0
  %1359 = vmatpush1.msra.mxu0 0.0
  %1360 = vmatprep.subr.mxu0 0.0
  %1361 = vmatpush1.msra.mxu0 0.0
  %1362 = vmatprep.subr.mxu0 0.0
  %1363 = vmatpush1.msra.mxu0 0.0
  %1364 = vmatprep.subr.mxu0 0.0
  %1365 = vmatpush1.msra.mxu0 0.0
  %1366 = vmatprep.subr.mxu0 0.0
  %1367 = vmatpush1.msra.mxu0 0.0
  %1368 = vmatprep.subr.mxu0 0.0
  %1369 = vmatpush1.msra.mxu0 0.0
  %1370 = vmatprep.subr.mxu0 0.0
  %1371 = vmatpush1.msra.mxu0 0.0
  %1372 = vmatprep.subr.mxu0 0.0
  %1373 = vmatpush1.msra.mxu0 0.0
  %1374 = vmatprep.subr.mxu0 0.0
  %1375 = vmatpush1.msra.mxu0 0.0
  %1376 = vmatprep.subr.mxu0 0.0
  %1377 = vmatpush1.msra.mxu0 %v1018
  %1378 = vmatprep.subr.mxu0 0.0
  %1379 = vmatpush1.msra.mxu0 %v1017
  %1380 = vmatprep.subr.mxu0 0.0
  %1381 = vmatpush2.msra.mxu0 0.0
  %1382 = vmatprep.subr.mxu0 0.0
  %1383 = vmatpush2.msra.mxu0 0.0
  %1384 = vmatprep.subr.mxu0 0.0
  %1385 = vmatpush2.msra.mxu0 0.0
  %1386 = vmatprep.subr.mxu0 0.0
  %1387 = vmatpush2.msra.mxu0 0.0
  %1388 = vmatprep.subr.mxu0 0.0
  %1389 = vmatpush2.msra.mxu0 0.0
  %1390 = vmatprep.subr.mxu0 0.0
  %1391 = vmatpush2.msra.mxu0 0.0
  %1392 = vmatprep.subr.mxu0 0.0
  %1393 = vmatpush2.msra.mxu0 0.0
  %1394 = vmatprep.subr.mxu0 0.0
  %1395 = vmatpush2.msra.mxu0 0.0
  %1396 = vmatprep.subr.mxu0 0.0
  %1397 = vmatpush2.msra.mxu0 0.0
  %1398 = vmatprep.subr.mxu0 0.0
  %1399 = vmatpush2.msra.mxu0 0.0
  %1400 = vmatprep.subr.mxu0 0.0
  %1401 = vmatpush2.msra.mxu0 0.0
  %1402 = vmatprep.subr.mxu0 0.0
  %1403 = vmatpush2.msra.mxu0 0.0
  %1404 = vmatprep.subr.mxu0 0.0
  %1405 = vmatpush2.msra.mxu0 0.0
  %1406 = vmatprep.subr.mxu0 0.0
  %1407 = vmatpush2.msra.mxu0 0.0
  %1408 = vmatprep.subr.mxu0 0.0
  %1409 = vmatpush2.msra.mxu0 0.0
  %1410 = vmatprep.subr.mxu0 0.0
  %1411 = vmatpush2.msra.mxu0 0.0
  %1412 = vmatprep.mubr.f32.mxu0 0.0
  %1413 = vmatmul.mubr.f32.gmra.mxu0 %v1346
  %v1414 = vpop.f32.mrf.mxu0
  %v1415 = vadd.f32 %v1023, %v1414
  %v1416 = vpop.f32.mrf.mxu0
  %1417 = vdwg.mxu0
  %v1418 = vadd.f32 %v1014, %v1415
  %v1419 = vxor.u32 %v1418, 2147483648
  %v1420 = vmul.f32 %v1419, 1.442695
  %v1421 = vpow.pop %v1420
  %v1422 = vadd.f32 %v1421, 1.0
  %v1423 = vrcp.pop %v1422
  %v1424 = vmul.f32 1.0, %v1423
  %1426 = vrot.lane.b32.xlu0 %v1415, 96
  %v1427 = vpop.permute.xlu0 %1426
  %v1429 = vmul.f32 %v1424, %v1427
  %1431 = vrot.lane.b32.xlu0 %v1429, 32
  %v1432 = vpop.permute.xlu0 %1431
  %v1434 = vadd.f32 %v1014, %v1432
  %v1435 = vtanh.pop %v1434
  %v1436 = vsub.f32 1.0, %v1424
  %1438 = vrot.lane.b32.xlu0 %v1435, 112
  %v1439 = vpop.permute.xlu0 %1438
  %v1441 = vmul.f32 %v1436, %v1439
  %v1442 = vmul.f32 %v1424, %v1338
  %v1443 = vadd.f32 %v1441, %v1442
  %1445 = vrot.lane.b32.xlu0 %v1443, 16
  %v1446 = vpop.permute.xlu0 %1445
  %v1448 = vmax.f32 %v1343, %v1446
  %v1449 = vld [vmem:[%s5 + $0xd0] sm:$0xff]
  %v1450 = vld [vmem:[%s5 + $0xd8] sm:$0xff]
  %1451 = vrot.lane.b32.xlu0 %v400, 80
  %v1452 = vpop.permute.xlu0 %1451
  %1453 = vrot.lane.b32.xlu0 %v501, 80
  %v1454 = vpop.permute.xlu0 %1453
  %1455 = vrot.lane.b32.xlu0 %v603, 80
  %v1456 = vpop.permute.xlu0 %1455
  %1457 = vrot.lane.b32.xlu0 %v705, 80
  %v1458 = vpop.permute.xlu0 %1457
  %1459 = vrot.lane.b32.xlu0 %v807, 80
  %v1460 = vpop.permute.xlu0 %1459
  %1461 = vrot.lane.b32.xlu0 %v909, 80
  %v1462 = vpop.permute.xlu0 %1461
  %v1463 = vsel %vm1027, %v1452, 0
  %v1465 = vsel %vm1027, %v1454, 0
  %v1467 = vsel %vm1027, %v1456, 0
  %v1469 = vsel %vm1027, %v1458, 0
  %v1471 = vsel %vm1027, %v1460, 0
  %v1473 = vsel %vm1027, %v1462, 0
  %1475 = vmatprep.subr.mxu0 0.0
  %1476 = vmatpush1.msra.mxu0 0.0
  %1477 = vmatprep.subr.mxu0 0.0
  %1478 = vmatpush1.msra.mxu0 0.0
  %1479 = vmatprep.subr.mxu0 0.0
  %1480 = vmatpush1.msra.mxu0 0.0
  %1481 = vmatprep.subr.mxu0 0.0
  %1482 = vmatpush1.msra.mxu0 0.0
  %1483 = vmatprep.subr.mxu0 0.0
  %1484 = vmatpush1.msra.mxu0 0.0
  %1485 = vmatprep.subr.mxu0 0.0
  %1486 = vmatpush1.msra.mxu0 0.0
  %1487 = vmatprep.subr.mxu0 0.0
  %1488 = vmatpush1.msra.mxu0 0.0
  %1489 = vmatprep.subr.mxu0 0.0
  %1490 = vmatpush1.msra.mxu0 0.0
  %1491 = vmatprep.subr.mxu0 0.0
  %1492 = vmatpush1.msra.mxu0 0.0
  %1493 = vmatprep.subr.mxu0 0.0
  %1494 = vmatpush1.msra.mxu0 0.0
  %1495 = vmatprep.subr.mxu0 0.0
  %1496 = vmatpush1.msra.mxu0 0.0
  %1497 = vmatprep.subr.mxu0 0.0
  %1498 = vmatpush1.msra.mxu0 0.0
  %1499 = vmatprep.subr.mxu0 0.0
  %1500 = vmatpush1.msra.mxu0 0.0
  %1501 = vmatprep.subr.mxu0 0.0
  %1502 = vmatpush1.msra.mxu0 0.0
  %1503 = vmatprep.subr.mxu0 0.0
  %1504 = vmatpush1.msra.mxu0 %v1450
  %1505 = vmatprep.subr.mxu0 0.0
  %1506 = vmatpush1.msra.mxu0 %v1449
  %1507 = vmatprep.subr.mxu0 0.0
  %1508 = vmatpush2.msra.mxu0 0.0
  %1509 = vmatprep.subr.mxu0 0.0
  %1510 = vmatpush2.msra.mxu0 0.0
  %1511 = vmatprep.subr.mxu0 0.0
  %1512 = vmatpush2.msra.mxu0 0.0
  %1513 = vmatprep.subr.mxu0 0.0
  %1514 = vmatpush2.msra.mxu0 0.0
  %1515 = vmatprep.subr.mxu0 0.0
  %1516 = vmatpush2.msra.mxu0 0.0
  %1517 = vmatprep.subr.mxu0 0.0
  %1518 = vmatpush2.msra.mxu0 0.0
  %1519 = vmatprep.subr.mxu0 0.0
  %1520 = vmatpush2.msra.mxu0 0.0
  %1521 = vmatprep.subr.mxu0 0.0
  %1522 = vmatpush2.msra.mxu0 0.0
  %1523 = vmatprep.subr.mxu0 0.0
  %1524 = vmatpush2.msra.mxu0 0.0
  %1525 = vmatprep.subr.mxu0 0.0
  %1526 = vmatpush2.msra.mxu0 0.0
  %1527 = vmatprep.subr.mxu0 0.0
  %1528 = vmatpush2.msra.mxu0 0.0
  %1529 = vmatprep.subr.mxu0 0.0
  %1530 = vmatpush2.msra.mxu0 0.0
  %1531 = vmatprep.subr.mxu0 0.0
  %1532 = vmatpush2.msra.mxu0 0.0
  %1533 = vmatprep.subr.mxu0 0.0
  %1534 = vmatpush2.msra.mxu0 0.0
  %1535 = vmatprep.subr.mxu0 0.0
  %1536 = vmatpush2.msra.mxu0 0.0
  %1537 = vmatprep.subr.mxu0 0.0
  %1538 = vmatpush2.msra.mxu0 0.0
  %1539 = vmatprep.mubr.f32.mxu0 0.0
  %1540 = vmatmul.mubr.f32.gmra.mxu0 %v1463
  %v1541 = vpop.f32.mrf.mxu0
  %v1542 = vadd.f32 0.0, %v1541
  %v1543 = vpop.f32.mrf.mxu0
  %1544 = vmatprep.mubr.f32.mxu0 0.0
  %1545 = vmatmul.mubr.f32.gmra.mxu0 %v1465
  %v1546 = vpop.f32.mrf.mxu0
  %v1547 = vadd.f32 0.0, %v1546
  %v1548 = vpop.f32.mrf.mxu0
  %1549 = vmatprep.mubr.f32.mxu0 0.0
  %1550 = vmatmul.mubr.f32.gmra.mxu0 %v1467
  %v1551 = vpop.f32.mrf.mxu0
  %v1552 = vadd.f32 0.0, %v1551
  %v1553 = vpop.f32.mrf.mxu0
  %1554 = vmatprep.mubr.f32.mxu0 0.0
  %1555 = vmatmul.mubr.f32.gmra.mxu0 %v1469
  %v1556 = vpop.f32.mrf.mxu0
  %v1557 = vadd.f32 0.0, %v1556
  %v1558 = vpop.f32.mrf.mxu0
  %1559 = vmatprep.mubr.f32.mxu0 0.0
  %1560 = vmatmul.mubr.f32.gmra.mxu0 %v1471
  %v1561 = vpop.f32.mrf.mxu0
  %v1562 = vadd.f32 0.0, %v1561
  %v1563 = vpop.f32.mrf.mxu0
  %1564 = vmatprep.mubr.f32.mxu0 0.0
  %1565 = vmatmul.mubr.f32.gmra.mxu0 %v1473
  %v1566 = vpop.f32.mrf.mxu0
  %v1567 = vadd.f32 0.0, %v1566
  %v1568 = vpop.f32.mrf.mxu0
  %1569 = vdwg.mxu0
  %v1570 = vld [vmem:[%s5 + $0xe0] sm:$0xff]
  %v1571 = vld [vmem:[%s5 + $0xe8] sm:$0xff]
  %1572 = vmatprep.subr.mxu0 0.0
  %1573 = vmatpush1.msra.mxu0 0.0
  %1574 = vmatprep.subr.mxu0 0.0
  %1575 = vmatpush1.msra.mxu0 0.0
  %1576 = vmatprep.subr.mxu0 0.0
  %1577 = vmatpush1.msra.mxu0 0.0
  %1578 = vmatprep.subr.mxu0 0.0
  %1579 = vmatpush1.msra.mxu0 0.0
  %1580 = vmatprep.subr.mxu0 0.0
  %1581 = vmatpush1.msra.mxu0 0.0
  %1582 = vmatprep.subr.mxu0 0.0
  %1583 = vmatpush1.msra.mxu0 0.0
  %1584 = vmatprep.subr.mxu0 0.0
  %1585 = vmatpush1.msra.mxu0 0.0
  %1586 = vmatprep.subr.mxu0 0.0
  %1587 = vmatpush1.msra.mxu0 0.0
  %1588 = vmatprep.subr.mxu0 0.0
  %1589 = vmatpush1.msra.mxu0 0.0
  %1590 = vmatprep.subr.mxu0 0.0
  %1591 = vmatpush1.msra.mxu0 0.0
  %1592 = vmatprep.subr.mxu0 0.0
  %1593 = vmatpush1.msra.mxu0 0.0
  %1594 = vmatprep.subr.mxu0 0.0
  %1595 = vmatpush1.msra.mxu0 0.0
  %1596 = vmatprep.subr.mxu0 0.0
  %1597 = vmatpush1.msra.mxu0 0.0
  %1598 = vmatprep.subr.mxu0 0.0
  %1599 = vmatpush1.msra.mxu0 0.0
  %1600 = vmatprep.subr.mxu0 0.0
  %1601 = vmatpush1.msra.mxu0 %v1571
  %1602 = vmatprep.subr.mxu0 0.0
  %1603 = vmatpush1.msra.mxu0 %v1570
  %1604 = vmatprep.subr.mxu0 0.0
  %1605 = vmatpush2.msra.mxu0 0.0
  %1606 = vmatprep.subr.mxu0 0.0
  %1607 = vmatpush2.msra.mxu0 0.0
  %1608 = vmatprep.subr.mxu0 0.0
  %1609 = vmatpush2.msra.mxu0 0.0
  %1610 = vmatprep.subr.mxu0 0.0
  %1611 = vmatpush2.msra.mxu0 0.0
  %1612 = vmatprep.subr.mxu0 0.0
  %1613 = vmatpush2.msra.mxu0 0.0
  %1614 = vmatprep.subr.mxu0 0.0
  %1615 = vmatpush2.msra.mxu0 0.0
  %1616 = vmatprep.subr.mxu0 0.0
  %1617 = vmatpush2.msra.mxu0 0.0
  %1618 = vmatprep.subr.mxu0 0.0
  %1619 = vmatpush2.msra.mxu0 0.0
  %1620 = vmatprep.subr.mxu0 0.0
  %1621 = vmatpush2.msra.mxu0 0.0
  %1622 = vmatprep.subr.mxu0 0.0
  %1623 = vmatpush2.msra.mxu0 0.0
  %1624 = vmatprep.subr.mxu0 0.0
  %1625 = vmatpush2.msra.mxu0 0.0
  %1626 = vmatprep.subr.mxu0 0.0
  %1627 = vmatpush2.msra.mxu0 0.0
  %1628 = vmatprep.subr.mxu0 0.0
  %1629 = vmatpush2.msra.mxu0 0.0
  %1630 = vmatprep.subr.mxu0 0.0
  %1631 = vmatpush2.msra.mxu0 0.0
  %1632 = vmatprep.subr.mxu0 0.0
  %1633 = vmatpush2.msra.mxu0 0.0
  %1634 = vmatprep.subr.mxu0 0.0
  %1635 = vmatpush2.msra.mxu0 0.0
  %1636 = vmatprep.mubr.f32.mxu0 0.0
  %1637 = vmatmul.mubr.f32.gmra.mxu0 %v1463
  %v1638 = vpop.f32.mrf.mxu0
  %v1639 = vadd.f32 0.0, %v1638
  %v1640 = vpop.f32.mrf.mxu0
  %1641 = vmatprep.mubr.f32.mxu0 0.0
  %1642 = vmatmul.mubr.f32.gmra.mxu0 %v1465
  %v1643 = vpop.f32.mrf.mxu0
  %v1644 = vadd.f32 0.0, %v1643
  %v1645 = vpop.f32.mrf.mxu0
  %1646 = vmatprep.mubr.f32.mxu0 0.0
  %1647 = vmatmul.mubr.f32.gmra.mxu0 %v1467
  %v1648 = vpop.f32.mrf.mxu0
  %v1649 = vadd.f32 0.0, %v1648
  %v1650 = vpop.f32.mrf.mxu0
  %1651 = vmatprep.mubr.f32.mxu0 0.0
  %1652 = vmatmul.mubr.f32.gmra.mxu0 %v1469
  %v1653 = vpop.f32.mrf.mxu0
  %v1654 = vadd.f32 0.0, %v1653
  %v1655 = vpop.f32.mrf.mxu0
  %1656 = vmatprep.mubr.f32.mxu0 0.0
  %1657 = vmatmul.mubr.f32.gmra.mxu0 %v1471
  %v1658 = vpop.f32.mrf.mxu0
  %v1659 = vadd.f32 0.0, %v1658
  %v1660 = vpop.f32.mrf.mxu0
  %1661 = vmatprep.mubr.f32.mxu0 0.0
  %1662 = vmatmul.mubr.f32.gmra.mxu0 %v1473
  %v1663 = vpop.f32.mrf.mxu0
  %v1664 = vadd.f32 0.0, %v1663
  %v1665 = vpop.f32.mrf.mxu0
  %1666 = vdwg.mxu0
  %v1667 = vld [vmem:[%s5 + $0xf0] sm:$0x1]
  %v1668 = vld [vmem:[%s5 + $0xf8] sm:$0xff]
  %v1669 = vld [vmem:[%s5 + $0x100] sm:$0xff]
  %v1670 = vld [vmem:[%s5 + $0x108] sm:$0x1]
  %v1671 = vlaneseq
  %v1672 = vshrl.u32 %v1671, 7
  %v1673 = vsub.s32 0, %v1672
  %v1674 = vrot.slane %v1670, %v1673
  %v1675 = vadd.f32 %v1542, %v1664
  %v1676 = vlaneseq
  %v1677 = vshrl.u32 %v1676, 7
  %v1678 = vsub.s32 0, %v1677
  %v1679 = vrot.slane %v1667, %v1678
  %v1680 = vadd.f32 %v1675, %v1679
  %v1681 = vsel %vm1027, 0.0, 0
  %1683 = vmatprep.subr.mxu0 0.0
  %1684 = vmatpush1.msra.mxu0 0.0
  %1685 = vmatprep.subr.mxu0 0.0
  %1686 = vmatpush1.msra.mxu0 0.0
  %1687 = vmatprep.subr.mxu0 0.0
  %1688 = vmatpush1.msra.mxu0 0.0
  %1689 = vmatprep.subr.mxu0 0.0
  %1690 = vmatpush1.msra.mxu0 0.0
  %1691 = vmatprep.subr.mxu0 0.0
  %1692 = vmatpush1.msra.mxu0 0.0
  %1693 = vmatprep.subr.mxu0 0.0
  %1694 = vmatpush1.msra.mxu0 0.0
  %1695 = vmatprep.subr.mxu0 0.0
  %1696 = vmatpush1.msra.mxu0 0.0
  %1697 = vmatprep.subr.mxu0 0.0
  %1698 = vmatpush1.msra.mxu0 0.0
  %1699 = vmatprep.subr.mxu0 0.0
  %1700 = vmatpush1.msra.mxu0 0.0
  %1701 = vmatprep.subr.mxu0 0.0
  %1702 = vmatpush1.msra.mxu0 0.0
  %1703 = vmatprep.subr.mxu0 0.0
  %1704 = vmatpush1.msra.mxu0 0.0
  %1705 = vmatprep.subr.mxu0 0.0
  %1706 = vmatpush1.msra.mxu0 0.0
  %1707 = vmatprep.subr.mxu0 0.0
  %1708 = vmatpush1.msra.mxu0 0.0
  %1709 = vmatprep.subr.mxu0 0.0
  %1710 = vmatpush1.msra.mxu0 0.0
  %1711 = vmatprep.subr.mxu0 0.0
  %1712 = vmatpush1.msra.mxu0 %v1669
  %1713 = vmatprep.subr.mxu0 0.0
  %1714 = vmatpush1.msra.mxu0 %v1668
  %1715 = vmatprep.subr.mxu0 0.0
  %1716 = vmatpush2.msra.mxu0 0.0
  %1717 = vmatprep.subr.mxu0 0.0
  %1718 = vmatpush2.msra.mxu0 0.0
  %1719 = vmatprep.subr.mxu0 0.0
  %1720 = vmatpush2.msra.mxu0 0.0
  %1721 = vmatprep.subr.mxu0 0.0
  %1722 = vmatpush2.msra.mxu0 0.0
  %1723 = vmatprep.subr.mxu0 0.0
  %1724 = vmatpush2.msra.mxu0 0.0
  %1725 = vmatprep.subr.mxu0 0.0
  %1726 = vmatpush2.msra.mxu0 0.0
  %1727 = vmatprep.subr.mxu0 0.0
  %1728 = vmatpush2.msra.mxu0 0.0
  %1729 = vmatprep.subr.mxu0 0.0
  %1730 = vmatpush2.msra.mxu0 0.0
  %1731 = vmatprep.subr.mxu0 0.0
  %1732 = vmatpush2.msra.mxu0 0.0
  %1733 = vmatprep.subr.mxu0 0.0
  %1734 = vmatpush2.msra.mxu0 0.0
  %1735 = vmatprep.subr.mxu0 0.0
  %1736 = vmatpush2.msra.mxu0 0.0
  %1737 = vmatprep.subr.mxu0 0.0
  %1738 = vmatpush2.msra.mxu0 0.0
  %1739 = vmatprep.subr.mxu0 0.0
  %1740 = vmatpush2.msra.mxu0 0.0
  %1741 = vmatprep.subr.mxu0 0.0
  %1742 = vmatpush2.msra.mxu0 0.0
  %1743 = vmatprep.subr.mxu0 0.0
  %1744 = vmatpush2.msra.mxu0 0.0
  %1745 = vmatprep.subr.mxu0 0.0
  %1746 = vmatpush2.msra.mxu0 0.0
  %1747 = vmatprep.mubr.f32.mxu0 0.0
  %1748 = vmatmul.mubr.f32.gmra.mxu0 %v1681
  %v1749 = vpop.f32.mrf.mxu0
  %v1750 = vadd.f32 %v1674, %v1749
  %v1751 = vpop.f32.mrf.mxu0
  %1752 = vdwg.mxu0
  %v1753 = vadd.f32 %v1680, %v1750
  %v1754 = vxor.u32 %v1753, 2147483648
  %v1755 = vmul.f32 %v1754, 1.442695
  %v1756 = vpow.pop %v1755
  %v1757 = vadd.f32 %v1756, 1.0
  %v1758 = vrcp.pop %v1757
  %v1759 = vmul.f32 1.0, %v1758
  %1761 = vrot.lane.b32.xlu0 %v1750, 96
  %v1762 = vpop.permute.xlu0 %1761
  %v1764 = vmul.f32 %v1759, %v1762
  %1766 = vrot.lane.b32.xlu0 %v1764, 32
  %v1767 = vpop.permute.xlu0 %1766
  %v1769 = vadd.f32 %v1680, %v1767
  %v1770 = vtanh.pop %v1769
  %v1771 = vsub.f32 1.0, %v1759
  %1773 = vrot.lane.b32.xlu0 %v1770, 112
  %v1774 = vpop.permute.xlu0 %1773
  %v1776 = vmul.f32 %v1771, %v1774
  %v1777 = vmul.f32 %v1759, 0.0
  %v1778 = vadd.f32 %v1776, %v1777
  %v1779 = vadd.f32 %v1547, %v1659
  %v1780 = vadd.f32 %v1779, %v1679
  %1782 = vrot.lane.b32.xlu0 %v1778, 112
  %v1783 = vpop.permute.xlu0 %1782
  %v1784 = vsel %vm1027, %v1783, 0
  %1786 = vmatprep.subr.mxu0 0.0
  %1787 = vmatpush1.msra.mxu0 0.0
  %1788 = vmatprep.subr.mxu0 0.0
  %1789 = vmatpush1.msra.mxu0 0.0
  %1790 = vmatprep.subr.mxu0 0.0
  %1791 = vmatpush1.msra.mxu0 0.0
  %1792 = vmatprep.subr.mxu0 0.0
  %1793 = vmatpush1.msra.mxu0 0.0
  %1794 = vmatprep.subr.mxu0 0.0
  %1795 = vmatpush1.msra.mxu0 0.0
  %1796 = vmatprep.subr.mxu0 0.0
  %1797 = vmatpush1.msra.mxu0 0.0
  %1798 = vmatprep.subr.mxu0 0.0
  %1799 = vmatpush1.msra.mxu0 0.0
  %1800 = vmatprep.subr.mxu0 0.0
  %1801 = vmatpush1.msra.mxu0 0.0
  %1802 = vmatprep.subr.mxu0 0.0
  %1803 = vmatpush1.msra.mxu0 0.0
  %1804 = vmatprep.subr.mxu0 0.0
  %1805 = vmatpush1.msra.mxu0 0.0
  %1806 = vmatprep.subr.mxu0 0.0
  %1807 = vmatpush1.msra.mxu0 0.0
  %1808 = vmatprep.subr.mxu0 0.0
  %1809 = vmatpush1.msra.mxu0 0.0
  %1810 = vmatprep.subr.mxu0 0.0
  %1811 = vmatpush1.msra.mxu0 0.0
  %1812 = vmatprep.subr.mxu0 0.0
  %1813 = vmatpush1.msra.mxu0 0.0
  %1814 = vmatprep.subr.mxu0 0.0
  %1815 = vmatpush1.msra.mxu0 %v1669
  %1816 = vmatprep.subr.mxu0 0.0
  %1817 = vmatpush1.msra.mxu0 %v1668
  %1818 = vmatprep.subr.mxu0 0.0
  %1819 = vmatpush2.msra.mxu0 0.0
  %1820 = vmatprep.subr.mxu0 0.0
  %1821 = vmatpush2.msra.mxu0 0.0
  %1822 = vmatprep.subr.mxu0 0.0
  %1823 = vmatpush2.msra.mxu0 0.0
  %1824 = vmatprep.subr.mxu0 0.0
  %1825 = vmatpush2.msra.mxu0 0.0
  %1826 = vmatprep.subr.mxu0 0.0
  %1827 = vmatpush2.msra.mxu0 0.0
  %1828 = vmatprep.subr.mxu0 0.0
  %1829 = vmatpush2.msra.mxu0 0.0
  %1830 = vmatprep.subr.mxu0 0.0
  %1831 = vmatpush2.msra.mxu0 0.0
  %1832 = vmatprep.subr.mxu0 0.0
  %1833 = vmatpush2.msra.mxu0 0.0
  %1834 = vmatprep.subr.mxu0 0.0
  %1835 = vmatpush2.msra.mxu0 0.0
  %1836 = vmatprep.subr.mxu0 0.0
  %1837 = vmatpush2.msra.mxu0 0.0
  %1838 = vmatprep.subr.mxu0 0.0
  %1839 = vmatpush2.msra.mxu0 0.0
  %1840 = vmatprep.subr.mxu0 0.0
  %1841 = vmatpush2.msra.mxu0 0.0
  %1842 = vmatprep.subr.mxu0 0.0
  %1843 = vmatpush2.msra.mxu0 0.0
  %1844 = vmatprep.subr.mxu0 0.0
  %1845 = vmatpush2.msra.mxu0 0.0
  %1846 = vmatprep.subr.mxu0 0.0
  %1847 = vmatpush2.msra.mxu0 0.0
  %1848 = vmatprep.subr.mxu0 0.0
  %1849 = vmatpush2.msra.mxu0 0.0
  %1850 = vmatprep.mubr.f32.mxu0 0.0
  %1851 = vmatmul.mubr.f32.gmra.mxu0 %v1784
  %v1852 = vpop.f32.mrf.mxu0
  %v1853 = vadd.f32 %v1674, %v1852
  %v1854 = vpop.f32.mrf.mxu0
  %1855 = vdwg.mxu0
  %v1856 = vadd.f32 %v1780, %v1853
  %v1857 = vxor.u32 %v1856, 2147483648
  %v1858 = vmul.f32 %v1857, 1.442695
  %v1859 = vpow.pop %v1858
  %v1860 = vadd.f32 %v1859, 1.0
  %v1861 = vrcp.pop %v1860
  %v1862 = vmul.f32 1.0, %v1861
  %1864 = vrot.lane.b32.xlu0 %v1853, 96
  %v1865 = vpop.permute.xlu0 %1864
  %v1867 = vmul.f32 %v1862, %v1865
  %1869 = vrot.lane.b32.xlu0 %v1867, 32
  %v1870 = vpop.permute.xlu0 %1869
  %v1872 = vadd.f32 %v1780, %v1870
  %v1873 = vtanh.pop %v1872
  %v1874 = vsub.f32 1.0, %v1862
  %1876 = vrot.lane.b32.xlu0 %v1873, 112
  %v1877 = vpop.permute.xlu0 %1876
  %v1879 = vmul.f32 %v1874, %v1877
  %v1880 = vmul.f32 %v1862, %v1778
  %v1881 = vadd.f32 %v1879, %v1880
  %v1882 = vmax.f32 %v1778, %v1881
  %v1883 = vadd.f32 %v1552, %v1654
  %v1884 = vadd.f32 %v1883, %v1679
  %1886 = vrot.lane.b32.xlu0 %v1881, 112
  %v1887 = vpop.permute.xlu0 %1886
  %v1888 = vsel %vm1027, %v1887, 0
  %1890 = vmatprep.subr.mxu0 0.0
  %1891 = vmatpush1.msra.mxu0 0.0
  %1892 = vmatprep.subr.mxu0 0.0
  %1893 = vmatpush1.msra.mxu0 0.0
  %1894 = vmatprep.subr.mxu0 0.0
  %1895 = vmatpush1.msra.mxu0 0.0
  %1896 = vmatprep.subr.mxu0 0.0
  %1897 = vmatpush1.msra.mxu0 0.0
  %1898 = vmatprep.subr.mxu0 0.0
  %1899 = vmatpush1.msra.mxu0 0.0
  %1900 = vmatprep.subr.mxu0 0.0
  %1901 = vmatpush1.msra.mxu0 0.0
  %1902 = vmatprep.subr.mxu0 0.0
  %1903 = vmatpush1.msra.mxu0 0.0
  %1904 = vmatprep.subr.mxu0 0.0
  %1905 = vmatpush1.msra.mxu0 0.0
  %1906 = vmatprep.subr.mxu0 0.0
  %1907 = vmatpush1.msra.mxu0 0.0
  %1908 = vmatprep.subr.mxu0 0.0
  %1909 = vmatpush1.msra.mxu0 0.0
  %1910 = vmatprep.subr.mxu0 0.0
  %1911 = vmatpush1.msra.mxu0 0.0
  %1912 = vmatprep.subr.mxu0 0.0
  %1913 = vmatpush1.msra.mxu0 0.0
  %1914 = vmatprep.subr.mxu0 0.0
  %1915 = vmatpush1.msra.mxu0 0.0
  %1916 = vmatprep.subr.mxu0 0.0
  %1917 = vmatpush1.msra.mxu0 0.0
  %1918 = vmatprep.subr.mxu0 0.0
  %1919 = vmatpush1.msra.mxu0 %v1669
  %1920 = vmatprep.subr.mxu0 0.0
  %1921 = vmatpush1.msra.mxu0 %v1668
  %1922 = vmatprep.subr.mxu0 0.0
  %1923 = vmatpush2.msra.mxu0 0.0
  %1924 = vmatprep.subr.mxu0 0.0
  %1925 = vmatpush2.msra.mxu0 0.0
  %1926 = vmatprep.subr.mxu0 0.0
  %1927 = vmatpush2.msra.mxu0 0.0
  %1928 = vmatprep.subr.mxu0 0.0
  %1929 = vmatpush2.msra.mxu0 0.0
  %1930 = vmatprep.subr.mxu0 0.0
  %1931 = vmatpush2.msra.mxu0 0.0
  %1932 = vmatprep.subr.mxu0 0.0
  %1933 = vmatpush2.msra.mxu0 0.0
  %1934 = vmatprep.subr.mxu0 0.0
  %1935 = vmatpush2.msra.mxu0 0.0
  %1936 = vmatprep.subr.mxu0 0.0
  %1937 = vmatpush2.msra.mxu0 0.0
  %1938 = vmatprep.subr.mxu0 0.0
  %1939 = vmatpush2.msra.mxu0 0.0
  %1940 = vmatprep.subr.mxu0 0.0
  %1941 = vmatpush2.msra.mxu0 0.0
  %1942 = vmatprep.subr.mxu0 0.0
  %1943 = vmatpush2.msra.mxu0 0.0
  %1944 = vmatprep.subr.mxu0 0.0
  %1945 = vmatpush2.msra.mxu0 0.0
  %1946 = vmatprep.subr.mxu0 0.0
  %1947 = vmatpush2.msra.mxu0 0.0
  %1948 = vmatprep.subr.mxu0 0.0
  %1949 = vmatpush2.msra.mxu0 0.0
  %1950 = vmatprep.subr.mxu0 0.0
  %1951 = vmatpush2.msra.mxu0 0.0
  %1952 = vmatprep.subr.mxu0 0.0
  %1953 = vmatpush2.msra.mxu0 0.0
  %1954 = vmatprep.mubr.f32.mxu0 0.0
  %1955 = vmatmul.mubr.f32.gmra.mxu0 %v1888
  %v1956 = vpop.f32.mrf.mxu0
  %v1957 = vadd.f32 %v1674, %v1956
  %v1958 = vpop.f32.mrf.mxu0
  %1959 = vdwg.mxu0
  %v1960 = vadd.f32 %v1884, %v1957
  %v1961 = vxor.u32 %v1960, 2147483648
  %v1962 = vmul.f32 %v1961, 1.442695
  %v1963 = vpow.pop %v1962
  %v1964 = vadd.f32 %v1963, 1.0
  %v1965 = vrcp.pop %v1964
  %v1966 = vmul.f32 1.0, %v1965
  %1968 = vrot.lane.b32.xlu0 %v1957, 96
  %v1969 = vpop.permute.xlu0 %1968
  %v1971 = vmul.f32 %v1966, %v1969
  %1973 = vrot.lane.b32.xlu0 %v1971, 32
  %v1974 = vpop.permute.xlu0 %1973
  %v1976 = vadd.f32 %v1884, %v1974
  %v1977 = vtanh.pop %v1976
  %v1978 = vsub.f32 1.0, %v1966
  %1980 = vrot.lane.b32.xlu0 %v1977, 112
  %v1981 = vpop.permute.xlu0 %1980
  %v1983 = vmul.f32 %v1978, %v1981
  %v1984 = vmul.f32 %v1966, %v1881
  %v1985 = vadd.f32 %v1983, %v1984
  %v1986 = vmax.f32 %v1882, %v1985
  %v1987 = vadd.f32 %v1557, %v1649
  %v1988 = vadd.f32 %v1987, %v1679
  %1990 = vrot.lane.b32.xlu0 %v1985, 112
  %v1991 = vpop.permute.xlu0 %1990
  %v1992 = vsel %vm1027, %v1991, 0
  %1994 = vmatprep.subr.mxu0 0.0
  %1995 = vmatpush1.msra.mxu0 0.0
  %1996 = vmatprep.subr.mxu0 0.0
  %1997 = vmatpush1.msra.mxu0 0.0
  %1998 = vmatprep.subr.mxu0 0.0
  %1999 = vmatpush1.msra.mxu0 0.0
  %2000 = vmatprep.subr.mxu0 0.0
  %2001 = vmatpush1.msra.mxu0 0.0
  %2002 = vmatprep.subr.mxu0 0.0
  %2003 = vmatpush1.msra.mxu0 0.0
  %2004 = vmatprep.subr.mxu0 0.0
  %2005 = vmatpush1.msra.mxu0 0.0
  %2006 = vmatprep.subr.mxu0 0.0
  %2007 = vmatpush1.msra.mxu0 0.0
  %2008 = vmatprep.subr.mxu0 0.0
  %2009 = vmatpush1.msra.mxu0 0.0
  %2010 = vmatprep.subr.mxu0 0.0
  %2011 = vmatpush1.msra.mxu0 0.0
  %2012 = vmatprep.subr.mxu0 0.0
  %2013 = vmatpush1.msra.mxu0 0.0
  %2014 = vmatprep.subr.mxu0 0.0
  %2015 = vmatpush1.msra.mxu0 0.0
  %2016 = vmatprep.subr.mxu0 0.0
  %2017 = vmatpush1.msra.mxu0 0.0
  %2018 = vmatprep.subr.mxu0 0.0
  %2019 = vmatpush1.msra.mxu0 0.0
  %2020 = vmatprep.subr.mxu0 0.0
  %2021 = vmatpush1.msra.mxu0 0.0
  %2022 = vmatprep.subr.mxu0 0.0
  %2023 = vmatpush1.msra.mxu0 %v1669
  %2024 = vmatprep.subr.mxu0 0.0
  %2025 = vmatpush1.msra.mxu0 %v1668
  %2026 = vmatprep.subr.mxu0 0.0
  %2027 = vmatpush2.msra.mxu0 0.0
  %2028 = vmatprep.subr.mxu0 0.0
  %2029 = vmatpush2.msra.mxu0 0.0
  %2030 = vmatprep.subr.mxu0 0.0
  %2031 = vmatpush2.msra.mxu0 0.0
  %2032 = vmatprep.subr.mxu0 0.0
  %2033 = vmatpush2.msra.mxu0 0.0
  %2034 = vmatprep.subr.mxu0 0.0
  %2035 = vmatpush2.msra.mxu0 0.0
  %2036 = vmatprep.subr.mxu0 0.0
  %2037 = vmatpush2.msra.mxu0 0.0
  %2038 = vmatprep.subr.mxu0 0.0
  %2039 = vmatpush2.msra.mxu0 0.0
  %2040 = vmatprep.subr.mxu0 0.0
  %2041 = vmatpush2.msra.mxu0 0.0
  %2042 = vmatprep.subr.mxu0 0.0
  %2043 = vmatpush2.msra.mxu0 0.0
  %2044 = vmatprep.subr.mxu0 0.0
  %2045 = vmatpush2.msra.mxu0 0.0
  %2046 = vmatprep.subr.mxu0 0.0
  %2047 = vmatpush2.msra.mxu0 0.0
  %2048 = vmatprep.subr.mxu0 0.0
  %2049 = vmatpush2.msra.mxu0 0.0
  %2050 = vmatprep.subr.mxu0 0.0
  %2051 = vmatpush2.msra.mxu0 0.0
  %2052 = vmatprep.subr.mxu0 0.0
  %2053 = vmatpush2.msra.mxu0 0.0
  %2054 = vmatprep.subr.mxu0 0.0
  %2055 = vmatpush2.msra.mxu0 0.0
  %2056 = vmatprep.subr.mxu0 0.0
  %2057 = vmatpush2.msra.mxu0 0.0
  %2058 = vmatprep.mubr.f32.mxu0 0.0
  %2059 = vmatmul.mubr.f32.gmra.mxu0 %v1992
  %v2060 = vpop.f32.mrf.mxu0
  %v2061 = vadd.f32 %v1674, %v2060
  %v2062 = vpop.f32.mrf.mxu0
  %2063 = vdwg.mxu0
  %v2064 = vadd.f32 %v1988, %v2061
  %v2065 = vxor.u32 %v2064, 2147483648
  %v2066 = vmul.f32 %v2065, 1.442695
  %v2067 = vpow.pop %v2066
  %v2068 = vadd.f32 %v2067, 1.0
  %v2069 = vrcp.pop %v2068
  %v2070 = vmul.f32 1.0, %v2069
  %2072 = vrot.lane.b32.xlu0 %v2061, 96
  %v2073 = vpop.permute.xlu0 %2072
  %v2075 = vmul.f32 %v2070, %v2073
  %2077 = vrot.lane.b32.xlu0 %v2075, 32
  %v2078 = vpop.permute.xlu0 %2077
  %v2080 = vadd.f32 %v1988, %v2078
  %v2081 = vtanh.pop %v2080
  %v2082 = vsub.f32 1.0, %v2070
  %2084 = vrot.lane.b32.xlu0 %v2081, 112
  %v2085 = vpop.permute.xlu0 %2084
  %v2087 = vmul.f32 %v2082, %v2085
  %v2088 = vmul.f32 %v2070, %v1985
  %v2089 = vadd.f32 %v2087, %v2088
  %v2090 = vmax.f32 %v1986, %v2089
  %v2091 = vadd.f32 %v1562, %v1644
  %v2092 = vadd.f32 %v2091, %v1679
  %2094 = vrot.lane.b32.xlu0 %v2089, 112
  %v2095 = vpop.permute.xlu0 %2094
  %v2096 = vsel %vm1027, %v2095, 0
  %2098 = vmatprep.subr.mxu0 0.0
  %2099 = vmatpush1.msra.mxu0 0.0
  %2100 = vmatprep.subr.mxu0 0.0
  %2101 = vmatpush1.msra.mxu0 0.0
  %2102 = vmatprep.subr.mxu0 0.0
  %2103 = vmatpush1.msra.mxu0 0.0
  %2104 = vmatprep.subr.mxu0 0.0
  %2105 = vmatpush1.msra.mxu0 0.0
  %2106 = vmatprep.subr.mxu0 0.0
  %2107 = vmatpush1.msra.mxu0 0.0
  %2108 = vmatprep.subr.mxu0 0.0
  %2109 = vmatpush1.msra.mxu0 0.0
  %2110 = vmatprep.subr.mxu0 0.0
  %2111 = vmatpush1.msra.mxu0 0.0
  %2112 = vmatprep.subr.mxu0 0.0
  %2113 = vmatpush1.msra.mxu0 0.0
  %2114 = vmatprep.subr.mxu0 0.0
  %2115 = vmatpush1.msra.mxu0 0.0
  %2116 = vmatprep.subr.mxu0 0.0
  %2117 = vmatpush1.msra.mxu0 0.0
  %2118 = vmatprep.subr.mxu0 0.0
  %2119 = vmatpush1.msra.mxu0 0.0
  %2120 = vmatprep.subr.mxu0 0.0
  %2121 = vmatpush1.msra.mxu0 0.0
  %2122 = vmatprep.subr.mxu0 0.0
  %2123 = vmatpush1.msra.mxu0 0.0
  %2124 = vmatprep.subr.mxu0 0.0
  %2125 = vmatpush1.msra.mxu0 0.0
  %2126 = vmatprep.subr.mxu0 0.0
  %2127 = vmatpush1.msra.mxu0 %v1669
  %2128 = vmatprep.subr.mxu0 0.0
  %2129 = vmatpush1.msra.mxu0 %v1668
  %2130 = vmatprep.subr.mxu0 0.0
  %2131 = vmatpush2.msra.mxu0 0.0
  %2132 = vmatprep.subr.mxu0 0.0
  %2133 = vmatpush2.msra.mxu0 0.0
  %2134 = vmatprep.subr.mxu0 0.0
  %2135 = vmatpush2.msra.mxu0 0.0
  %2136 = vmatprep.subr.mxu0 0.0
  %2137 = vmatpush2.msra.mxu0 0.0
  %2138 = vmatprep.subr.mxu0 0.0
  %2139 = vmatpush2.msra.mxu0 0.0
  %2140 = vmatprep.subr.mxu0 0.0
  %2141 = vmatpush2.msra.mxu0 0.0
  %2142 = vmatprep.subr.mxu0 0.0
  %2143 = vmatpush2.msra.mxu0 0.0
  %2144 = vmatprep.subr.mxu0 0.0
  %2145 = vmatpush2.msra.mxu0 0.0
  %2146 = vmatprep.subr.mxu0 0.0
  %2147 = vmatpush2.msra.mxu0 0.0
  %2148 = vmatprep.subr.mxu0 0.0
  %2149 = vmatpush2.msra.mxu0 0.0
  %2150 = vmatprep.subr.mxu0 0.0
  %2151 = vmatpush2.msra.mxu0 0.0
  %2152 = vmatprep.subr.mxu0 0.0
  %2153 = vmatpush2.msra.mxu0 0.0
  %2154 = vmatprep.subr.mxu0 0.0
  %2155 = vmatpush2.msra.mxu0 0.0
  %2156 = vmatprep.subr.mxu0 0.0
  %2157 = vmatpush2.msra.mxu0 0.0
  %2158 = vmatprep.subr.mxu0 0.0
  %2159 = vmatpush2.msra.mxu0 0.0
  %2160 = vmatprep.subr.mxu0 0.0
  %2161 = vmatpush2.msra.mxu0 0.0
  %2162 = vmatprep.mubr.f32.mxu0 0.0
  %2163 = vmatmul.mubr.f32.gmra.mxu0 %v2096
  %v2164 = vpop.f32.mrf.mxu0
  %v2165 = vadd.f32 %v1674, %v2164
  %v2166 = vpop.f32.mrf.mxu0
  %2167 = vdwg.mxu0
  %v2168 = vadd.f32 %v2092, %v2165
  %v2169 = vxor.u32 %v2168, 2147483648
  %v2170 = vmul.f32 %v2169, 1.442695
  %v2171 = vpow.pop %v2170
  %v2172 = vadd.f32 %v2171, 1.0
  %v2173 = vrcp.pop %v2172
  %v2174 = vmul.f32 1.0, %v2173
  %2176 = vrot.lane.b32.xlu0 %v2165, 96
  %v2177 = vpop.permute.xlu0 %2176
  %v2179 = vmul.f32 %v2174, %v2177
  %2181 = vrot.lane.b32.xlu0 %v2179, 32
  %v2182 = vpop.permute.xlu0 %2181
  %v2184 = vadd.f32 %v2092, %v2182
  %v2185 = vtanh.pop %v2184
  %v2186 = vsub.f32 1.0, %v2174
  %2188 = vrot.lane.b32.xlu0 %v2185, 112
  %v2189 = vpop.permute.xlu0 %2188
  %v2191 = vmul.f32 %v2186, %v2189
  %v2192 = vmul.f32 %v2174, %v2089
  %v2193 = vadd.f32 %v2191, %v2192
  %v2194 = vmax.f32 %v2090, %v2193
  %v2195 = vadd.f32 %v1567, %v1639
  %v2196 = vadd.f32 %v2195, %v1679
  %2198 = vrot.lane.b32.xlu0 %v2193, 112
  %v2199 = vpop.permute.xlu0 %2198
  %v2200 = vsel %vm1027, %v2199, 0
  %2202 = vmatprep.subr.mxu0 0.0
  %2203 = vmatpush1.msra.mxu0 0.0
  %2204 = vmatprep.subr.mxu0 0.0
  %2205 = vmatpush1.msra.mxu0 0.0
  %2206 = vmatprep.subr.mxu0 0.0
  %2207 = vmatpush1.msra.mxu0 0.0
  %2208 = vmatprep.subr.mxu0 0.0
  %2209 = vmatpush1.msra.mxu0 0.0
  %2210 = vmatprep.subr.mxu0 0.0
  %2211 = vmatpush1.msra.mxu0 0.0
  %2212 = vmatprep.subr.mxu0 0.0
  %2213 = vmatpush1.msra.mxu0 0.0
  %2214 = vmatprep.subr.mxu0 0.0
  %2215 = vmatpush1.msra.mxu0 0.0
  %2216 = vmatprep.subr.mxu0 0.0
  %2217 = vmatpush1.msra.mxu0 0.0
  %2218 = vmatprep.subr.mxu0 0.0
  %2219 = vmatpush1.msra.mxu0 0.0
  %2220 = vmatprep.subr.mxu0 0.0
  %2221 = vmatpush1.msra.mxu0 0.0
  %2222 = vmatprep.subr.mxu0 0.0
  %2223 = vmatpush1.msra.mxu0 0.0
  %2224 = vmatprep.subr.mxu0 0.0
  %2225 = vmatpush1.msra.mxu0 0.0
  %2226 = vmatprep.subr.mxu0 0.0
  %2227 = vmatpush1.msra.mxu0 0.0
  %2228 = vmatprep.subr.mxu0 0.0
  %2229 = vmatpush1.msra.mxu0 0.0
  %2230 = vmatprep.subr.mxu0 0.0
  %2231 = vmatpush1.msra.mxu0 %v1669
  %2232 = vmatprep.subr.mxu0 0.0
  %2233 = vmatpush1.msra.mxu0 %v1668
  %2234 = vmatprep.subr.mxu0 0.0
  %2235 = vmatpush2.msra.mxu0 0.0
  %2236 = vmatprep.subr.mxu0 0.0
  %2237 = vmatpush2.msra.mxu0 0.0
  %2238 = vmatprep.subr.mxu0 0.0
  %2239 = vmatpush2.msra.mxu0 0.0
  %2240 = vmatprep.subr.mxu0 0.0
  %2241 = vmatpush2.msra.mxu0 0.0
  %2242 = vmatprep.subr.mxu0 0.0
  %2243 = vmatpush2.msra.mxu0 0.0
  %2244 = vmatprep.subr.mxu0 0.0
  %2245 = vmatpush2.msra.mxu0 0.0
  %2246 = vmatprep.subr.mxu0 0.0
  %2247 = vmatpush2.msra.mxu0 0.0
  %2248 = vmatprep.subr.mxu0 0.0
  %2249 = vmatpush2.msra.mxu0 0.0
  %2250 = vmatprep.subr.mxu0 0.0
  %2251 = vmatpush2.msra.mxu0 0.0
  %2252 = vmatprep.subr.mxu0 0.0
  %2253 = vmatpush2.msra.mxu0 0.0
  %2254 = vmatprep.subr.mxu0 0.0
  %2255 = vmatpush2.msra.mxu0 0.0
  %2256 = vmatprep.subr.mxu0 0.0
  %2257 = vmatpush2.msra.mxu0 0.0
  %2258 = vmatprep.subr.mxu0 0.0
  %2259 = vmatpush2.msra.mxu0 0.0
  %2260 = vmatprep.subr.mxu0 0.0
  %2261 = vmatpush2.msra.mxu0 0.0
  %2262 = vmatprep.subr.mxu0 0.0
  %2263 = vmatpush2.msra.mxu0 0.0
  %2264 = vmatprep.subr.mxu0 0.0
  %2265 = vmatpush2.msra.mxu0 0.0
  %2266 = vmatprep.mubr.f32.mxu0 0.0
  %2267 = vmatmul.mubr.f32.gmra.mxu0 %v2200
  %v2268 = vpop.f32.mrf.mxu0
  %v2269 = vadd.f32 %v1674, %v2268
  %v2270 = vpop.f32.mrf.mxu0
  %2271 = vdwg.mxu0
  %v2272 = vadd.f32 %v2196, %v2269
  %v2273 = vxor.u32 %v2272, 2147483648
  %v2274 = vmul.f32 %v2273, 1.442695
  %v2275 = vpow.pop %v2274
  %v2276 = vadd.f32 %v2275, 1.0
  %v2277 = vrcp.pop %v2276
  %v2278 = vmul.f32 1.0, %v2277
  %2280 = vrot.lane.b32.xlu0 %v2269, 96
  %v2281 = vpop.permute.xlu0 %2280
  %v2283 = vmul.f32 %v2278, %v2281
  %2285 = vrot.lane.b32.xlu0 %v2283, 32
  %v2286 = vpop.permute.xlu0 %2285
  %v2288 = vadd.f32 %v2196, %v2286
  %v2289 = vtanh.pop %v2288
  %v2290 = vsub.f32 1.0, %v2278
  %2292 = vrot.lane.b32.xlu0 %v2289, 112
  %v2293 = vpop.permute.xlu0 %2292
  %v2295 = vmul.f32 %v2290, %v2293
  %v2296 = vmul.f32 %v2278, %v2193
  %v2297 = vadd.f32 %v2295, %v2296
  %v2298 = vmax.f32 %v2194, %v2297
  %v2299 = vld [vmem:[%s0] sm:$0xff]
  %v2300 = vld [vmem:[%s0 + $0x8] sm:$0xff]
  %v2301 = vld [vmem:[%s0 + $0x10] sm:$0xff]
  %v2302 = vld [vmem:[%s0 + $0x18] sm:$0xff]
  %v2303 = vld [vmem:[%s0 + $0x20] sm:$0xff]
  %v2304 = vld [vmem:[%s0 + $0x28] sm:$0xff]
  %v2305 = vld [vmem:[%s0 + $0x30] sm:$0xff]
  %v2306 = vld [vmem:[%s0 + $0x38] sm:$0xff]
  %v2307 = vsel %vm1027, %v2299, -inf
  %v2308 = vsel %vm1027, %v2300, -inf
  %v2309 = vsel %vm1027, %v2301, -inf
  %v2310 = vsel %vm1027, %v2302, -inf
  %v2311 = vsel %vm1027, %v2303, -inf
  %v2312 = vmax.f32 %v2307, %v2311
  %v2313 = vsel %vm1027, %v2304, -inf
  %v2314 = vmax.f32 %v2308, %v2313
  %v2315 = vsel %vm1027, %v2305, -inf
  %v2316 = vmax.f32 %v2309, %v2315
  %v2317 = vsel %vm1027, %v2306, -inf
  %v2318 = vmax.f32 %v2310, %v2317
  %v2319 = vmax.f32 %v2312, %v2314
  %v2320 = vmax.f32 %v2316, %v2318
  %v2321 = vmax.f32 %v2319, %v2320
  %v2322 = vld [vmem:[%s3] sm:$0xff]
  %s2323 = scalar_lea.vmem %s3, 8
  %v2324 = vld [vmem:[%s2323] sm:$0xff]
  %s2325 = scalar_lea.vmem %s3, 16
  %v2326 = vld [vmem:[%s2325] sm:$0xff]
  %s2327 = scalar_lea.vmem %s3, 24
  %v2328 = vld [vmem:[%s2327] sm:$0xff]
  %s2329 = scalar_lea.vmem %s3, 32
  %v2330 = vld [vmem:[%s2329] sm:$0xff]
  %s2331 = scalar_lea.vmem %s3, 40
  %v2332 = vld [vmem:[%s2331] sm:$0xff]
  %s2333 = scalar_lea.vmem %s3, 48
  %v2334 = vld [vmem:[%s2333] sm:$0xff]
  %s2335 = scalar_lea.vmem %s3, 56
  %v2336 = vld [vmem:[%s2335] sm:$0xff]
  %s2337 = scalar_lea.vmem %s3, 64
  %v2338 = vld [vmem:[%s2337] sm:$0xff]
  %s2339 = scalar_lea.vmem %s3, 72
  %v2340 = vld [vmem:[%s2339] sm:$0xff]
  %v2341 = vmul.f32 %v2322, %v2321
  %v2342 = vmul.f32 %v2322, %v2328
  %v2343 = vmul.f32 %v2322, %v2334
  %v2344 = vmul.f32 %v2330, %v2338
  %2346 = vrot.lane.b32.xlu0 %v2321, 16
  %v2347 = vpop.permute.xlu0 %2346
  %2350 = vrot.lane.b32.xlu0 %v2324, 32
  %v2351 = vpop.permute.xlu0 %2350
  %2354 = vrot.lane.b32.xlu0 %v2326, 48
  %v2355 = vpop.permute.xlu0 %2354
  %2358 = vrot.lane.b32.xlu0 %v2328, 64
  %v2359 = vpop.permute.xlu0 %2358
  %2362 = vrot.lane.b32.xlu0 %v2330, 80
  %v2363 = vpop.permute.xlu0 %2362
  %2366 = vrot.lane.b32.xlu0 %v2332, 96
  %v2367 = vpop.permute.xlu0 %2366
  %v2369 = vsel %vm1027, %v2322, %v2347
  %v2370 = vsel %vm168, %v2369, %v2351
  %vm2371 = vcmask 392192
  %v2372 = vsel %vm2371, %v2370, %v2355
  %v2373 = vsel %vm54, %v2372, %v2359
  %vm2374 = vcmask 654336
  %v2375 = vsel %vm2374, %v2373, %v2363
  %vm2376 = vcmask 785408
  %v2377 = vsel %vm2376, %v2375, %v2367
  %vm2378 = vcmask 916480
  %v2379 = vsel %vm2378, %v2377, 0.0
  %2380 = vadd.xlane.f32.xlu0 %v2379
  %v2381 = vpop.xlane.xlu0 %2380
  %v2382 = vmul.f32 %v2381, %v2381
  %v2383 = vmul.f32 %v2377, %v2377
  %v2384 = vsel %vm2378, %v2383, 0.0
  %2385 = vadd.xlane.f32.xlu0 %v2384
  %v2386 = vpop.xlane.xlu0 %2385
  %v2387 = vsub.f32 %v2382, %v2386
  %v2388 = vmul.f32 %v2387, 0.5
  %2390 = vrot.lane.b32.xlu0 %v2341, 96
  %v2391 = vpop.permute.xlu0 %2390
  %2394 = vrot.lane.b32.xlu0 %v2342, 112
  %v2395 = vpop.permute.xlu0 %2394
  %2398 = vrot.lane.b32.xlu0 %v2334, 32
  %v2399 = vpop.permute.xlu0 %2398
  %2402 = vrot.lane.b32.xlu0 %v2336, 48
  %v2403 = vpop.permute.xlu0 %2402
  %2406 = vrot.lane.b32.xlu0 %v2338, 64
  %v2407 = vpop.permute.xlu0 %2406
  %2410 = vrot.lane.b32.xlu0 %v2343, 80
  %v2411 = vpop.permute.xlu0 %2410
  %2414 = vrot.lane.b32.xlu0 %v2344, 96
  %v2415 = vpop.permute.xlu0 %2414
  %2418 = vrot.lane.b32.xlu0 %v1448, 80
  %v2419 = vpop.permute.xlu0 %2418
  %v2421 = vsel %vm2376, %v2375, %v2391
  %v2422 = vsel %vm2378, %v2421, %v2395
  %v2423 = vsel %vm1027, %v2332, %v2298
  %v2424 = vsel %vm168, %v2423, %v2399
  %v2425 = vsel %vm2371, %v2424, %v2403
  %v2426 = vsel %vm54, %v2425, %v2407
  %v2427 = vsel %vm2374, %v2426, %v2411
  %v2428 = vsel %vm2376, %v2427, %v2415
  %v2429 = vsel %vm2378, %v2428, %v2419
  %v2430 = vld [vmem:[%s6] sm:$0xff]
  %v2431 = vld [vmem:[%s6 + $0x8] sm:$0xff]
  %v2432 = vld [vmem:[%s6 + $0x10] sm:$0xff]
  %v2433 = vld [vmem:[%s6 + $0x18] sm:$0xff]
  %v2434 = vld [vmem:[%s6 + $0x20] sm:$0xff]
  %v2435 = vld [vmem:[%s6 + $0x28] sm:$0xff]
  %v2436 = vld [vmem:[%s6 + $0x30] sm:$0xff]
  %v2437 = vld [vmem:[%s6 + $0x38] sm:$0xff]
  %v2438 = vld [vmem:[%s6 + $0x40] sm:$0xff]
  %v2439 = vld [vmem:[%s6 + $0x48] sm:$0xff]
  %v2440 = vld [vmem:[%s6 + $0x50] sm:$0xff]
  %v2441 = vld [vmem:[%s6 + $0x58] sm:$0xff]
  %v2442 = vld [vmem:[%s6 + $0x60] sm:$0xff]
  %v2443 = vld [vmem:[%s6 + $0x68] sm:$0xff]
  %v2444 = vld [vmem:[%s6 + $0x70] sm:$0xff]
  %v2445 = vld [vmem:[%s6 + $0x78] sm:$0xff]
  %v2446 = vld [vmem:[%s6 + $0x80] sm:$0xff]
  %v2447 = vld [vmem:[%s6 + $0x88] sm:$0xff]
  %v2448 = vld [vmem:[%s6 + $0x90] sm:$0xff]
  %v2449 = vld [vmem:[%s6 + $0x98] sm:$0xff]
  %v2450 = vld [vmem:[%s6 + $0xa0] sm:$0xff]
  %v2451 = vld [vmem:[%s6 + $0xa8] sm:$0xff]
  %v2452 = vld [vmem:[%s6 + $0xb0] sm:$0xff]
  %v2453 = vld [vmem:[%s6 + $0xb8] sm:$0xff]
  %v2454 = vld [vmem:[%s6 + $0xc0] sm:$0xff]
  %v2455 = vld [vmem:[%s6 + $0xc8] sm:$0xff]
  %v2456 = vld [vmem:[%s6 + $0xd0] sm:$0xff]
  %v2457 = vld [vmem:[%s6 + $0xd8] sm:$0xff]
  %v2458 = vld [vmem:[%s6 + $0xe0] sm:$0xff]
  %v2459 = vld [vmem:[%s6 + $0xe8] sm:$0xff]
  %v2460 = vld [vmem:[%s6 + $0xf0] sm:$0xff]
  %v2461 = vld [vmem:[%s6 + $0xf8] sm:$0xff]
  %v2462 = vld [vmem:[%s6 + $0x100] sm:$0xff]
  %v2463 = vld [vmem:[%s6 + $0x108] sm:$0xff]
  %v2464 = vld [vmem:[%s6 + $0x110] sm:$0x1]
  %v2465 = vlaneseq
  %v2466 = vshrl.u32 %v2465, 7
  %v2467 = vsub.s32 0, %v2466
  %v2468 = vrot.slane %v2464, %v2467
  %v2470 = vsel %vm1027, %v2340, 0
  %2472 = vmatprep.subr.mxu0 0.0
  %2473 = vmatpush1.msra.mxu0 %v2445
  %2474 = vmatprep.subr.mxu0 0.0
  %2475 = vmatpush1.msra.mxu0 %v2444
  %2476 = vmatprep.subr.mxu0 0.0
  %2477 = vmatpush1.msra.mxu0 %v2443
  %2478 = vmatprep.subr.mxu0 0.0
  %2479 = vmatpush1.msra.mxu0 %v2442
  %2480 = vmatprep.subr.mxu0 0.0
  %2481 = vmatpush1.msra.mxu0 %v2441
  %2482 = vmatprep.subr.mxu0 0.0
  %2483 = vmatpush1.msra.mxu0 %v2440
  %2484 = vmatprep.subr.mxu0 0.0
  %2485 = vmatpush1.msra.mxu0 %v2439
  %2486 = vmatprep.subr.mxu0 0.0
  %2487 = vmatpush1.msra.mxu0 %v2438
  %2488 = vmatprep.subr.mxu0 0.0
  %2489 = vmatpush1.msra.mxu0 %v2437
  %2490 = vmatprep.subr.mxu0 0.0
  %2491 = vmatpush1.msra.mxu0 %v2436
  %2492 = vmatprep.subr.mxu0 0.0
  %2493 = vmatpush1.msra.mxu0 %v2435
  %2494 = vmatprep.subr.mxu0 0.0
  %2495 = vmatpush1.msra.mxu0 %v2434
  %2496 = vmatprep.subr.mxu0 0.0
  %2497 = vmatpush1.msra.mxu0 %v2433
  %2498 = vmatprep.subr.mxu0 0.0
  %2499 = vmatpush1.msra.mxu0 %v2432
  %2500 = vmatprep.subr.mxu0 0.0
  %2501 = vmatpush1.msra.mxu0 %v2431
  %2502 = vmatprep.subr.mxu0 0.0
  %2503 = vmatpush1.msra.mxu0 %v2430
  %2504 = vmatprep.subr.mxu0 0.0
  %2505 = vmatpush2.msra.mxu0 %v2461
  %2506 = vmatprep.subr.mxu0 0.0
  %2507 = vmatpush2.msra.mxu0 %v2460
  %2508 = vmatprep.subr.mxu0 0.0
  %2509 = vmatpush2.msra.mxu0 %v2459
  %2510 = vmatprep.subr.mxu0 0.0
  %2511 = vmatpush2.msra.mxu0 %v2458
  %2512 = vmatprep.subr.mxu0 0.0
  %2513 = vmatpush2.msra.mxu0 %v2457
  %2514 = vmatprep.subr.mxu0 0.0
  %2515 = vmatpush2.msra.mxu0 %v2456
  %2516 = vmatprep.subr.mxu0 0.0
  %2517 = vmatpush2.msra.mxu0 %v2455
  %2518 = vmatprep.subr.mxu0 0.0
  %2519 = vmatpush2.msra.mxu0 %v2454
  %2520 = vmatprep.subr.mxu0 0.0
  %2521 = vmatpush2.msra.mxu0 %v2453
  %2522 = vmatprep.subr.mxu0 0.0
  %2523 = vmatpush2.msra.mxu0 %v2452
  %2524 = vmatprep.subr.mxu0 0.0
  %2525 = vmatpush2.msra.mxu0 %v2451
  %2526 = vmatprep.subr.mxu0 0.0
  %2527 = vmatpush2.msra.mxu0 %v2450
  %2528 = vmatprep.subr.mxu0 0.0
  %2529 = vmatpush2.msra.mxu0 %v2449
  %2530 = vmatprep.subr.mxu0 0.0
  %2531 = vmatpush2.msra.mxu0 %v2448
  %2532 = vmatprep.subr.mxu0 0.0
  %2533 = vmatpush2.msra.mxu0 %v2447
  %2534 = vmatprep.subr.mxu0 0.0
  %2535 = vmatpush2.msra.mxu0 %v2446
  %2536 = vmatprep.mubr.f32.mxu0 %v2429
  %2537 = vmatmul.mubr.f32.gmra.mxu0 %v2422
  %v2538 = vpop.f32.mrf.mxu0
  %v2539 = vadd.f32 %v2468, %v2538
  %v2540 = vpop.f32.mrf.mxu0
  %2541 = vdwg.mxu0
  %2542 = vmatprep.subr.mxu0 0.0
  %2543 = vmatpush1.msra.mxu0 0.0
  %2544 = vmatprep.subr.mxu0 0.0
  %2545 = vmatpush1.msra.mxu0 0.0
  %2546 = vmatprep.subr.mxu0 0.0
  %2547 = vmatpush1.msra.mxu0 0.0
  %2548 = vmatprep.subr.mxu0 0.0
  %2549 = vmatpush1.msra.mxu0 0.0
  %2550 = vmatprep.subr.mxu0 0.0
  %2551 = vmatpush1.msra.mxu0 0.0
  %2552 = vmatprep.subr.mxu0 0.0
  %2553 = vmatpush1.msra.mxu0 0.0
  %2554 = vmatprep.subr.mxu0 0.0
  %2555 = vmatpush1.msra.mxu0 0.0
  %2556 = vmatprep.subr.mxu0 0.0
  %2557 = vmatpush1.msra.mxu0 0.0
  %2558 = vmatprep.subr.mxu0 0.0
  %2559 = vmatpush1.msra.mxu0 0.0
  %2560 = vmatprep.subr.mxu0 0.0
  %2561 = vmatpush1.msra.mxu0 0.0
  %2562 = vmatprep.subr.mxu0 0.0
  %2563 = vmatpush1.msra.mxu0 0.0
  %2564 = vmatprep.subr.mxu0 0.0
  %2565 = vmatpush1.msra.mxu0 0.0
  %2566 = vmatprep.subr.mxu0 0.0
  %2567 = vmatpush1.msra.mxu0 0.0
  %2568 = vmatprep.subr.mxu0 0.0
  %2569 = vmatpush1.msra.mxu0 0.0
  %2570 = vmatprep.subr.mxu0 0.0
  %2571 = vmatpush1.msra.mxu0 %v2463
  %2572 = vmatprep.subr.mxu0 0.0
  %2573 = vmatpush1.msra.mxu0 %v2462
  %2574 = vmatprep.subr.mxu0 0.0
  %2575 = vmatpush2.msra.mxu0 0.0
  %2576 = vmatprep.subr.mxu0 0.0
  %2577 = vmatpush2.msra.mxu0 0.0
  %2578 = vmatprep.subr.mxu0 0.0
  %2579 = vmatpush2.msra.mxu0 0.0
  %2580 = vmatprep.subr.mxu0 0.0
  %2581 = vmatpush2.msra.mxu0 0.0
  %2582 = vmatprep.subr.mxu0 0.0
  %2583 = vmatpush2.msra.mxu0 0.0
  %2584 = vmatprep.subr.mxu0 0.0
  %2585 = vmatpush2.msra.mxu0 0.0
  %2586 = vmatprep.subr.mxu0 0.0
  %2587 = vmatpush2.msra.mxu0 0.0
  %2588 = vmatprep.subr.mxu0 0.0
  %2589 = vmatpush2.msra.mxu0 0.0
  %2590 = vmatprep.subr.mxu0 0.0
  %2591 = vmatpush2.msra.mxu0 0.0
  %2592 = vmatprep.subr.mxu0 0.0
  %2593 = vmatpush2.msra.mxu0 0.0
  %2594 = vmatprep.subr.mxu0 0.0
  %2595 = vmatpush2.msra.mxu0 0.0
  %2596 = vmatprep.subr.mxu0 0.0
  %2597 = vmatpush2.msra.mxu0 0.0
  %2598 = vmatprep.subr.mxu0 0.0
  %2599 = vmatpush2.msra.mxu0 0.0
  %2600 = vmatprep.subr.mxu0 0.0
  %2601 = vmatpush2.msra.mxu0 0.0
  %2602 = vmatprep.subr.mxu0 0.0
  %2603 = vmatpush2.msra.mxu0 0.0
  %2604 = vmatprep.subr.mxu0 0.0
  %2605 = vmatpush2.msra.mxu0 0.0
  %2606 = vmatprep.mubr.f32.mxu0 0.0
  %2607 = vmatmul.mubr.f32.gmra.mxu0 %v2470
  %v2608 = vpop.f32.mrf.mxu0
  %v2609 = vadd.f32 %v2539, %v2608
  %v2610 = vpop.f32.mrf.mxu0
  %2611 = vdwg.mxu0
  %v2612 = vmax.f32 %v2609, 0.0
  %v2613 = vld [vmem:[%s4] sm:$0xff]
  %v2614 = vmul.f32 %v2613, %v2613
  %2616 = vrot.lane.b32.xlu0 %v2612, 4
  %v2617 = vpop.permute.xlu0 %2616
  %2620 = vrot.lane.b32.xlu0 %v2614, 71
  %v2621 = vpop.permute.xlu0 %2620
  %2624 = vrot.lane.b32.xlu0 %v2613, 71
  %v2625 = vpop.permute.xlu0 %2624
  %vm2627 = vcmask 31744
  %v2628 = vsel %vm2627, %v2613, %v2617
  %vm2629 = vcmask 556032
  %v2630 = vsel %vm2629, %v2628, %v2382
  %vm2631 = vcmask 564224
  %v2632 = vsel %vm2631, %v2630, %v2386
  %vm2633 = vcmask 572416
  %v2634 = vsel %vm2633, %v2632, %v2388
  %vm2635 = vcmask 580608
  %v2636 = vsel %vm2635, %v2634, %v2621
  %vm2637 = vcmask 613376
  %v2638 = vsel %vm2637, %v2636, %v2625
  %v2639 = vld [vmem:[%s6 + $0x118] sm:$0xff]
  %v2640 = vld [vmem:[%s6 + $0x120] sm:$0xff]
  %v2641 = vld [vmem:[%s6 + $0x128] sm:$0xff]
  %v2642 = vld [vmem:[%s6 + $0x130] sm:$0xff]
  %v2643 = vld [vmem:[%s6 + $0x138] sm:$0xff]
  %v2644 = vld [vmem:[%s6 + $0x140] sm:$0xff]
  %v2645 = vld [vmem:[%s6 + $0x148] sm:$0xff]
  %v2646 = vld [vmem:[%s6 + $0x150] sm:$0xff]
  %v2647 = vld [vmem:[%s6 + $0x158] sm:$0xff]
  %v2648 = vld [vmem:[%s6 + $0x160] sm:$0xff]
  %v2649 = vld [vmem:[%s6 + $0x168] sm:$0x1]
  %v2650 = vlaneseq
  %v2651 = vshrl.u32 %v2650, 7
  %v2652 = vsub.s32 0, %v2651
  %v2653 = vrot.slane %v2649, %v2652
  %v2655 = vsel %vm2374, %v2638, 0
  %2657 = vmatprep.subr.mxu0 0.0
  %2658 = vmatpush1.msra.mxu0 0.0
  %2659 = vmatprep.subr.mxu0 0.0
  %2660 = vmatpush1.msra.mxu0 0.0
  %2661 = vmatprep.subr.mxu0 0.0
  %2662 = vmatpush1.msra.mxu0 0.0
  %2663 = vmatprep.subr.mxu0 0.0
  %2664 = vmatpush1.msra.mxu0 0.0
  %2665 = vmatprep.subr.mxu0 0.0
  %2666 = vmatpush1.msra.mxu0 0.0
  %2667 = vmatprep.subr.mxu0 0.0
  %2668 = vmatpush1.msra.mxu0 0.0
  %2669 = vmatprep.subr.mxu0 0.0
  %2670 = vmatpush1.msra.mxu0 %v2648
  %2671 = vmatprep.subr.mxu0 0.0
  %2672 = vmatpush1.msra.mxu0 %v2647
  %2673 = vmatprep.subr.mxu0 0.0
  %2674 = vmatpush1.msra.mxu0 %v2646
  %2675 = vmatprep.subr.mxu0 0.0
  %2676 = vmatpush1.msra.mxu0 %v2645
  %2677 = vmatprep.subr.mxu0 0.0
  %2678 = vmatpush1.msra.mxu0 %v2644
  %2679 = vmatprep.subr.mxu0 0.0
  %2680 = vmatpush1.msra.mxu0 %v2643
  %2681 = vmatprep.subr.mxu0 0.0
  %2682 = vmatpush1.msra.mxu0 %v2642
  %2683 = vmatprep.subr.mxu0 0.0
  %2684 = vmatpush1.msra.mxu0 %v2641
  %2685 = vmatprep.subr.mxu0 0.0
  %2686 = vmatpush1.msra.mxu0 %v2640
  %2687 = vmatprep.subr.mxu0 0.0
  %2688 = vmatpush1.msra.mxu0 %v2639
  %2689 = vmatprep.subr.mxu0 0.0
  %2690 = vmatpush2.msra.mxu0 0.0
  %2691 = vmatprep.subr.mxu0 0.0
  %2692 = vmatpush2.msra.mxu0 0.0
  %2693 = vmatprep.subr.mxu0 0.0
  %2694 = vmatpush2.msra.mxu0 0.0
  %2695 = vmatprep.subr.mxu0 0.0
  %2696 = vmatpush2.msra.mxu0 0.0
  %2697 = vmatprep.subr.mxu0 0.0
  %2698 = vmatpush2.msra.mxu0 0.0
  %2699 = vmatprep.subr.mxu0 0.0
  %2700 = vmatpush2.msra.mxu0 0.0
  %2701 = vmatprep.subr.mxu0 0.0
  %2702 = vmatpush2.msra.mxu0 0.0
  %2703 = vmatprep.subr.mxu0 0.0
  %2704 = vmatpush2.msra.mxu0 0.0
  %2705 = vmatprep.subr.mxu0 0.0
  %2706 = vmatpush2.msra.mxu0 0.0
  %2707 = vmatprep.subr.mxu0 0.0
  %2708 = vmatpush2.msra.mxu0 0.0
  %2709 = vmatprep.subr.mxu0 0.0
  %2710 = vmatpush2.msra.mxu0 0.0
  %2711 = vmatprep.subr.mxu0 0.0
  %2712 = vmatpush2.msra.mxu0 0.0
  %2713 = vmatprep.subr.mxu0 0.0
  %2714 = vmatpush2.msra.mxu0 0.0
  %2715 = vmatprep.subr.mxu0 0.0
  %2716 = vmatpush2.msra.mxu0 0.0
  %2717 = vmatprep.subr.mxu0 0.0
  %2718 = vmatpush2.msra.mxu0 0.0
  %2719 = vmatprep.subr.mxu0 0.0
  %2720 = vmatpush2.msra.mxu0 0.0
  %2721 = vmatprep.mubr.f32.mxu0 0.0
  %2722 = vmatmul.mubr.f32.gmra.mxu0 %v2655
  %v2723 = vpop.f32.mrf.mxu0
  %v2724 = vadd.f32 %v2653, %v2723
  %v2725 = vpop.f32.mrf.mxu0
  %2726 = vdwg.mxu0
  %v2727 = vmax.f32 %v2724, 0.0
  %v2728 = vld [vmem:[%s6 + $0x170] sm:$0xff]
  %v2729 = vld [vmem:[%s6 + $0x178] sm:$0xff]
  %v2730 = vld [vmem:[%s6 + $0x180] sm:$0xff]
  %v2731 = vld [vmem:[%s6 + $0x188] sm:$0xff]
  %v2732 = vld [vmem:[%s6 + $0x190] sm:$0x1]
  %v2733 = vlaneseq
  %v2734 = vshrl.u32 %v2733, 7
  %v2735 = vsub.s32 0, %v2734
  %v2736 = vrot.slane %v2732, %v2735
  %v2738 = vsel %vm168, %v2727, 0
  %2740 = vmatprep.subr.mxu0 0.0
  %2741 = vmatpush1.msra.mxu0 0.0
  %2742 = vmatprep.subr.mxu0 0.0
  %2743 = vmatpush1.msra.mxu0 0.0
  %2744 = vmatprep.subr.mxu0 0.0
  %2745 = vmatpush1.msra.mxu0 0.0
  %2746 = vmatprep.subr.mxu0 0.0
  %2747 = vmatpush1.msra.mxu0 0.0
  %2748 = vmatprep.subr.mxu0 0.0
  %2749 = vmatpush1.msra.mxu0 0.0
  %2750 = vmatprep.subr.mxu0 0.0
  %2751 = vmatpush1.msra.mxu0 0.0
  %2752 = vmatprep.subr.mxu0 0.0
  %2753 = vmatpush1.msra.mxu0 0.0
  %2754 = vmatprep.subr.mxu0 0.0
  %2755 = vmatpush1.msra.mxu0 0.0
  %2756 = vmatprep.subr.mxu0 0.0
  %2757 = vmatpush1.msra.mxu0 0.0
  %2758 = vmatprep.subr.mxu0 0.0
  %2759 = vmatpush1.msra.mxu0 0.0
  %2760 = vmatprep.subr.mxu0 0.0
  %2761 = vmatpush1.msra.mxu0 0.0
  %2762 = vmatprep.subr.mxu0 0.0
  %2763 = vmatpush1.msra.mxu0 0.0
  %2764 = vmatprep.subr.mxu0 0.0
  %2765 = vmatpush1.msra.mxu0 %v2731
  %2766 = vmatprep.subr.mxu0 0.0
  %2767 = vmatpush1.msra.mxu0 %v2730
  %2768 = vmatprep.subr.mxu0 0.0
  %2769 = vmatpush1.msra.mxu0 %v2729
  %2770 = vmatprep.subr.mxu0 0.0
  %2771 = vmatpush1.msra.mxu0 %v2728
  %2772 = vmatprep.subr.mxu0 0.0
  %2773 = vmatpush2.msra.mxu0 0.0
  %2774 = vmatprep.subr.mxu0 0.0
  %2775 = vmatpush2.msra.mxu0 0.0
  %2776 = vmatprep.subr.mxu0 0.0
  %2777 = vmatpush2.msra.mxu0 0.0
  %2778 = vmatprep.subr.mxu0 0.0
  %2779 = vmatpush2.msra.mxu0 0.0
  %2780 = vmatprep.subr.mxu0 0.0
  %2781 = vmatpush2.msra.mxu0 0.0
  %2782 = vmatprep.subr.mxu0 0.0
  %2783 = vmatpush2.msra.mxu0 0.0
  %2784 = vmatprep.subr.mxu0 0.0
  %2785 = vmatpush2.msra.mxu0 0.0
  %2786 = vmatprep.subr.mxu0 0.0
  %2787 = vmatpush2.msra.mxu0 0.0
  %2788 = vmatprep.subr.mxu0 0.0
  %2789 = vmatpush2.msra.mxu0 0.0
  %2790 = vmatprep.subr.mxu0 0.0
  %2791 = vmatpush2.msra.mxu0 0.0
  %2792 = vmatprep.subr.mxu0 0.0
  %2793 = vmatpush2.msra.mxu0 0.0
  %2794 = vmatprep.subr.mxu0 0.0
  %2795 = vmatpush2.msra.mxu0 0.0
  %2796 = vmatprep.subr.mxu0 0.0
  %2797 = vmatpush2.msra.mxu0 0.0
  %2798 = vmatprep.subr.mxu0 0.0
  %2799 = vmatpush2.msra.mxu0 0.0
  %2800 = vmatprep.subr.mxu0 0.0
  %2801 = vmatpush2.msra.mxu0 0.0
  %2802 = vmatprep.subr.mxu0 0.0
  %2803 = vmatpush2.msra.mxu0 0.0
  %2804 = vmatprep.mubr.f32.mxu0 0.0
  %2805 = vmatmul.mubr.f32.gmra.mxu0 %v2738
  %v2806 = vpop.f32.mrf.mxu0
  %v2807 = vadd.f32 %v2736, %v2806
  %v2808 = vpop.f32.mrf.mxu0
  %2809 = vdwg.mxu0
  %v2810 = vxor.u32 %v2807, 2147483648
  %v2811 = vmul.f32 %v2810, 1.442695
  %v2812 = vpow.pop %v2811
  %v2813 = vadd.f32 %v2812, 1.0
  %v2814 = vrcp.pop %v2813
  %v2815 = vmul.f32 1.0, %v2814
  %vm2816 = vcmask 7168
  %2817 = vst.msk [vmem:[%s7] sm:$0xff] %vm2816, %v2815
  // Predicated region
  $region30: #{net_forward.1} parent=0 // pred_check
    _
  $region31: #{net_forward.1} parent=0 // pred_check_branch
    %2819 = sbr.rel (0) target = $region33
  $region32: #{net_forward.1} parent=0 // pred_region
    _
  $region33: #{net_forward.1} parent=0 // pred_fallthru
    _
  // Predicated region
  $region34: #{net_forward.1} parent=0 // pred_check
    _
  $region35: #{net_forward.1} parent=0 // pred_check_branch
    %2821 = sbr.rel (0) target = $region37
  $region36: #{net_forward.1} parent=0 // pred_region
    _
  $region37: #{net_forward.1} parent=0 // pred_fallthru
    _

</llo_original>
